<compile_context>
chip_gen: v7x
topology: tpu7x:2x2x1
jax: 0.10.0
libtpu: 0.0.40
codegen_flags: <defaults>
</compile_context>

<pallas_src>
import functools

import jax
import jax.numpy as jnp
from jax.experimental import pallas as pl
from jax.experimental.pallas import tpu as pltpu

KW = (4, 4)           # kernel size of every conv in the module
PAD = (1, 2, 1, 2)    # (w_left, w_right, h_top, h_bottom), F.pad convention
LRELU_SLOPE = 0.2
BN_EPS = 1e-5         # nn.BatchNorm2d default
LANE = 128


def _round_up(x, m):
    return (x + m - 1) // m * m


def _k_tiling(k):
    """Pad K (=kh*kw*Cin) to a lane-friendly size and pick the K tile size."""
    kp = _round_up(k, LANE)
    if kp <= 512:
        return kp, kp              # single K step
    return _round_up(k, 512), 512  # K-tiled reduction with f32 accumulator


@functools.lru_cache(maxsize=1)
def _vmem_limit_bytes():
    cap = 64 * 1024 * 1024                      # conservative fallback (v7x physical)
    try:
        cap = int(getattr(pltpu.get_tpu_info(), "vmem_capacity_bytes", cap))
    except Exception:
        pass
    return int(min((3 * cap) // 4, 96 * 1024 * 1024))


# ---------------------------------------------------------------------------
# Kernel A: tiled bf16 matmul (conv-as-matmul) + optional bias/LeakyReLU epilogue
#           + optional per-M-tile BatchNorm sum / sumsq partials.
# ---------------------------------------------------------------------------
def _make_matmul_kernel(n_k_steps, use_bias, use_act, emit_stats):
    def kernel(*refs):
        if use_bias:
            p_ref, w_ref, b_ref = refs[:3]
            rest = refs[3:]
        else:
            p_ref, w_ref = refs[:2]
            b_ref = None
            rest = refs[2:]
        if emit_stats:
            y_ref, s_ref, acc_ref = rest
        else:
            y_ref, acc_ref = rest
            s_ref = None

        k = pl.program_id(1)

        @pl.when(k == 0)
        def _init():
            acc_ref[...] = jnp.zeros_like(acc_ref)

        acc_ref[...] += jnp.dot(p_ref[...], w_ref[...],
                                preferred_element_type=jnp.float32)

        @pl.when(k == n_k_steps - 1)
        def _finalize():
            y = acc_ref[...]
            if use_bias:
                y = y + b_ref[...]
            if use_act:
                y = jnp.where(y >= 0.0, y, LRELU_SLOPE * y)   # LeakyReLU(0.2)
            y_ref[...] = y
            if emit_stats:
                s_sum = jnp.sum(y, axis=0, keepdims=True)       # (1, Cn)
                s_sq = jnp.sum(y * y, axis=0, keepdims=True)    # (1, Cn)
                row = jax.lax.broadcasted_iota(jnp.int32, s_ref.shape, 0)
                s_ref[...] = jnp.where(row == 0, s_sum,
                                       jnp.where(row == 1, s_sq, 0.0))

    return kernel


def _conv_matmul_pallas(patches, w, b, *, tm, tk, use_bias, use_act, emit_stats):
    m_pad, k_pad = patches.shape
    cn = w.shape[1]
    nm, nk = m_pad // tm, k_pad // tk

    p_spec = pl.BlockSpec((tm, tk), lambda m, k: (m, k))
    w_spec = pl.BlockSpec((tk, cn), lambda m, k: (k, 0))
    b_spec = pl.BlockSpec((1, cn), lambda m, k: (0, 0))
    y_spec = pl.BlockSpec((tm, cn), lambda m, k: (m, 0))
    s_spec = pl.BlockSpec((8, cn), lambda m, k: (m, 0))

    in_specs = [p_spec, w_spec] + ([b_spec] if use_bias else [])
    args = (patches, w) + ((b,) if use_bias else ())

    if emit_stats:
        out_shape = (jax.ShapeDtypeStruct((m_pad, cn), jnp.float32),
                     jax.ShapeDtypeStruct((nm * 8, cn), jnp.float32))
        out_specs = [y_spec, s_spec]
    else:
        out_shape = jax.ShapeDtypeStruct((m_pad, cn), jnp.float32)
        out_specs = y_spec

    return pl.pallas_call(
        _make_matmul_kernel(nk, use_bias, use_act, emit_stats),
        out_shape=out_shape,
        grid_spec=pltpu.PrefetchScalarGridSpec(
            num_scalar_prefetch=0,
            grid=(nm, nk),
            in_specs=in_specs,
            out_specs=out_specs,
            scratch_shapes=[pltpu.VMEM((tm, cn), jnp.float32)]),
        compiler_params=pltpu.CompilerParams(
            dimension_semantics=("parallel", "arbitrary"),
            vmem_limit_bytes=_vmem_limit_bytes()),
    )(*args)


# ---------------------------------------------------------------------------
# Kernel B: folded BatchNorm scale/shift + LeakyReLU (one lane-dense FMA pass)
# ---------------------------------------------------------------------------
def _scale_shift_act_kernel(y_ref, sc_ref, sh_ref, o_ref):
    y = y_ref[...] * sc_ref[...] + sh_ref[...]
    o_ref[...] = jnp.where(y >= 0.0, y, LRELU_SLOPE * y)


def _bn_act_pallas(y, scale, shift, *, tm):
    m_pad, cn = y.shape
    nm = m_pad // tm
    return pl.pallas_call(
        _scale_shift_act_kernel,
        out_shape=jax.ShapeDtypeStruct((m_pad, cn), jnp.float32),
        grid_spec=pltpu.PrefetchScalarGridSpec(
            num_scalar_prefetch=0,
            grid=(nm,),
            in_specs=[pl.BlockSpec((tm, cn), lambda m: (m, 0)),
                      pl.BlockSpec((1, cn), lambda m: (0, 0)),
                      pl.BlockSpec((1, cn), lambda m: (0, 0))],
            out_specs=pl.BlockSpec((tm, cn), lambda m: (m, 0))),
        compiler_params=pltpu.CompilerParams(
            dimension_semantics=("parallel",),
            vmem_limit_bytes=_vmem_limit_bytes()),
    )(y, scale.reshape(1, cn), shift.reshape(1, cn))


# ---------------------------------------------------------------------------
# JAX glue: circular padding + im2col (static strided slices, no gather)
# ---------------------------------------------------------------------------
def circular_pad_nhwc(x, pad):
    # matches F.pad(x_nchw, (wl, wr, ht, hb), mode='circular') in NHWC layout.
    wl, wr, ht, hb = pad
    x = jnp.concatenate([x[:, -ht:, :, :], x, x[:, :hb, :, :]], axis=1)
    x = jnp.concatenate([x[:, :, -wl:, :], x, x[:, :, :wr, :]], axis=2)
    return x


def im2col_nhwc(x, kh, kw, sh, sw):
    """Patch extraction with static strided slices; feature order is (dy, dx, cin)
    to match the (kh*kw*Cin, Cout) weight layout used here."""
    n, h, w, c = x.shape
    ho = (h - kh) // sh + 1
    wo = (w - kw) // sw + 1
    cols = []
    for dy in range(kh):
        for dx in range(kw):
            cols.append(x[:, dy:dy + (ho - 1) * sh + 1:sh,
                          dx:dx + (wo - 1) * sw + 1:sw, :])
    p = jnp.concatenate(cols, axis=-1)                 # (N, Ho, Wo, kh*kw*C)
    return p.reshape(n * ho * wo, kh * kw * c), ho, wo
    # TODO(synk): fully in-kernel patch extraction (tap-accumulation over a padded
    # row band) would remove the kh*kw x data duplication; left to XLA glue here.


# ---------------------------------------------------------------------------
# Parameters mirroring LiDARNLayerDiscriminatorV2.__init__
# (use_actnorm=False -> norm_layer = BatchNorm2d -> use_bias=False for BN convs)
# ---------------------------------------------------------------------------
def build_discriminator_params(key, input_nc=1, output_nc=1, ndf=64, n_layers=3):
    kh, kw = KW
    cfgs = [
        dict(cin=input_nc, cout=ndf, stride=(1, 2), bias=True, bn=False, act=True),
        dict(cin=ndf, cout=ndf, stride=(1, 2), bias=True, bn=False, act=True),
    ]
    nf_mult = 1
    for n in range(1, n_layers):
        nf_mult_prev = nf_mult
        nf_mult = min(2 ** n, 8)
        cfgs.append(dict(cin=ndf * nf_mult_prev, cout=ndf * nf_mult, stride=(2, 2),
                         bias=False, bn=True, act=True))
    nf_mult_prev = nf_mult
    nf_mult = min(2 ** n_layers, 8)
    cfgs.append(dict(cin=ndf * nf_mult_prev, cout=ndf * nf_mult, stride=(1, 1),
                     bias=False, bn=True, act=True))
    cfgs.append(dict(cin=ndf * nf_mult, cout=output_nc, stride=(1, 1),
                     bias=True, bn=False, act=False))

    params = []
    for cfg in cfgs:
        key, wk, bk = jax.random.split(key, 3)
        cin, cout = cfg["cin"], cfg["cout"]
        k = kh * kw * cin
        k_pad, _ = _k_tiling(k)
        cn = _round_up(cout, LANE)            # lane-dense padded Cout
        # synthetic kaiming-normal-style weights, (kh,kw,Cin,Cout) flattened to (K,Cout),
        # zero-padded to (K_pad, Cn) and stored bf16 (MXU operand dtype).
        w = jax.random.normal(wk, (k, cout), jnp.float32) * jnp.sqrt(2.0 / k)
        w = jnp.pad(w, ((0, k_pad - k), (0, cn - cout))).astype(jnp.bfloat16)
        b = jnp.zeros((1, cn), jnp.float32)
        if cfg["bias"]:
            b = b.at[0, :cout].set(jax.random.normal(bk, (cout,), jnp.float32) * 0.01)
        gamma = jnp.zeros((1, cn), jnp.float32).at[0, :cout].set(1.0)  # BN weight = 1
        beta = jnp.zeros((1, cn), jnp.float32)                          # BN bias = 0
        params.append(dict(cfg=cfg, w=w, b=b, gamma=gamma, beta=beta))
    return params


# ---------------------------------------------------------------------------
# Forward pass
# ---------------------------------------------------------------------------
def lidar_nlayer_discriminator_v2(x_nchw, params):
    x = jnp.transpose(x_nchw, (0, 2, 3, 1)).astype(jnp.float32)   # NCHW -> NHWC
    kh, kw = KW
    n = x.shape[0]
    for p in params:
        cfg = p["cfg"]
        sh, sw = cfg["stride"]
        cout = cfg["cout"]
        xp = circular_pad_nhwc(x, PAD)
        patches, ho, wo = im2col_nhwc(xp, kh, kw, sh, sw)
        m, k = patches.shape
        k_pad, tk = _k_tiling(k)
        tm = min(512, _round_up(m, 8))
        m_pad = _round_up(m, tm)
        patches = jnp.pad(patches, ((0, m_pad - m), (0, k_pad - k)))
        patches = patches.astype(jnp.bfloat16)        # bf16 MXU operands, f32 accum

        if cfg["bn"]:
            # conv matmul + per-M-tile channel sum / sumsq partials (bias skipped)
            y_pad, stats = _conv_matmul_pallas(
                patches, p["w"], None, tm=tm, tk=tk,
                use_bias=False, use_act=False, emit_stats=True)
            st = stats.reshape(m_pad // tm, 8, -1)
            s1 = jnp.sum(st[:, 0, :], axis=0)
            s2 = jnp.sum(st[:, 1, :], axis=0)
            mean = s1 / m                                     # biased batch stats
            var = jnp.maximum(s2 / m - mean * mean, 0.0)
            inv = jax.lax.rsqrt(var + BN_EPS)
            scale = p["gamma"][0] * inv                       # folded BN scale
            shift = p["beta"][0] - mean * scale               # folded BN shift
            y_pad = _bn_act_pallas(y_pad, scale, shift, tm=tm)
        else:
            y_pad = _conv_matmul_pallas(
                patches, p["w"], p["b"], tm=tm, tk=tk,
                use_bias=True, use_act=cfg["act"], emit_stats=False)

        x = y_pad[:m, :cout].reshape(n, ho, wo, cout)

    # TODO(synk): BatchNorm2d running_mean/running_var updates (training buffers)
    # are not modeled; only the batch-stat forward math is reproduced.
    return jnp.transpose(x, (0, 3, 1, 2))                      # back to NCHW


# ---------------------------------------------------------------------------
# Pure-JAX reference (same bf16 matmul operands, no Pallas) for verification
# ---------------------------------------------------------------------------
def _reference_forward(x_nchw, params):
    x = jnp.transpose(x_nchw, (0, 2, 3, 1)).astype(jnp.float32)
    kh, kw = KW
    n = x.shape[0]
    for p in params:
        cfg = p["cfg"]
        sh, sw = cfg["stride"]
        cout = cfg["cout"]
        xp = circular_pad_nhwc(x, PAD)
        patches, ho, wo = im2col_nhwc(xp, kh, kw, sh, sw)
        m, k = patches.shape
        k_pad = p["w"].shape[0]
        a = jnp.pad(patches, ((0, 0), (0, k_pad - k))).astype(jnp.bfloat16)
        y = jnp.dot(a.astype(jnp.float32), p["w"].astype(jnp.float32),
                    preferred_element_type=jnp.float32)[:, :cout]
        if cfg["bias"]:
            y = y + p["b"][0, :cout]
        if cfg["bn"]:
            mean = jnp.mean(y, axis=0, keepdims=True)
            var = jnp.mean(jnp.square(y - mean), axis=0, keepdims=True)
            y = (y - mean) * jax.lax.rsqrt(var + BN_EPS)
            y = y * p["gamma"][0, :cout] + p["beta"][0, :cout]
        if cfg["act"]:
            y = jnp.where(y >= 0.0, y, LRELU_SLOPE * y)
        x = y.reshape(n, ho, wo, cout)
    return jnp.transpose(x, (0, 3, 1, 2))


if __name__ == "__main__":
    key = jax.random.PRNGKey(0)
    key, xk = jax.random.split(key)

    # small config: input_nc=1, output_nc=1, ndf=16, n_layers=3
    params = build_discriminator_params(key, input_nc=1, output_nc=1, ndf=16, n_layers=3)

    # LiDAR range image, NCHW (batch=2, C=1, H=16 beams, W=32 azimuth)
    x = jax.random.normal(xk, (2, 1, 16, 32), jnp.float32)

    fwd = jax.jit(lambda inp: lidar_nlayer_discriminator_v2(inp, params))
    out = fwd(x)
    jax.block_until_ready(out)

    # L0,L1: W halved each ; L2,L3: H and W halved each ; L4,L5: stride 1
    expected = (2, 1, 4, 2)
    assert out.shape == expected, (out.shape, expected)
    assert out.dtype == jnp.float32
    assert bool(jnp.all(jnp.isfinite(out)))

    ref = jax.jit(lambda inp: _reference_forward(inp, params))(x)
    jax.block_until_ready(ref)
    assert bool(jnp.allclose(out, ref, rtol=1e-2, atol=1e-2)), \
        float(jnp.max(jnp.abs(out - ref)))

    print("KERNEL_OK")
</pallas_src>

<mosaic_0001>
module attributes {stable_mosaic.version = 11 : i64} {
  func.func @kernel(%arg0: i32, %arg1: i32, %arg2: memref<512x128xbf16, #tpu.memory_space<vmem>>, %arg3: memref<128x128xbf16, #tpu.memory_space<vmem>>, %arg4: memref<1x128xf32, #tpu.memory_space<vmem>>, %arg5: memref<512x128xf32, #tpu.memory_space<vmem>>, %arg6: memref<512x128xf32, #tpu.memory_space<vmem>>) attributes {dimension_semantics = [#tpu.dimension_semantics<parallel>, #tpu.dimension_semantics<arbitrary>], iteration_bounds = array<i64: 1, 1>, scalar_prefetch = 0 : i64, scratch_operands = 1 : i64, tpu.core_type = #tpu.core_type<tc>, window_params = [{transform_indices = @transform_0, window_bounds = array<i64: 512, 128>}, {transform_indices = @transform_1, window_bounds = array<i64: 128, 128>}, {pipeline_mode = #tpu.pipeline_mode<synchronous>, transform_indices = @transform_2, window_bounds = array<i64: 1, 128>}, {transform_indices = @transform_3, window_bounds = array<i64: 512, 128>}]} {
    %c0_i32 = arith.constant 0 : i32
    %0 = arith.cmpi eq, %arg1, %c0_i32 : i32
    %1 = arith.extui %0 : i1 to i32
    %c0_i32_0 = arith.constant 0 : i32
    %2 = arith.cmpi ne, %1, %c0_i32_0 : i32
    scf.if %2 {
      %cst_10 = arith.constant 0.000000e+00 : f32
      %12 = vector.broadcast %cst_10 : f32 to vector<512x128xf32>
      %c0_11 = arith.constant 0 : index
      %c0_12 = arith.constant 0 : index
      %13 = vector.load %arg6[%c0_11, %c0_12] : memref<512x128xf32, #tpu.memory_space<vmem>>, vector<512x128xf32>
      tpu.vector_store %arg6[%c0_11, %c0_12], %12 {strides = array<i32>} : memref<512x128xf32, #tpu.memory_space<vmem>>, vector<512x128xf32>,
    } else {
    }
    %c0 = arith.constant 0 : index
    %c0_1 = arith.constant 0 : index
    %3 = vector.load %arg6[%c0, %c0_1] : memref<512x128xf32, #tpu.memory_space<vmem>>, vector<512x128xf32>
    %c0_2 = arith.constant 0 : index
    %c0_3 = arith.constant 0 : index
    %4 = vector.load %arg2[%c0_2, %c0_3] : memref<512x128xbf16, #tpu.memory_space<vmem>>, vector<512x128xbf16>
    %c0_4 = arith.constant 0 : index
    %c0_5 = arith.constant 0 : index
    %5 = vector.load %arg3[%c0_4, %c0_5] : memref<128x128xbf16, #tpu.memory_space<vmem>>, vector<128x128xbf16>
    %cst = arith.constant dense<0.000000e+00> : vector<512x128xf32>
    %6 = tpu.matmul %4, %5, %cst {dimension_numbers = #tpu.dot_dimension_numbers<[1], [0], [0], [1], [0, 0, 1, 1], [], []>} : vector<512x128xbf16>, vector<128x128xbf16>, vector<512x128xf32> -> vector<512x128xf32>
    %7 = arith.addf %3, %6 : vector<512x128xf32>
    %c0_6 = arith.constant 0 : index
    %c0_7 = arith.constant 0 : index
    %8 = vector.load %arg6[%c0_6, %c0_7] : memref<512x128xf32, #tpu.memory_space<vmem>>, vector<512x128xf32>
    tpu.vector_store %arg6[%c0_6, %c0_7], %7 {strides = array<i32>} : memref<512x128xf32, #tpu.memory_space<vmem>>, vector<512x128xf32>,
    %c0_i32_8 = arith.constant 0 : i32
    %9 = arith.cmpi eq, %arg1, %c0_i32_8 : i32
    %10 = arith.extui %9 : i1 to i32
    %c0_i32_9 = arith.constant 0 : i32
    %11 = arith.cmpi ne, %10, %c0_i32_9 : i32
    scf.if %11 {
      %c0_10 = arith.constant 0 : index
      %c0_11 = arith.constant 0 : index
      %12 = vector.load %arg6[%c0_10, %c0_11] : memref<512x128xf32, #tpu.memory_space<vmem>>, vector<512x128xf32>
      %c0_12 = arith.constant 0 : index
      %c0_13 = arith.constant 0 : index
      %13 = vector.load %arg4[%c0_12, %c0_13] : memref<1x128xf32, #tpu.memory_space<vmem>>, vector<1x128xf32>
      %14 = vector.broadcast %13 : vector<1x128xf32> to vector<512x128xf32>
      %15 = arith.addf %12, %14 : vector<512x128xf32>
      %cst_14 = arith.constant 0.000000e+00 : f32
      %16 = vector.broadcast %cst_14 : f32 to vector<512x128xf32>
      %17 = arith.cmpf oge, %15, %16 : vector<512x128xf32>
      %cst_15 = arith.constant 2.000000e-01 : f32
      %18 = vector.broadcast %cst_15 : f32 to vector<512x128xf32>
      %19 = arith.mulf %18, %15 : vector<512x128xf32>
      %20 = arith.select %17, %15, %19 : vector<512x128xi1>, vector<512x128xf32>
      %c0_16 = arith.constant 0 : index
      %c0_17 = arith.constant 0 : index
      %21 = vector.load %arg5[%c0_16, %c0_17] : memref<512x128xf32, #tpu.memory_space<vmem>>, vector<512x128xf32>
      tpu.vector_store %arg5[%c0_16, %c0_17], %20 {strides = array<i32>} : memref<512x128xf32, #tpu.memory_space<vmem>>, vector<512x128xf32>,
    } else {
    }
    return
  }
  func.func @transform_0(%arg0: i32, %arg1: i32) -> (i32, i32) {
    %c0_i32 = arith.constant 0 : i32
    return %arg0, %arg1 : i32, i32
  }
  func.func @transform_1(%arg0: i32, %arg1: i32) -> (i32, i32) {
    %c0_i32 = arith.constant 0 : i32
    %c0_i32_0 = arith.constant 0 : i32
    return %arg1, %c0_i32 : i32, i32
  }
  func.func @transform_2(%arg0: i32, %arg1: i32) -> (i32, i32) {
    %c0_i32 = arith.constant 0 : i32
    %c0_i32_0 = arith.constant 0 : i32
    %c0_i32_1 = arith.constant 0 : i32
    return %c0_i32, %c0_i32_0 : i32, i32
  }
  func.func @transform_3(%arg0: i32, %arg1: i32) -> (i32, i32) {
    %c0_i32 = arith.constant 0 : i32
    %c0_i32_0 = arith.constant 0 : i32
    return %arg0, %c0_i32 : i32, i32
  }
}

module attributes {stable_mosaic.version = 11 : i64} {
  func.func @kernel(%arg0: i32, %arg1: i32, %arg2: memref<256x256xbf16, #tpu.memory_space<vmem>>, %arg3: memref<256x128xbf16, #tpu.memory_space<vmem>>, %arg4: memref<1x128xf32, #tpu.memory_space<vmem>>, %arg5: memref<256x128xf32, #tpu.memory_space<vmem>>, %arg6: memref<256x128xf32, #tpu.memory_space<vmem>>) attributes {dimension_semantics = [#tpu.dimension_semantics<parallel>, #tpu.dimension_semantics<arbitrary>], iteration_bounds = array<i64: 1, 1>, scalar_prefetch = 0 : i64, scratch_operands = 1 : i64, tpu.core_type = #tpu.core_type<tc>, window_params = [{transform_indices = @transform_0, window_bounds = array<i64: 256, 256>}, {transform_indices = @transform_1, window_bounds = array<i64: 256, 128>}, {pipeline_mode = #tpu.pipeline_mode<synchronous>, transform_indices = @transform_2, window_bounds = array<i64: 1, 128>}, {transform_indices = @transform_3, window_bounds = array<i64: 256, 128>}]} {
    %c0_i32 = arith.constant 0 : i32
    %0 = arith.cmpi eq, %arg1, %c0_i32 : i32
    %1 = arith.extui %0 : i1 to i32
    %c0_i32_0 = arith.constant 0 : i32
    %2 = arith.cmpi ne, %1, %c0_i32_0 : i32
    scf.if %2 {
      %cst_10 = arith.constant 0.000000e+00 : f32
      %12 = vector.broadcast %cst_10 : f32 to vector<256x128xf32>
      %c0_11 = arith.constant 0 : index
      %c0_12 = arith.constant 0 : index
      %13 = vector.load %arg6[%c0_11, %c0_12] : memref<256x128xf32, #tpu.memory_space<vmem>>, vector<256x128xf32>
      tpu.vector_store %arg6[%c0_11, %c0_12], %12 {strides = array<i32>} : memref<256x128xf32, #tpu.memory_space<vmem>>, vector<256x128xf32>,
    } else {
    }
    %c0 = arith.constant 0 : index
    %c0_1 = arith.constant 0 : index
    %3 = vector.load %arg6[%c0, %c0_1] : memref<256x128xf32, #tpu.memory_space<vmem>>, vector<256x128xf32>
    %c0_2 = arith.constant 0 : index
    %c0_3 = arith.constant 0 : index
    %4 = vector.load %arg2[%c0_2, %c0_3] : memref<256x256xbf16, #tpu.memory_space<vmem>>, vector<256x256xbf16>
    %c0_4 = arith.constant 0 : index
    %c0_5 = arith.constant 0 : index
    %5 = vector.load %arg3[%c0_4, %c0_5] : memref<256x128xbf16, #tpu.memory_space<vmem>>, vector<256x128xbf16>
    %cst = arith.constant dense<0.000000e+00> : vector<256x128xf32>
    %6 = tpu.matmul %4, %5, %cst {dimension_numbers = #tpu.dot_dimension_numbers<[1], [0], [0], [1], [0, 0, 1, 1], [], []>} : vector<256x256xbf16>, vector<256x128xbf16>, vector<256x128xf32> -> vector<256x128xf32>
    %7 = arith.addf %3, %6 : vector<256x128xf32>
    %c0_6 = arith.constant 0 : index
    %c0_7 = arith.constant 0 : index
    %8 = vector.load %arg6[%c0_6, %c0_7] : memref<256x128xf32, #tpu.memory_space<vmem>>, vector<256x128xf32>
    tpu.vector_store %arg6[%c0_6, %c0_7], %7 {strides = array<i32>} : memref<256x128xf32, #tpu.memory_space<vmem>>, vector<256x128xf32>,
    %c0_i32_8 = arith.constant 0 : i32
    %9 = arith.cmpi eq, %arg1, %c0_i32_8 : i32
    %10 = arith.extui %9 : i1 to i32
    %c0_i32_9 = arith.constant 0 : i32
    %11 = arith.cmpi ne, %10, %c0_i32_9 : i32
    scf.if %11 {
      %c0_10 = arith.constant 0 : index
      %c0_11 = arith.constant 0 : index
      %12 = vector.load %arg6[%c0_10, %c0_11] : memref<256x128xf32, #tpu.memory_space<vmem>>, vector<256x128xf32>
      %c0_12 = arith.constant 0 : index
      %c0_13 = arith.constant 0 : index
      %13 = vector.load %arg4[%c0_12, %c0_13] : memref<1x128xf32, #tpu.memory_space<vmem>>, vector<1x128xf32>
      %14 = vector.broadcast %13 : vector<1x128xf32> to vector<256x128xf32>
      %15 = arith.addf %12, %14 : vector<256x128xf32>
      %cst_14 = arith.constant 0.000000e+00 : f32
      %16 = vector.broadcast %cst_14 : f32 to vector<256x128xf32>
      %17 = arith.cmpf oge, %15, %16 : vector<256x128xf32>
      %cst_15 = arith.constant 2.000000e-01 : f32
      %18 = vector.broadcast %cst_15 : f32 to vector<256x128xf32>
      %19 = arith.mulf %18, %15 : vector<256x128xf32>
      %20 = arith.select %17, %15, %19 : vector<256x128xi1>, vector<256x128xf32>
      %c0_16 = arith.constant 0 : index
      %c0_17 = arith.constant 0 : index
      %21 = vector.load %arg5[%c0_16, %c0_17] : memref<256x128xf32, #tpu.memory_space<vmem>>, vector<256x128xf32>
      tpu.vector_store %arg5[%c0_16, %c0_17], %20 {strides = array<i32>} : memref<256x128xf32, #tpu.memory_space<vmem>>, vector<256x128xf32>,
    } else {
    }
    return
  }
  func.func @transform_0(%arg0: i32, %arg1: i32) -> (i32, i32) {
    %c0_i32 = arith.constant 0 : i32
    return %arg0, %arg1 : i32, i32
  }
  func.func @transform_1(%arg0: i32, %arg1: i32) -> (i32, i32) {
    %c0_i32 = arith.constant 0 : i32
    %c0_i32_0 = arith.constant 0 : i32
    return %arg1, %c0_i32 : i32, i32
  }
  func.func @transform_2(%arg0: i32, %arg1: i32) -> (i32, i32) {
    %c0_i32 = arith.constant 0 : i32
    %c0_i32_0 = arith.constant 0 : i32
    %c0_i32_1 = arith.constant 0 : i32
    return %c0_i32, %c0_i32_0 : i32, i32
  }
  func.func @transform_3(%arg0: i32, %arg1: i32) -> (i32, i32) {
    %c0_i32 = arith.constant 0 : i32
    %c0_i32_0 = arith.constant 0 : i32
    return %arg0, %c0_i32 : i32, i32
  }
}

module attributes {stable_mosaic.version = 11 : i64} {
  func.func @kernel(%arg0: i32, %arg1: i32, %arg2: memref<64x256xbf16, #tpu.memory_space<vmem>>, %arg3: memref<256x128xbf16, #tpu.memory_space<vmem>>, %arg4: memref<64x128xf32, #tpu.memory_space<vmem>>, %arg5: memref<8x128xf32, #tpu.memory_space<vmem>>, %arg6: memref<64x128xf32, #tpu.memory_space<vmem>>) attributes {dimension_semantics = [#tpu.dimension_semantics<parallel>, #tpu.dimension_semantics<arbitrary>], iteration_bounds = array<i64: 1, 1>, scalar_prefetch = 0 : i64, scratch_operands = 1 : i64, tpu.core_type = #tpu.core_type<tc>, window_params = [{transform_indices = @transform_0, window_bounds = array<i64: 64, 256>}, {transform_indices = @transform_1, window_bounds = array<i64: 256, 128>}, {transform_indices = @transform_2, window_bounds = array<i64: 64, 128>}, {transform_indices = @transform_3, window_bounds = array<i64: 8, 128>}]} {
    %c0_i32 = arith.constant 0 : i32
    %0 = arith.cmpi eq, %arg1, %c0_i32 : i32
    %1 = arith.extui %0 : i1 to i32
    %c0_i32_0 = arith.constant 0 : i32
    %2 = arith.cmpi ne, %1, %c0_i32_0 : i32
    scf.if %2 {
      %cst_10 = arith.constant 0.000000e+00 : f32
      %12 = vector.broadcast %cst_10 : f32 to vector<64x128xf32>
      %c0_11 = arith.constant 0 : index
      %c0_12 = arith.constant 0 : index
      %13 = vector.load %arg6[%c0_11, %c0_12] : memref<64x128xf32, #tpu.memory_space<vmem>>, vector<64x128xf32>
      tpu.vector_store %arg6[%c0_11, %c0_12], %12 {strides = array<i32>} : memref<64x128xf32, #tpu.memory_space<vmem>>, vector<64x128xf32>,
    } else {
    }
    %c0 = arith.constant 0 : index
    %c0_1 = arith.constant 0 : index
    %3 = vector.load %arg6[%c0, %c0_1] : memref<64x128xf32, #tpu.memory_space<vmem>>, vector<64x128xf32>
    %c0_2 = arith.constant 0 : index
    %c0_3 = arith.constant 0 : index
    %4 = vector.load %arg2[%c0_2, %c0_3] : memref<64x256xbf16, #tpu.memory_space<vmem>>, vector<64x256xbf16>
    %c0_4 = arith.constant 0 : index
    %c0_5 = arith.constant 0 : index
    %5 = vector.load %arg3[%c0_4, %c0_5] : memref<256x128xbf16, #tpu.memory_space<vmem>>, vector<256x128xbf16>
    %cst = arith.constant dense<0.000000e+00> : vector<64x128xf32>
    %6 = tpu.matmul %4, %5, %cst {dimension_numbers = #tpu.dot_dimension_numbers<[1], [0], [0], [1], [0, 0, 1, 1], [], []>} : vector<64x256xbf16>, vector<256x128xbf16>, vector<64x128xf32> -> vector<64x128xf32>
    %7 = arith.addf %3, %6 : vector<64x128xf32>
    %c0_6 = arith.constant 0 : index
    %c0_7 = arith.constant 0 : index
    %8 = vector.load %arg6[%c0_6, %c0_7] : memref<64x128xf32, #tpu.memory_space<vmem>>, vector<64x128xf32>
    tpu.vector_store %arg6[%c0_6, %c0_7], %7 {strides = array<i32>} : memref<64x128xf32, #tpu.memory_space<vmem>>, vector<64x128xf32>,
    %c0_i32_8 = arith.constant 0 : i32
    %9 = arith.cmpi eq, %arg1, %c0_i32_8 : i32
    %10 = arith.extui %9 : i1 to i32
    %c0_i32_9 = arith.constant 0 : i32
    %11 = arith.cmpi ne, %10, %c0_i32_9 : i32
    scf.if %11 {
      %c0_10 = arith.constant 0 : index
      %c0_11 = arith.constant 0 : index
      %12 = vector.load %arg6[%c0_10, %c0_11] : memref<64x128xf32, #tpu.memory_space<vmem>>, vector<64x128xf32>
      %c0_12 = arith.constant 0 : index
      %c0_13 = arith.constant 0 : index
      %13 = vector.load %arg4[%c0_12, %c0_13] : memref<64x128xf32, #tpu.memory_space<vmem>>, vector<64x128xf32>
      tpu.vector_store %arg4[%c0_12, %c0_13], %12 {strides = array<i32>} : memref<64x128xf32, #tpu.memory_space<vmem>>, vector<64x128xf32>,
      %cst_14 = arith.constant dense<0.000000e+00> : vector<128xf32>
      %14 = vector.multi_reduction <add>, %12, %cst_14 [0] : vector<64x128xf32> to vector<128xf32>
      %15 = vector.shape_cast %14 : vector<128xf32> to vector<1x128xf32>
      %16 = arith.mulf %12, %12 : vector<64x128xf32>
      %cst_15 = arith.constant dense<0.000000e+00> : vector<128xf32>
      %17 = vector.multi_reduction <add>, %16, %cst_15 [0] : vector<64x128xf32> to vector<128xf32>
      %18 = vector.shape_cast %17 : vector<128xf32> to vector<1x128xf32>
      %19 = tpu.iota {dimensions = array<i32: 0>} : vector<8x128xi32>
      %c0_i32_16 = arith.constant 0 : i32
      %20 = vector.broadcast %c0_i32_16 : i32 to vector<8x128xi32>
      %21 = arith.cmpi eq, %19, %20 : vector<8x128xi32>
      %c1_i32 = arith.constant 1 : i32
      %22 = vector.broadcast %c1_i32 : i32 to vector<8x128xi32>
      %23 = arith.cmpi eq, %19, %22 : vector<8x128xi32>
      %cst_17 = arith.constant 0.000000e+00 : f32
      %24 = vector.shape_cast %18 : vector<1x128xf32> to vector<1x128xf32>
      %25 = vector.broadcast %24 : vector<1x128xf32> to vector<8x128xf32>
      %26 = vector.broadcast %cst_17 : f32 to vector<8x128xf32>
      %27 = arith.select %23, %25, %26 : vector<8x128xi1>, vector<8x128xf32>
      %28 = vector.shape_cast %15 : vector<1x128xf32> to vector<1x128xf32>
      %29 = vector.broadcast %28 : vector<1x128xf32> to vector<8x128xf32>
      %30 = arith.select %21, %29, %27 : vector<8x128xi1>, vector<8x128xf32>
      %c0_18 = arith.constant 0 : index
      %c0_19 = arith.constant 0 : index
      %31 = vector.load %arg5[%c0_18, %c0_19] : memref<8x128xf32, #tpu.memory_space<vmem>>, vector<8x128xf32>
      tpu.vector_store %arg5[%c0_18, %c0_19], %30 {strides = array<i32>} : memref<8x128xf32, #tpu.memory_space<vmem>>, vector<8x128xf32>,
    } else {
    }
    return
  }
  func.func @transform_0(%arg0: i32, %arg1: i32) -> (i32, i32) {
    %c0_i32 = arith.constant 0 : i32
    return %arg0, %arg1 : i32, i32
  }
  func.func @transform_1(%arg0: i32, %arg1: i32) -> (i32, i32) {
    %c0_i32 = arith.constant 0 : i32
    %c0_i32_0 = arith.constant 0 : i32
    return %arg1, %c0_i32 : i32, i32
  }
  func.func @transform_2(%arg0: i32, %arg1: i32) -> (i32, i32) {
    %c0_i32 = arith.constant 0 : i32
    %c0_i32_0 = arith.constant 0 : i32
    return %arg0, %c0_i32 : i32, i32
  }
  func.func @transform_3(%arg0: i32, %arg1: i32) -> (i32, i32) {
    %c0_i32 = arith.constant 0 : i32
    %c0_i32_0 = arith.constant 0 : i32
    return %arg0, %c0_i32 : i32, i32
  }
}

module attributes {stable_mosaic.version = 11 : i64} {
  func.func @_scale_shift_act_kernel(%arg0: i32, %arg1: memref<64x128xf32, #tpu.memory_space<vmem>>, %arg2: memref<1x128xf32, #tpu.memory_space<vmem>>, %arg3: memref<1x128xf32, #tpu.memory_space<vmem>>, %arg4: memref<64x128xf32, #tpu.memory_space<vmem>>) attributes {dimension_semantics = [#tpu.dimension_semantics<parallel>], iteration_bounds = array<i64: 1>, scalar_prefetch = 0 : i64, scratch_operands = 0 : i64, tpu.core_type = #tpu.core_type<tc>, window_params = [{transform_indices = @transform_0, window_bounds = array<i64: 64, 128>}, {pipeline_mode = #tpu.pipeline_mode<synchronous>, transform_indices = @transform_1, window_bounds = array<i64: 1, 128>}, {pipeline_mode = #tpu.pipeline_mode<synchronous>, transform_indices = @transform_2, window_bounds = array<i64: 1, 128>}, {transform_indices = @transform_3, window_bounds = array<i64: 64, 128>}]} {
    %c0 = arith.constant 0 : index
    %c0_0 = arith.constant 0 : index
    %0 = vector.load %arg1[%c0, %c0_0] : memref<64x128xf32, #tpu.memory_space<vmem>>, vector<64x128xf32>
    %c0_1 = arith.constant 0 : index
    %c0_2 = arith.constant 0 : index
    %1 = vector.load %arg2[%c0_1, %c0_2] : memref<1x128xf32, #tpu.memory_space<vmem>>, vector<1x128xf32>
    %2 = vector.broadcast %1 : vector<1x128xf32> to vector<64x128xf32>
    %3 = arith.mulf %0, %2 : vector<64x128xf32>
    %c0_3 = arith.constant 0 : index
    %c0_4 = arith.constant 0 : index
    %4 = vector.load %arg3[%c0_3, %c0_4] : memref<1x128xf32, #tpu.memory_space<vmem>>, vector<1x128xf32>
    %5 = vector.broadcast %4 : vector<1x128xf32> to vector<64x128xf32>
    %6 = arith.addf %3, %5 : vector<64x128xf32>
    %cst = arith.constant 0.000000e+00 : f32
    %7 = vector.broadcast %cst : f32 to vector<64x128xf32>
    %8 = arith.cmpf oge, %6, %7 : vector<64x128xf32>
    %cst_5 = arith.constant 2.000000e-01 : f32
    %9 = vector.broadcast %cst_5 : f32 to vector<64x128xf32>
    %10 = arith.mulf %9, %6 : vector<64x128xf32>
    %11 = arith.select %8, %6, %10 : vector<64x128xi1>, vector<64x128xf32>
    %c0_6 = arith.constant 0 : index
    %c0_7 = arith.constant 0 : index
    %12 = vector.load %arg4[%c0_6, %c0_7] : memref<64x128xf32, #tpu.memory_space<vmem>>, vector<64x128xf32>
    tpu.vector_store %arg4[%c0_6, %c0_7], %11 {strides = array<i32>} : memref<64x128xf32, #tpu.memory_space<vmem>>, vector<64x128xf32>,
    return
  }
  func.func @transform_0(%arg0: i32) -> (i32, i32) {
    %c0_i32 = arith.constant 0 : i32
    %c0_i32_0 = arith.constant 0 : i32
    return %arg0, %c0_i32 : i32, i32
  }
  func.func @transform_1(%arg0: i32) -> (i32, i32) {
    %c0_i32 = arith.constant 0 : i32
    %c0_i32_0 = arith.constant 0 : i32
    %c0_i32_1 = arith.constant 0 : i32
    return %c0_i32, %c0_i32_0 : i32, i32
  }
  func.func @transform_2(%arg0: i32) -> (i32, i32) {
    %c0_i32 = arith.constant 0 : i32
    %c0_i32_0 = arith.constant 0 : i32
    %c0_i32_1 = arith.constant 0 : i32
    return %c0_i32, %c0_i32_0 : i32, i32
  }
  func.func @transform_3(%arg0: i32) -> (i32, i32) {
    %c0_i32 = arith.constant 0 : i32
    %c0_i32_0 = arith.constant 0 : i32
    return %arg0, %c0_i32 : i32, i32
  }
}

module attributes {stable_mosaic.version = 11 : i64} {
  func.func @kernel(%arg0: i32, %arg1: i32, %arg2: memref<16x512xbf16, #tpu.memory_space<vmem>>, %arg3: memref<512x128xbf16, #tpu.memory_space<vmem>>, %arg4: memref<16x128xf32, #tpu.memory_space<vmem>>, %arg5: memref<8x128xf32, #tpu.memory_space<vmem>>, %arg6: memref<16x128xf32, #tpu.memory_space<vmem>>) attributes {dimension_semantics = [#tpu.dimension_semantics<parallel>, #tpu.dimension_semantics<arbitrary>], iteration_bounds = array<i64: 1, 1>, scalar_prefetch = 0 : i64, scratch_operands = 1 : i64, tpu.core_type = #tpu.core_type<tc>, window_params = [{transform_indices = @transform_0, window_bounds = array<i64: 16, 512>}, {transform_indices = @transform_1, window_bounds = array<i64: 512, 128>}, {transform_indices = @transform_2, window_bounds = array<i64: 16, 128>}, {transform_indices = @transform_3, window_bounds = array<i64: 8, 128>}]} {
    %c0_i32 = arith.constant 0 : i32
    %0 = arith.cmpi eq, %arg1, %c0_i32 : i32
    %1 = arith.extui %0 : i1 to i32
    %c0_i32_0 = arith.constant 0 : i32
    %2 = arith.cmpi ne, %1, %c0_i32_0 : i32
    scf.if %2 {
      %cst_10 = arith.constant 0.000000e+00 : f32
      %12 = vector.broadcast %cst_10 : f32 to vector<16x128xf32>
      %c0_11 = arith.constant 0 : index
      %c0_12 = arith.constant 0 : index
      %13 = vector.load %arg6[%c0_11, %c0_12] : memref<16x128xf32, #tpu.memory_space<vmem>>, vector<16x128xf32>
      tpu.vector_store %arg6[%c0_11, %c0_12], %12 {strides = array<i32>} : memref<16x128xf32, #tpu.memory_space<vmem>>, vector<16x128xf32>,
    } else {
    }
    %c0 = arith.constant 0 : index
    %c0_1 = arith.constant 0 : index
    %3 = vector.load %arg6[%c0, %c0_1] : memref<16x128xf32, #tpu.memory_space<vmem>>, vector<16x128xf32>
    %c0_2 = arith.constant 0 : index
    %c0_3 = arith.constant 0 : index
    %4 = vector.load %arg2[%c0_2, %c0_3] : memref<16x512xbf16, #tpu.memory_space<vmem>>, vector<16x512xbf16>
    %c0_4 = arith.constant 0 : index
    %c0_5 = arith.constant 0 : index
    %5 = vector.load %arg3[%c0_4, %c0_5] : memref<512x128xbf16, #tpu.memory_space<vmem>>, vector<512x128xbf16>
    %cst = arith.constant dense<0.000000e+00> : vector<16x128xf32>
    %6 = tpu.matmul %4, %5, %cst {dimension_numbers = #tpu.dot_dimension_numbers<[1], [0], [0], [1], [0, 0, 1, 1], [], []>} : vector<16x512xbf16>, vector<512x128xbf16>, vector<16x128xf32> -> vector<16x128xf32>
    %7 = arith.addf %3, %6 : vector<16x128xf32>
    %c0_6 = arith.constant 0 : index
    %c0_7 = arith.constant 0 : index
    %8 = vector.load %arg6[%c0_6, %c0_7] : memref<16x128xf32, #tpu.memory_space<vmem>>, vector<16x128xf32>
    tpu.vector_store %arg6[%c0_6, %c0_7], %7 {strides = array<i32>} : memref<16x128xf32, #tpu.memory_space<vmem>>, vector<16x128xf32>,
    %c0_i32_8 = arith.constant 0 : i32
    %9 = arith.cmpi eq, %arg1, %c0_i32_8 : i32
    %10 = arith.extui %9 : i1 to i32
    %c0_i32_9 = arith.constant 0 : i32
    %11 = arith.cmpi ne, %10, %c0_i32_9 : i32
    scf.if %11 {
      %c0_10 = arith.constant 0 : index
      %c0_11 = arith.constant 0 : index
      %12 = vector.load %arg6[%c0_10, %c0_11] : memref<16x128xf32, #tpu.memory_space<vmem>>, vector<16x128xf32>
      %c0_12 = arith.constant 0 : index
      %c0_13 = arith.constant 0 : index
      %13 = vector.load %arg4[%c0_12, %c0_13] : memref<16x128xf32, #tpu.memory_space<vmem>>, vector<16x128xf32>
      tpu.vector_store %arg4[%c0_12, %c0_13], %12 {strides = array<i32>} : memref<16x128xf32, #tpu.memory_space<vmem>>, vector<16x128xf32>,
      %cst_14 = arith.constant dense<0.000000e+00> : vector<128xf32>
      %14 = vector.multi_reduction <add>, %12, %cst_14 [0] : vector<16x128xf32> to vector<128xf32>
      %15 = vector.shape_cast %14 : vector<128xf32> to vector<1x128xf32>
      %16 = arith.mulf %12, %12 : vector<16x128xf32>
      %cst_15 = arith.constant dense<0.000000e+00> : vector<128xf32>
      %17 = vector.multi_reduction <add>, %16, %cst_15 [0] : vector<16x128xf32> to vector<128xf32>
      %18 = vector.shape_cast %17 : vector<128xf32> to vector<1x128xf32>
      %19 = tpu.iota {dimensions = array<i32: 0>} : vector<8x128xi32>
      %c0_i32_16 = arith.constant 0 : i32
      %20 = vector.broadcast %c0_i32_16 : i32 to vector<8x128xi32>
      %21 = arith.cmpi eq, %19, %20 : vector<8x128xi32>
      %c1_i32 = arith.constant 1 : i32
      %22 = vector.broadcast %c1_i32 : i32 to vector<8x128xi32>
      %23 = arith.cmpi eq, %19, %22 : vector<8x128xi32>
      %cst_17 = arith.constant 0.000000e+00 : f32
      %24 = vector.shape_cast %18 : vector<1x128xf32> to vector<1x128xf32>
      %25 = vector.broadcast %24 : vector<1x128xf32> to vector<8x128xf32>
      %26 = vector.broadcast %cst_17 : f32 to vector<8x128xf32>
      %27 = arith.select %23, %25, %26 : vector<8x128xi1>, vector<8x128xf32>
      %28 = vector.shape_cast %15 : vector<1x128xf32> to vector<1x128xf32>
      %29 = vector.broadcast %28 : vector<1x128xf32> to vector<8x128xf32>
      %30 = arith.select %21, %29, %27 : vector<8x128xi1>, vector<8x128xf32>
      %c0_18 = arith.constant 0 : index
      %c0_19 = arith.constant 0 : index
      %31 = vector.load %arg5[%c0_18, %c0_19] : memref<8x128xf32, #tpu.memory_space<vmem>>, vector<8x128xf32>
      tpu.vector_store %arg5[%c0_18, %c0_19], %30 {strides = array<i32>} : memref<8x128xf32, #tpu.memory_space<vmem>>, vector<8x128xf32>,
    } else {
    }
    return
  }
  func.func @transform_0(%arg0: i32, %arg1: i32) -> (i32, i32) {
    %c0_i32 = arith.constant 0 : i32
    return %arg0, %arg1 : i32, i32
  }
  func.func @transform_1(%arg0: i32, %arg1: i32) -> (i32, i32) {
    %c0_i32 = arith.constant 0 : i32
    %c0_i32_0 = arith.constant 0 : i32
    return %arg1, %c0_i32 : i32, i32
  }
  func.func @transform_2(%arg0: i32, %arg1: i32) -> (i32, i32) {
    %c0_i32 = arith.constant 0 : i32
    %c0_i32_0 = arith.constant 0 : i32
    return %arg0, %c0_i32 : i32, i32
  }
  func.func @transform_3(%arg0: i32, %arg1: i32) -> (i32, i32) {
    %c0_i32 = arith.constant 0 : i32
    %c0_i32_0 = arith.constant 0 : i32
    return %arg0, %c0_i32 : i32, i32
  }
}

module attributes {stable_mosaic.version = 11 : i64} {
  func.func @_scale_shift_act_kernel(%arg0: i32, %arg1: memref<16x128xf32, #tpu.memory_space<vmem>>, %arg2: memref<1x128xf32, #tpu.memory_space<vmem>>, %arg3: memref<1x128xf32, #tpu.memory_space<vmem>>, %arg4: memref<16x128xf32, #tpu.memory_space<vmem>>) attributes {dimension_semantics = [#tpu.dimension_semantics<parallel>], iteration_bounds = array<i64: 1>, scalar_prefetch = 0 : i64, scratch_operands = 0 : i64, tpu.core_type = #tpu.core_type<tc>, window_params = [{transform_indices = @transform_0, window_bounds = array<i64: 16, 128>}, {pipeline_mode = #tpu.pipeline_mode<synchronous>, transform_indices = @transform_1, window_bounds = array<i64: 1, 128>}, {pipeline_mode = #tpu.pipeline_mode<synchronous>, transform_indices = @transform_2, window_bounds = array<i64: 1, 128>}, {transform_indices = @transform_3, window_bounds = array<i64: 16, 128>}]} {
    %c0 = arith.constant 0 : index
    %c0_0 = arith.constant 0 : index
    %0 = vector.load %arg1[%c0, %c0_0] : memref<16x128xf32, #tpu.memory_space<vmem>>, vector<16x128xf32>
    %c0_1 = arith.constant 0 : index
    %c0_2 = arith.constant 0 : index
    %1 = vector.load %arg2[%c0_1, %c0_2] : memref<1x128xf32, #tpu.memory_space<vmem>>, vector<1x128xf32>
    %2 = vector.broadcast %1 : vector<1x128xf32> to vector<16x128xf32>
    %3 = arith.mulf %0, %2 : vector<16x128xf32>
    %c0_3 = arith.constant 0 : index
    %c0_4 = arith.constant 0 : index
    %4 = vector.load %arg3[%c0_3, %c0_4] : memref<1x128xf32, #tpu.memory_space<vmem>>, vector<1x128xf32>
    %5 = vector.broadcast %4 : vector<1x128xf32> to vector<16x128xf32>
    %6 = arith.addf %3, %5 : vector<16x128xf32>
    %cst = arith.constant 0.000000e+00 : f32
    %7 = vector.broadcast %cst : f32 to vector<16x128xf32>
    %8 = arith.cmpf oge, %6, %7 : vector<16x128xf32>
    %cst_5 = arith.constant 2.000000e-01 : f32
    %9 = vector.broadcast %cst_5 : f32 to vector<16x128xf32>
    %10 = arith.mulf %9, %6 : vector<16x128xf32>
    %11 = arith.select %8, %6, %10 : vector<16x128xi1>, vector<16x128xf32>
    %c0_6 = arith.constant 0 : index
    %c0_7 = arith.constant 0 : index
    %12 = vector.load %arg4[%c0_6, %c0_7] : memref<16x128xf32, #tpu.memory_space<vmem>>, vector<16x128xf32>
    tpu.vector_store %arg4[%c0_6, %c0_7], %11 {strides = array<i32>} : memref<16x128xf32, #tpu.memory_space<vmem>>, vector<16x128xf32>,
    return
  }
  func.func @transform_0(%arg0: i32) -> (i32, i32) {
    %c0_i32 = arith.constant 0 : i32
    %c0_i32_0 = arith.constant 0 : i32
    return %arg0, %c0_i32 : i32, i32
  }
  func.func @transform_1(%arg0: i32) -> (i32, i32) {
    %c0_i32 = arith.constant 0 : i32
    %c0_i32_0 = arith.constant 0 : i32
    %c0_i32_1 = arith.constant 0 : i32
    return %c0_i32, %c0_i32_0 : i32, i32
  }
  func.func @transform_2(%arg0: i32) -> (i32, i32) {
    %c0_i32 = arith.constant 0 : i32
    %c0_i32_0 = arith.constant 0 : i32
    %c0_i32_1 = arith.constant 0 : i32
    return %c0_i32, %c0_i32_0 : i32, i32
  }
  func.func @transform_3(%arg0: i32) -> (i32, i32) {
    %c0_i32 = arith.constant 0 : i32
    %c0_i32_0 = arith.constant 0 : i32
    return %arg0, %c0_i32 : i32, i32
  }
}

module attributes {stable_mosaic.version = 11 : i64} {
  func.func @kernel(%arg0: i32, %arg1: i32, %arg2: memref<16x512xbf16, #tpu.memory_space<vmem>>, %arg3: memref<512x128xbf16, #tpu.memory_space<vmem>>, %arg4: memref<16x128xf32, #tpu.memory_space<vmem>>, %arg5: memref<8x128xf32, #tpu.memory_space<vmem>>, %arg6: memref<16x128xf32, #tpu.memory_space<vmem>>) attributes {dimension_semantics = [#tpu.dimension_semantics<parallel>, #tpu.dimension_semantics<arbitrary>], iteration_bounds = array<i64: 1, 2>, scalar_prefetch = 0 : i64, scratch_operands = 1 : i64, tpu.core_type = #tpu.core_type<tc>, window_params = [{transform_indices = @transform_0, window_bounds = array<i64: 16, 512>}, {transform_indices = @transform_1, window_bounds = array<i64: 512, 128>}, {transform_indices = @transform_2, window_bounds = array<i64: 16, 128>}, {transform_indices = @transform_3, window_bounds = array<i64: 8, 128>}]} {
    %c0_i32 = arith.constant 0 : i32
    %0 = arith.cmpi eq, %arg1, %c0_i32 : i32
    %1 = arith.extui %0 : i1 to i32
    %c0_i32_0 = arith.constant 0 : i32
    %2 = arith.cmpi ne, %1, %c0_i32_0 : i32
    scf.if %2 {
      %cst_9 = arith.constant 0.000000e+00 : f32
      %12 = vector.broadcast %cst_9 : f32 to vector<16x128xf32>
      %c0_10 = arith.constant 0 : index
      %c0_11 = arith.constant 0 : index
      %13 = vector.load %arg6[%c0_10, %c0_11] : memref<16x128xf32, #tpu.memory_space<vmem>>, vector<16x128xf32>
      tpu.vector_store %arg6[%c0_10, %c0_11], %12 {strides = array<i32>} : memref<16x128xf32, #tpu.memory_space<vmem>>, vector<16x128xf32>,
    } else {
    }
    %c0 = arith.constant 0 : index
    %c0_1 = arith.constant 0 : index
    %3 = vector.load %arg6[%c0, %c0_1] : memref<16x128xf32, #tpu.memory_space<vmem>>, vector<16x128xf32>
    %c0_2 = arith.constant 0 : index
    %c0_3 = arith.constant 0 : index
    %4 = vector.load %arg2[%c0_2, %c0_3] : memref<16x512xbf16, #tpu.memory_space<vmem>>, vector<16x512xbf16>
    %c0_4 = arith.constant 0 : index
    %c0_5 = arith.constant 0 : index
    %5 = vector.load %arg3[%c0_4, %c0_5] : memref<512x128xbf16, #tpu.memory_space<vmem>>, vector<512x128xbf16>
    %cst = arith.constant dense<0.000000e+00> : vector<16x128xf32>
    %6 = tpu.matmul %4, %5, %cst {dimension_numbers = #tpu.dot_dimension_numbers<[1], [0], [0], [1], [0, 0, 1, 1], [], []>} : vector<16x512xbf16>, vector<512x128xbf16>, vector<16x128xf32> -> vector<16x128xf32>
    %7 = arith.addf %3, %6 : vector<16x128xf32>
    %c0_6 = arith.constant 0 : index
    %c0_7 = arith.constant 0 : index
    %8 = vector.load %arg6[%c0_6, %c0_7] : memref<16x128xf32, #tpu.memory_space<vmem>>, vector<16x128xf32>
    tpu.vector_store %arg6[%c0_6, %c0_7], %7 {strides = array<i32>} : memref<16x128xf32, #tpu.memory_space<vmem>>, vector<16x128xf32>,
    %c1_i32 = arith.constant 1 : i32
    %9 = arith.cmpi eq, %arg1, %c1_i32 : i32
    %10 = arith.extui %9 : i1 to i32
    %c0_i32_8 = arith.constant 0 : i32
    %11 = arith.cmpi ne, %10, %c0_i32_8 : i32
    scf.if %11 {
      %c0_9 = arith.constant 0 : index
      %c0_10 = arith.constant 0 : index
      %12 = vector.load %arg6[%c0_9, %c0_10] : memref<16x128xf32, #tpu.memory_space<vmem>>, vector<16x128xf32>
      %c0_11 = arith.constant 0 : index
      %c0_12 = arith.constant 0 : index
      %13 = vector.load %arg4[%c0_11, %c0_12] : memref<16x128xf32, #tpu.memory_space<vmem>>, vector<16x128xf32>
      tpu.vector_store %arg4[%c0_11, %c0_12], %12 {strides = array<i32>} : memref<16x128xf32, #tpu.memory_space<vmem>>, vector<16x128xf32>,
      %cst_13 = arith.constant dense<0.000000e+00> : vector<128xf32>
      %14 = vector.multi_reduction <add>, %12, %cst_13 [0] : vector<16x128xf32> to vector<128xf32>
      %15 = vector.shape_cast %14 : vector<128xf32> to vector<1x128xf32>
      %16 = arith.mulf %12, %12 : vector<16x128xf32>
      %cst_14 = arith.constant dense<0.000000e+00> : vector<128xf32>
      %17 = vector.multi_reduction <add>, %16, %cst_14 [0] : vector<16x128xf32> to vector<128xf32>
      %18 = vector.shape_cast %17 : vector<128xf32> to vector<1x128xf32>
      %19 = tpu.iota {dimensions = array<i32: 0>} : vector<8x128xi32>
      %c0_i32_15 = arith.constant 0 : i32
      %20 = vector.broadcast %c0_i32_15 : i32 to vector<8x128xi32>
      %21 = arith.cmpi eq, %19, %20 : vector<8x128xi32>
      %c1_i32_16 = arith.constant 1 : i32
      %22 = vector.broadcast %c1_i32_16 : i32 to vector<8x128xi32>
      %23 = arith.cmpi eq, %19, %22 : vector<8x128xi32>
      %cst_17 = arith.constant 0.000000e+00 : f32
      %24 = vector.shape_cast %18 : vector<1x128xf32> to vector<1x128xf32>
      %25 = vector.broadcast %24 : vector<1x128xf32> to vector<8x128xf32>
      %26 = vector.broadcast %cst_17 : f32 to vector<8x128xf32>
      %27 = arith.select %23, %25, %26 : vector<8x128xi1>, vector<8x128xf32>
      %28 = vector.shape_cast %15 : vector<1x128xf32> to vector<1x128xf32>
      %29 = vector.broadcast %28 : vector<1x128xf32> to vector<8x128xf32>
      %30 = arith.select %21, %29, %27 : vector<8x128xi1>, vector<8x128xf32>
      %c0_18 = arith.constant 0 : index
      %c0_19 = arith.constant 0 : index
      %31 = vector.load %arg5[%c0_18, %c0_19] : memref<8x128xf32, #tpu.memory_space<vmem>>, vector<8x128xf32>
      tpu.vector_store %arg5[%c0_18, %c0_19], %30 {strides = array<i32>} : memref<8x128xf32, #tpu.memory_space<vmem>>, vector<8x128xf32>,
    } else {
    }
    return
  }
  func.func @transform_0(%arg0: i32, %arg1: i32) -> (i32, i32) {
    %c0_i32 = arith.constant 0 : i32
    return %arg0, %arg1 : i32, i32
  }
  func.func @transform_1(%arg0: i32, %arg1: i32) -> (i32, i32) {
    %c0_i32 = arith.constant 0 : i32
    %c0_i32_0 = arith.constant 0 : i32
    return %arg1, %c0_i32 : i32, i32
  }
  func.func @transform_2(%arg0: i32, %arg1: i32) -> (i32, i32) {
    %c0_i32 = arith.constant 0 : i32
    %c0_i32_0 = arith.constant 0 : i32
    return %arg0, %c0_i32 : i32, i32
  }
  func.func @transform_3(%arg0: i32, %arg1: i32) -> (i32, i32) {
    %c0_i32 = arith.constant 0 : i32
    %c0_i32_0 = arith.constant 0 : i32
    return %arg0, %c0_i32 : i32, i32
  }
}

module attributes {stable_mosaic.version = 11 : i64} {
  func.func @kernel(%arg0: i32, %arg1: i32, %arg2: memref<16x512xbf16, #tpu.memory_space<vmem>>, %arg3: memref<512x128xbf16, #tpu.memory_space<vmem>>, %arg4: memref<1x128xf32, #tpu.memory_space<vmem>>, %arg5: memref<16x128xf32, #tpu.memory_space<vmem>>, %arg6: memref<16x128xf32, #tpu.memory_space<vmem>>) attributes {dimension_semantics = [#tpu.dimension_semantics<parallel>, #tpu.dimension_semantics<arbitrary>], iteration_bounds = array<i64: 1, 4>, scalar_prefetch = 0 : i64, scratch_operands = 1 : i64, tpu.core_type = #tpu.core_type<tc>, window_params = [{transform_indices = @transform_0, window_bounds = array<i64: 16, 512>}, {transform_indices = @transform_1, window_bounds = array<i64: 512, 128>}, {pipeline_mode = #tpu.pipeline_mode<synchronous>, transform_indices = @transform_2, window_bounds = array<i64: 1, 128>}, {transform_indices = @transform_3, window_bounds = array<i64: 16, 128>}]} {
    %c0_i32 = arith.constant 0 : i32
    %0 = arith.cmpi eq, %arg1, %c0_i32 : i32
    %1 = arith.extui %0 : i1 to i32
    %c0_i32_0 = arith.constant 0 : i32
    %2 = arith.cmpi ne, %1, %c0_i32_0 : i32
    scf.if %2 {
      %cst_9 = arith.constant 0.000000e+00 : f32
      %12 = vector.broadcast %cst_9 : f32 to vector<16x128xf32>
      %c0_10 = arith.constant 0 : index
      %c0_11 = arith.constant 0 : index
      %13 = vector.load %arg6[%c0_10, %c0_11] : memref<16x128xf32, #tpu.memory_space<vmem>>, vector<16x128xf32>
      tpu.vector_store %arg6[%c0_10, %c0_11], %12 {strides = array<i32>} : memref<16x128xf32, #tpu.memory_space<vmem>>, vector<16x128xf32>,
    } else {
    }
    %c0 = arith.constant 0 : index
    %c0_1 = arith.constant 0 : index
    %3 = vector.load %arg6[%c0, %c0_1] : memref<16x128xf32, #tpu.memory_space<vmem>>, vector<16x128xf32>
    %c0_2 = arith.constant 0 : index
    %c0_3 = arith.constant 0 : index
    %4 = vector.load %arg2[%c0_2, %c0_3] : memref<16x512xbf16, #tpu.memory_space<vmem>>, vector<16x512xbf16>
    %c0_4 = arith.constant 0 : index
    %c0_5 = arith.constant 0 : index
    %5 = vector.load %arg3[%c0_4, %c0_5] : memref<512x128xbf16, #tpu.memory_space<vmem>>, vector<512x128xbf16>
    %cst = arith.constant dense<0.000000e+00> : vector<16x128xf32>
    %6 = tpu.matmul %4, %5, %cst {dimension_numbers = #tpu.dot_dimension_numbers<[1], [0], [0], [1], [0, 0, 1, 1], [], []>} : vector<16x512xbf16>, vector<512x128xbf16>, vector<16x128xf32> -> vector<16x128xf32>
    %7 = arith.addf %3, %6 : vector<16x128xf32>
    %c0_6 = arith.constant 0 : index
    %c0_7 = arith.constant 0 : index
    %8 = vector.load %arg6[%c0_6, %c0_7] : memref<16x128xf32, #tpu.memory_space<vmem>>, vector<16x128xf32>
    tpu.vector_store %arg6[%c0_6, %c0_7], %7 {strides = array<i32>} : memref<16x128xf32, #tpu.memory_space<vmem>>, vector<16x128xf32>,
    %c3_i32 = arith.constant 3 : i32
    %9 = arith.cmpi eq, %arg1, %c3_i32 : i32
    %10 = arith.extui %9 : i1 to i32
    %c0_i32_8 = arith.constant 0 : i32
    %11 = arith.cmpi ne, %10, %c0_i32_8 : i32
    scf.if %11 {
      %c0_9 = arith.constant 0 : index
      %c0_10 = arith.constant 0 : index
      %12 = vector.load %arg6[%c0_9, %c0_10] : memref<16x128xf32, #tpu.memory_space<vmem>>, vector<16x128xf32>
      %c0_11 = arith.constant 0 : index
      %c0_12 = arith.constant 0 : index
      %13 = vector.load %arg4[%c0_11, %c0_12] : memref<1x128xf32, #tpu.memory_space<vmem>>, vector<1x128xf32>
      %14 = vector.broadcast %13 : vector<1x128xf32> to vector<16x128xf32>
      %15 = arith.addf %12, %14 : vector<16x128xf32>
      %c0_13 = arith.constant 0 : index
      %c0_14 = arith.constant 0 : index
      %16 = vector.load %arg5[%c0_13, %c0_14] : memref<16x128xf32, #tpu.memory_space<vmem>>, vector<16x128xf32>
      tpu.vector_store %arg5[%c0_13, %c0_14], %15 {strides = array<i32>} : memref<16x128xf32, #tpu.memory_space<vmem>>, vector<16x128xf32>,
    } else {
    }
    return
  }
  func.func @transform_0(%arg0: i32, %arg1: i32) -> (i32, i32) {
    %c0_i32 = arith.constant 0 : i32
    return %arg0, %arg1 : i32, i32
  }
  func.func @transform_1(%arg0: i32, %arg1: i32) -> (i32, i32) {
    %c0_i32 = arith.constant 0 : i32
    %c0_i32_0 = arith.constant 0 : i32
    return %arg1, %c0_i32 : i32, i32
  }
  func.func @transform_2(%arg0: i32, %arg1: i32) -> (i32, i32) {
    %c0_i32 = arith.constant 0 : i32
    %c0_i32_0 = arith.constant 0 : i32
    %c0_i32_1 = arith.constant 0 : i32
    return %c0_i32, %c0_i32_0 : i32, i32
  }
  func.func @transform_3(%arg0: i32, %arg1: i32) -> (i32, i32) {
    %c0_i32 = arith.constant 0 : i32
    %c0_i32_0 = arith.constant 0 : i32
    return %arg0, %c0_i32 : i32, i32
  }
}

</mosaic_0001>

<llo_original>
// kernel: _lambda_.9
$region0: #{_lambda_.9}
  #allocation0 [shape = 'u32[]', space=smem, size = 0x4, offset = 0x4, fixed_abs, tag = 'smem constant byte address 0x4 - core index']
  #allocation1 [shape = 'u32[144,128]{1,0:T(1,128)}', space=vmem, size = 0x12000, scoped, tag = 'internal scratch']
  #allocation2 [shape = 'f32[512,128]{1,0:T(8,128)}', space=vmem, size = 0x40000, scoped, tag = 'scratch operand']
  %s0 = inlined_call_operand.vmem [shape: bf16[512,128], index: 0, kind: input, shape index: {}]
  %s1 = inlined_call_operand.vmem [shape: bf16[128,128], index: 1, kind: input, shape index: {}]
  %s2 = inlined_call_operand.vmem [shape: f32[1,128], index: 2, kind: input, shape index: {}]
  %s3 = inlined_call_operand.vmem [shape: f32[512,128], index: 3, kind: output, shape index: {}]
  %s4 = sld [smem:[#allocation0]]
  $region30: #{_lambda_.9} parent=0
    _
  %s6 = ssub.s32 1, %s4
  %s7 = scalar_select 0, %s6, %s4
  // Predicated region
  $region2: #{_lambda_.9} parent=0 // pred_check
    _
  $region3: #{_lambda_.9} parent=0 // pred_check_branch
    %9 = sbr.rel (0) target = $region5
  $region4: #{_lambda_.9} parent=0 // pred_region
    _
  $region5: #{_lambda_.9} parent=0 // pred_fallthru
    _
  // Predicated region
  $region6: #{_lambda_.9} parent=0 // pred_check
    _
  $region7: #{_lambda_.9} parent=0 // pred_check_branch
    %11 = sbr.rel (0) target = $region9
  $region8: #{_lambda_.9} parent=0 // pred_region
    _
  $region9: #{_lambda_.9} parent=0 // pred_fallthru
    _
  // Predicated region
  $region10: #{_lambda_.9} parent=0 // pred_check
    _
  $region11: #{_lambda_.9} parent=0 // pred_check_branch
    %13 = sbr.rel (0) target = $region13
  $region12: #{_lambda_.9} parent=0 // pred_region
    _
  $region13: #{_lambda_.9} parent=0 // pred_fallthru
    _
  %p15 = scmp.eq.s32.totalorder 0, 0
  // Predicated region
  $region14: #{_lambda_.9} parent=0 // pred_check
    %p16 = pneg %p15
  $region15: #{_lambda_.9} parent=0 // pred_check_branch
    %18 = sbr.rel (%p16) target = $region17
  $region16: #{_lambda_.9} parent=0 // pred_region
    %19 = vst [vmem:[#allocation2] sm:$0xff] 0.0
    %20 = vst [vmem:[#allocation2 + $0x8] sm:$0xff] 0.0
    %21 = vst [vmem:[#allocation2 + $0x10] sm:$0xff] 0.0
    %22 = vst [vmem:[#allocation2 + $0x18] sm:$0xff] 0.0
    %23 = vst [vmem:[#allocation2 + $0x20] sm:$0xff] 0.0
    %24 = vst [vmem:[#allocation2 + $0x28] sm:$0xff] 0.0
    %25 = vst [vmem:[#allocation2 + $0x30] sm:$0xff] 0.0
    %26 = vst [vmem:[#allocation2 + $0x38] sm:$0xff] 0.0
    %27 = vst [vmem:[#allocation2 + $0x40] sm:$0xff] 0.0
    %28 = vst [vmem:[#allocation2 + $0x48] sm:$0xff] 0.0
    %29 = vst [vmem:[#allocation2 + $0x50] sm:$0xff] 0.0
    %30 = vst [vmem:[#allocation2 + $0x58] sm:$0xff] 0.0
    %31 = vst [vmem:[#allocation2 + $0x60] sm:$0xff] 0.0
    %32 = vst [vmem:[#allocation2 + $0x68] sm:$0xff] 0.0
    %33 = vst [vmem:[#allocation2 + $0x70] sm:$0xff] 0.0
    %34 = vst [vmem:[#allocation2 + $0x78] sm:$0xff] 0.0
    %35 = vst [vmem:[#allocation2 + $0x80] sm:$0xff] 0.0
    %36 = vst [vmem:[#allocation2 + $0x88] sm:$0xff] 0.0
    %37 = vst [vmem:[#allocation2 + $0x90] sm:$0xff] 0.0
    %38 = vst [vmem:[#allocation2 + $0x98] sm:$0xff] 0.0
    %39 = vst [vmem:[#allocation2 + $0xa0] sm:$0xff] 0.0
    %40 = vst [vmem:[#allocation2 + $0xa8] sm:$0xff] 0.0
    %41 = vst [vmem:[#allocation2 + $0xb0] sm:$0xff] 0.0
    %42 = vst [vmem:[#allocation2 + $0xb8] sm:$0xff] 0.0
    %43 = vst [vmem:[#allocation2 + $0xc0] sm:$0xff] 0.0
    %44 = vst [vmem:[#allocation2 + $0xc8] sm:$0xff] 0.0
    %45 = vst [vmem:[#allocation2 + $0xd0] sm:$0xff] 0.0
    %46 = vst [vmem:[#allocation2 + $0xd8] sm:$0xff] 0.0
    %47 = vst [vmem:[#allocation2 + $0xe0] sm:$0xff] 0.0
    %48 = vst [vmem:[#allocation2 + $0xe8] sm:$0xff] 0.0
    %49 = vst [vmem:[#allocation2 + $0xf0] sm:$0xff] 0.0
    %50 = vst [vmem:[#allocation2 + $0xf8] sm:$0xff] 0.0
    %51 = vst [vmem:[#allocation2 + $0x100] sm:$0xff] 0.0
    %52 = vst [vmem:[#allocation2 + $0x108] sm:$0xff] 0.0
    %53 = vst [vmem:[#allocation2 + $0x110] sm:$0xff] 0.0
    %54 = vst [vmem:[#allocation2 + $0x118] sm:$0xff] 0.0
    %55 = vst [vmem:[#allocation2 + $0x120] sm:$0xff] 0.0
    %56 = vst [vmem:[#allocation2 + $0x128] sm:$0xff] 0.0
    %57 = vst [vmem:[#allocation2 + $0x130] sm:$0xff] 0.0
    %58 = vst [vmem:[#allocation2 + $0x138] sm:$0xff] 0.0
    %59 = vst [vmem:[#allocation2 + $0x140] sm:$0xff] 0.0
    %60 = vst [vmem:[#allocation2 + $0x148] sm:$0xff] 0.0
    %61 = vst [vmem:[#allocation2 + $0x150] sm:$0xff] 0.0
    %62 = vst [vmem:[#allocation2 + $0x158] sm:$0xff] 0.0
    %63 = vst [vmem:[#allocation2 + $0x160] sm:$0xff] 0.0
    %64 = vst [vmem:[#allocation2 + $0x168] sm:$0xff] 0.0
    %65 = vst [vmem:[#allocation2 + $0x170] sm:$0xff] 0.0
    %66 = vst [vmem:[#allocation2 + $0x178] sm:$0xff] 0.0
    %67 = vst [vmem:[#allocation2 + $0x180] sm:$0xff] 0.0
    %68 = vst [vmem:[#allocation2 + $0x188] sm:$0xff] 0.0
    %69 = vst [vmem:[#allocation2 + $0x190] sm:$0xff] 0.0
    %70 = vst [vmem:[#allocation2 + $0x198] sm:$0xff] 0.0
    %71 = vst [vmem:[#allocation2 + $0x1a0] sm:$0xff] 0.0
    %72 = vst [vmem:[#allocation2 + $0x1a8] sm:$0xff] 0.0
    %73 = vst [vmem:[#allocation2 + $0x1b0] sm:$0xff] 0.0
    %74 = vst [vmem:[#allocation2 + $0x1b8] sm:$0xff] 0.0
    %75 = vst [vmem:[#allocation2 + $0x1c0] sm:$0xff] 0.0
    %76 = vst [vmem:[#allocation2 + $0x1c8] sm:$0xff] 0.0
    %77 = vst [vmem:[#allocation2 + $0x1d0] sm:$0xff] 0.0
    %78 = vst [vmem:[#allocation2 + $0x1d8] sm:$0xff] 0.0
    %79 = vst [vmem:[#allocation2 + $0x1e0] sm:$0xff] 0.0
    %80 = vst [vmem:[#allocation2 + $0x1e8] sm:$0xff] 0.0
    %81 = vst [vmem:[#allocation2 + $0x1f0] sm:$0xff] 0.0
    %82 = vst [vmem:[#allocation2 + $0x1f8] sm:$0xff] 0.0
  $region17: #{_lambda_.9} parent=0 // pred_fallthru
    _
  %v83 = vld [vmem:[#allocation2] sm:$0xff]
  %v84 = vld [vmem:[#allocation2 + $0x8] sm:$0xff]
  %v85 = vld [vmem:[#allocation2 + $0x10] sm:$0xff]
  %v86 = vld [vmem:[#allocation2 + $0x18] sm:$0xff]
  %v87 = vld [vmem:[#allocation2 + $0x20] sm:$0xff]
  %v88 = vld [vmem:[#allocation2 + $0x28] sm:$0xff]
  %v89 = vld [vmem:[#allocation2 + $0x30] sm:$0xff]
  %v90 = vld [vmem:[#allocation2 + $0x38] sm:$0xff]
  %v91 = vld [vmem:[#allocation2 + $0x40] sm:$0xff]
  %v92 = vld [vmem:[#allocation2 + $0x48] sm:$0xff]
  %v93 = vld [vmem:[#allocation2 + $0x50] sm:$0xff]
  %v94 = vld [vmem:[#allocation2 + $0x58] sm:$0xff]
  %v95 = vld [vmem:[#allocation2 + $0x60] sm:$0xff]
  %v96 = vld [vmem:[#allocation2 + $0x68] sm:$0xff]
  %v97 = vld [vmem:[#allocation2 + $0x70] sm:$0xff]
  %v98 = vld [vmem:[#allocation2 + $0x78] sm:$0xff]
  %v99 = vld [vmem:[#allocation2 + $0x80] sm:$0xff]
  %v100 = vld [vmem:[#allocation2 + $0x88] sm:$0xff]
  %v101 = vld [vmem:[#allocation2 + $0x90] sm:$0xff]
  %v102 = vld [vmem:[#allocation2 + $0x98] sm:$0xff]
  %v103 = vld [vmem:[#allocation2 + $0xa0] sm:$0xff]
  %v104 = vld [vmem:[#allocation2 + $0xa8] sm:$0xff]
  %v105 = vld [vmem:[#allocation2 + $0xb0] sm:$0xff]
  %v106 = vld [vmem:[#allocation2 + $0xb8] sm:$0xff]
  %v107 = vld [vmem:[#allocation2 + $0xc0] sm:$0xff]
  %v108 = vld [vmem:[#allocation2 + $0xc8] sm:$0xff]
  %v109 = vld [vmem:[#allocation2 + $0xd0] sm:$0xff]
  %v110 = vld [vmem:[#allocation2 + $0xd8] sm:$0xff]
  %v111 = vld [vmem:[#allocation2 + $0xe0] sm:$0xff]
  %v112 = vld [vmem:[#allocation2 + $0xe8] sm:$0xff]
  %v113 = vld [vmem:[#allocation2 + $0xf0] sm:$0xff]
  %v114 = vld [vmem:[#allocation2 + $0xf8] sm:$0xff]
  %v115 = vld [vmem:[#allocation2 + $0x100] sm:$0xff]
  %v116 = vld [vmem:[#allocation2 + $0x108] sm:$0xff]
  %v117 = vld [vmem:[#allocation2 + $0x110] sm:$0xff]
  %v118 = vld [vmem:[#allocation2 + $0x118] sm:$0xff]
  %v119 = vld [vmem:[#allocation2 + $0x120] sm:$0xff]
  %v120 = vld [vmem:[#allocation2 + $0x128] sm:$0xff]
  %v121 = vld [vmem:[#allocation2 + $0x130] sm:$0xff]
  %v122 = vld [vmem:[#allocation2 + $0x138] sm:$0xff]
  %v123 = vld [vmem:[#allocation2 + $0x140] sm:$0xff]
  %v124 = vld [vmem:[#allocation2 + $0x148] sm:$0xff]
  %v125 = vld [vmem:[#allocation2 + $0x150] sm:$0xff]
  %v126 = vld [vmem:[#allocation2 + $0x158] sm:$0xff]
  %v127 = vld [vmem:[#allocation2 + $0x160] sm:$0xff]
  %v128 = vld [vmem:[#allocation2 + $0x168] sm:$0xff]
  %v129 = vld [vmem:[#allocation2 + $0x170] sm:$0xff]
  %v130 = vld [vmem:[#allocation2 + $0x178] sm:$0xff]
  %v131 = vld [vmem:[#allocation2 + $0x180] sm:$0xff]
  %v132 = vld [vmem:[#allocation2 + $0x188] sm:$0xff]
  %v133 = vld [vmem:[#allocation2 + $0x190] sm:$0xff]
  %v134 = vld [vmem:[#allocation2 + $0x198] sm:$0xff]
  %v135 = vld [vmem:[#allocation2 + $0x1a0] sm:$0xff]
  %v136 = vld [vmem:[#allocation2 + $0x1a8] sm:$0xff]
  %v137 = vld [vmem:[#allocation2 + $0x1b0] sm:$0xff]
  %v138 = vld [vmem:[#allocation2 + $0x1b8] sm:$0xff]
  %v139 = vld [vmem:[#allocation2 + $0x1c0] sm:$0xff]
  %v140 = vld [vmem:[#allocation2 + $0x1c8] sm:$0xff]
  %v141 = vld [vmem:[#allocation2 + $0x1d0] sm:$0xff]
  %v142 = vld [vmem:[#allocation2 + $0x1d8] sm:$0xff]
  %v143 = vld [vmem:[#allocation2 + $0x1e0] sm:$0xff]
  %v144 = vld [vmem:[#allocation2 + $0x1e8] sm:$0xff]
  %v145 = vld [vmem:[#allocation2 + $0x1f0] sm:$0xff]
  %v146 = vld [vmem:[#allocation2 + $0x1f8] sm:$0xff]
  %v147 = vld [vmem:[%s0] sm:$0xf]
  %v148 = vld [vmem:[%s0 + $0x4] sm:$0xf]
  %v149 = vld [vmem:[%s0 + $0x8] sm:$0xf]
  %v150 = vld [vmem:[%s0 + $0xc] sm:$0xf]
  %v151 = vld [vmem:[%s0 + $0x10] sm:$0xf]
  %v152 = vld [vmem:[%s0 + $0x14] sm:$0xf]
  %v153 = vld [vmem:[%s0 + $0x18] sm:$0xf]
  %v154 = vld [vmem:[%s0 + $0x1c] sm:$0xf]
  %v155 = vld [vmem:[%s0 + $0x20] sm:$0xf]
  %v156 = vld [vmem:[%s0 + $0x24] sm:$0xf]
  %v157 = vld [vmem:[%s0 + $0x28] sm:$0xf]
  %v158 = vld [vmem:[%s0 + $0x2c] sm:$0xf]
  %v159 = vld [vmem:[%s0 + $0x30] sm:$0xf]
  %v160 = vld [vmem:[%s0 + $0x34] sm:$0xf]
  %v161 = vld [vmem:[%s0 + $0x38] sm:$0xf]
  %v162 = vld [vmem:[%s0 + $0x3c] sm:$0xf]
  %v163 = vld [vmem:[%s0 + $0x40] sm:$0xf]
  %v164 = vld [vmem:[%s0 + $0x44] sm:$0xf]
  %v165 = vld [vmem:[%s0 + $0x48] sm:$0xf]
  %v166 = vld [vmem:[%s0 + $0x4c] sm:$0xf]
  %v167 = vld [vmem:[%s0 + $0x50] sm:$0xf]
  %v168 = vld [vmem:[%s0 + $0x54] sm:$0xf]
  %v169 = vld [vmem:[%s0 + $0x58] sm:$0xf]
  %v170 = vld [vmem:[%s0 + $0x5c] sm:$0xf]
  %v171 = vld [vmem:[%s0 + $0x60] sm:$0xf]
  %v172 = vld [vmem:[%s0 + $0x64] sm:$0xf]
  %v173 = vld [vmem:[%s0 + $0x68] sm:$0xf]
  %v174 = vld [vmem:[%s0 + $0x6c] sm:$0xf]
  %v175 = vld [vmem:[%s0 + $0x70] sm:$0xf]
  %v176 = vld [vmem:[%s0 + $0x74] sm:$0xf]
  %v177 = vld [vmem:[%s0 + $0x78] sm:$0xf]
  %v178 = vld [vmem:[%s0 + $0x7c] sm:$0xf]
  %v179 = vld [vmem:[%s0 + $0x80] sm:$0xf]
  %v180 = vld [vmem:[%s0 + $0x84] sm:$0xf]
  %v181 = vld [vmem:[%s0 + $0x88] sm:$0xf]
  %v182 = vld [vmem:[%s0 + $0x8c] sm:$0xf]
  %v183 = vld [vmem:[%s0 + $0x90] sm:$0xf]
  %v184 = vld [vmem:[%s0 + $0x94] sm:$0xf]
  %v185 = vld [vmem:[%s0 + $0x98] sm:$0xf]
  %v186 = vld [vmem:[%s0 + $0x9c] sm:$0xf]
  %v187 = vld [vmem:[%s0 + $0xa0] sm:$0xf]
  %v188 = vld [vmem:[%s0 + $0xa4] sm:$0xf]
  %v189 = vld [vmem:[%s0 + $0xa8] sm:$0xf]
  %v190 = vld [vmem:[%s0 + $0xac] sm:$0xf]
  %v191 = vld [vmem:[%s0 + $0xb0] sm:$0xf]
  %v192 = vld [vmem:[%s0 + $0xb4] sm:$0xf]
  %v193 = vld [vmem:[%s0 + $0xb8] sm:$0xf]
  %v194 = vld [vmem:[%s0 + $0xbc] sm:$0xf]
  %v195 = vld [vmem:[%s0 + $0xc0] sm:$0xf]
  %v196 = vld [vmem:[%s0 + $0xc4] sm:$0xf]
  %v197 = vld [vmem:[%s0 + $0xc8] sm:$0xf]
  %v198 = vld [vmem:[%s0 + $0xcc] sm:$0xf]
  %v199 = vld [vmem:[%s0 + $0xd0] sm:$0xf]
  %v200 = vld [vmem:[%s0 + $0xd4] sm:$0xf]
  %v201 = vld [vmem:[%s0 + $0xd8] sm:$0xf]
  %v202 = vld [vmem:[%s0 + $0xdc] sm:$0xf]
  %v203 = vld [vmem:[%s0 + $0xe0] sm:$0xf]
  %v204 = vld [vmem:[%s0 + $0xe4] sm:$0xf]
  %v205 = vld [vmem:[%s0 + $0xe8] sm:$0xf]
  %v206 = vld [vmem:[%s0 + $0xec] sm:$0xf]
  %v207 = vld [vmem:[%s0 + $0xf0] sm:$0xf]
  %v208 = vld [vmem:[%s0 + $0xf4] sm:$0xf]
  %v209 = vld [vmem:[%s0 + $0xf8] sm:$0xf]
  %v210 = vld [vmem:[%s0 + $0xfc] sm:$0xf]
  %v211 = vld [vmem:[%s1] sm:$0xf]
  %v212 = vld [vmem:[%s1 + $0x4] sm:$0xf]
  %v213 = vld [vmem:[%s1 + $0x8] sm:$0xf]
  %v214 = vld [vmem:[%s1 + $0xc] sm:$0xf]
  %v215 = vld [vmem:[%s1 + $0x10] sm:$0xf]
  %v216 = vld [vmem:[%s1 + $0x14] sm:$0xf]
  %v217 = vld [vmem:[%s1 + $0x18] sm:$0xf]
  %v218 = vld [vmem:[%s1 + $0x1c] sm:$0xf]
  %v219 = vld [vmem:[%s1 + $0x20] sm:$0xf]
  %v220 = vld [vmem:[%s1 + $0x24] sm:$0xf]
  %v221 = vld [vmem:[%s1 + $0x28] sm:$0xf]
  %v222 = vld [vmem:[%s1 + $0x2c] sm:$0xf]
  %v223 = vld [vmem:[%s1 + $0x30] sm:$0xf]
  %v224 = vld [vmem:[%s1 + $0x34] sm:$0xf]
  %v225 = vld [vmem:[%s1 + $0x38] sm:$0xf]
  %v226 = vld [vmem:[%s1 + $0x3c] sm:$0xf]
  %v291 = vunpack.c.l.b16 %v147
  %v292 = vunpack.c.l.b16 %v148
  %v293 = vunpack.c.l.b16 %v149
  %v294 = vunpack.c.l.b16 %v150
  %v295 = vunpack.c.l.b16 %v151
  %v296 = vunpack.c.l.b16 %v152
  %v297 = vunpack.c.l.b16 %v153
  %v298 = vunpack.c.l.b16 %v154
  %v299 = vunpack.c.l.b16 %v155
  %v300 = vunpack.c.l.b16 %v156
  %v301 = vunpack.c.l.b16 %v157
  %v302 = vunpack.c.l.b16 %v158
  %v303 = vunpack.c.l.b16 %v159
  %v304 = vunpack.c.l.b16 %v160
  %v305 = vunpack.c.l.b16 %v161
  %v306 = vunpack.c.l.b16 %v162
  %v307 = vunpack.c.l.b16 %v163
  %v308 = vunpack.c.l.b16 %v164
  %v309 = vunpack.c.l.b16 %v165
  %v310 = vunpack.c.l.b16 %v166
  %v311 = vunpack.c.l.b16 %v167
  %v312 = vunpack.c.l.b16 %v168
  %v313 = vunpack.c.l.b16 %v169
  %v314 = vunpack.c.l.b16 %v170
  %v315 = vunpack.c.l.b16 %v171
  %v316 = vunpack.c.l.b16 %v172
  %v317 = vunpack.c.l.b16 %v173
  %v318 = vunpack.c.l.b16 %v174
  %v319 = vunpack.c.l.b16 %v175
  %v320 = vunpack.c.l.b16 %v176
  %v321 = vunpack.c.l.b16 %v177
  %v322 = vunpack.c.l.b16 %v178
  %v323 = vunpack.c.l.b16 %v179
  %v324 = vunpack.c.l.b16 %v180
  %v325 = vunpack.c.l.b16 %v181
  %v326 = vunpack.c.l.b16 %v182
  %v327 = vunpack.c.l.b16 %v183
  %v328 = vunpack.c.l.b16 %v184
  %v329 = vunpack.c.l.b16 %v185
  %v330 = vunpack.c.l.b16 %v186
  %v331 = vunpack.c.l.b16 %v187
  %v332 = vunpack.c.l.b16 %v188
  %v333 = vunpack.c.l.b16 %v189
  %v334 = vunpack.c.l.b16 %v190
  %v335 = vunpack.c.l.b16 %v191
  %v336 = vunpack.c.l.b16 %v192
  %v337 = vunpack.c.l.b16 %v193
  %v338 = vunpack.c.l.b16 %v194
  %v339 = vunpack.c.l.b16 %v195
  %v340 = vunpack.c.l.b16 %v196
  %v341 = vunpack.c.l.b16 %v197
  %v342 = vunpack.c.l.b16 %v198
  %v343 = vunpack.c.l.b16 %v199
  %v344 = vunpack.c.l.b16 %v200
  %v345 = vunpack.c.l.b16 %v201
  %v346 = vunpack.c.l.b16 %v202
  %v347 = vunpack.c.l.b16 %v203
  %v348 = vunpack.c.l.b16 %v204
  %v349 = vunpack.c.l.b16 %v205
  %v350 = vunpack.c.l.b16 %v206
  %v351 = vunpack.c.l.b16 %v207
  %v352 = vunpack.c.l.b16 %v208
  %v353 = vunpack.c.l.b16 %v209
  %v354 = vunpack.c.l.b16 %v210
  %v355 = vpack.c.b16 %v292, %v291
  %v356 = vpack.c.b16 %v294, %v293
  %v357 = vpack.c.b16 %v296, %v295
  %v358 = vpack.c.b16 %v298, %v297
  %v359 = vpack.c.b16 %v300, %v299
  %v360 = vpack.c.b16 %v302, %v301
  %v361 = vpack.c.b16 %v304, %v303
  %v362 = vpack.c.b16 %v306, %v305
  %v363 = vpack.c.b16 %v308, %v307
  %v364 = vpack.c.b16 %v310, %v309
  %v365 = vpack.c.b16 %v312, %v311
  %v366 = vpack.c.b16 %v314, %v313
  %v367 = vpack.c.b16 %v316, %v315
  %v368 = vpack.c.b16 %v318, %v317
  %v369 = vpack.c.b16 %v320, %v319
  %v370 = vpack.c.b16 %v322, %v321
  %v371 = vpack.c.b16 %v324, %v323
  %v372 = vpack.c.b16 %v326, %v325
  %v373 = vpack.c.b16 %v328, %v327
  %v374 = vpack.c.b16 %v330, %v329
  %v375 = vpack.c.b16 %v332, %v331
  %v376 = vpack.c.b16 %v334, %v333
  %v377 = vpack.c.b16 %v336, %v335
  %v378 = vpack.c.b16 %v338, %v337
  %v379 = vpack.c.b16 %v340, %v339
  %v380 = vpack.c.b16 %v342, %v341
  %v381 = vpack.c.b16 %v344, %v343
  %v382 = vpack.c.b16 %v346, %v345
  %v383 = vpack.c.b16 %v348, %v347
  %v384 = vpack.c.b16 %v350, %v349
  %v385 = vpack.c.b16 %v352, %v351
  %v386 = vpack.c.b16 %v354, %v353
  %v435 = vunpack.c.l.b16 %v211
  %v436 = vunpack.c.l.b16 %v212
  %v437 = vunpack.c.l.b16 %v213
  %v438 = vunpack.c.l.b16 %v214
  %v439 = vunpack.c.l.b16 %v215
  %v440 = vunpack.c.l.b16 %v216
  %v441 = vunpack.c.l.b16 %v217
  %v442 = vunpack.c.l.b16 %v218
  %v443 = vunpack.c.l.b16 %v219
  %v444 = vunpack.c.l.b16 %v220
  %v445 = vunpack.c.l.b16 %v221
  %v446 = vunpack.c.l.b16 %v222
  %v447 = vunpack.c.l.b16 %v223
  %v448 = vunpack.c.l.b16 %v224
  %v449 = vunpack.c.l.b16 %v225
  %v450 = vunpack.c.l.b16 %v226
  %v451 = vpack.c.b16 %v436, %v435
  %v452 = vpack.c.b16 %v438, %v437
  %v453 = vpack.c.b16 %v440, %v439
  %v454 = vpack.c.b16 %v442, %v441
  %v455 = vpack.c.b16 %v444, %v443
  %v456 = vpack.c.b16 %v446, %v445
  %v457 = vpack.c.b16 %v448, %v447
  %v458 = vpack.c.b16 %v450, %v449
  %467 = vmatprep.subr.bf16.mxu0 0
  %468 = vmatpush1.bf16.msra.mxu0 %v451
  %469 = vmatprep.subr.bf16.mxu0 0
  %470 = vmatpush1.bf16.msra.mxu0 %v452
  %471 = vmatprep.subr.bf16.mxu0 0
  %472 = vmatpush1.bf16.msra.mxu0 %v453
  %473 = vmatprep.subr.bf16.mxu0 0
  %474 = vmatpush1.bf16.msra.mxu0 %v454
  %475 = vmatprep.subr.bf16.mxu0 0
  %476 = vmatpush1.bf16.msra.mxu0 %v455
  %477 = vmatprep.subr.bf16.mxu0 0
  %478 = vmatpush1.bf16.msra.mxu0 %v456
  %479 = vmatprep.subr.bf16.mxu0 0
  %480 = vmatpush1.bf16.msra.mxu0 %v457
  %481 = vmatprep.subr.bf16.mxu0 0
  %482 = vmatpush1.bf16.msra.mxu0 %v458
  %483 = vmatprep.subr.bf16.mxu0 0
  %484 = vmatpush1.bf16.msra.mxu0 0
  %485 = vmatprep.subr.bf16.mxu0 0
  %486 = vmatpush1.bf16.msra.mxu0 0
  %487 = vmatprep.subr.bf16.mxu0 0
  %488 = vmatpush1.bf16.msra.mxu0 0
  %489 = vmatprep.subr.bf16.mxu0 0
  %490 = vmatpush1.bf16.msra.mxu0 0
  %491 = vmatprep.subr.bf16.mxu0 0
  %492 = vmatpush1.bf16.msra.mxu0 0
  %493 = vmatprep.subr.bf16.mxu0 0
  %494 = vmatpush1.bf16.msra.mxu0 0
  %495 = vmatprep.subr.bf16.mxu0 0
  %496 = vmatpush1.bf16.msra.mxu0 0
  %497 = vmatprep.subr.bf16.mxu0 0
  %498 = vmatpush1.bf16.msra.mxu0 0
  %499 = vmatprep.mubr.bf16.mxu0 0
  %500 = vmatmul.mubr.bf16.gmra.mrb[0].mxu0 %v355
  %v501 = vpop.f32.mrb[0].mxu0
  %v502 = vadd.f32 0.0, %v501
  %v503 = vpop.f32.mrb[0].mxu0
  %v504 = vpop.f32.mrb[0].mxu0
  %v505 = vadd.f32 0.0, %v504
  %v506 = vpop.f32.mrb[0].mxu0
  %507 = vmatprep.mubr.bf16.mxu0 0
  %508 = vmatmul.mubr.bf16.gmra.mrb[0].mxu0 %v356
  %v509 = vpop.f32.mrb[0].mxu0
  %v510 = vadd.f32 0.0, %v509
  %v511 = vpop.f32.mrb[0].mxu0
  %v512 = vpop.f32.mrb[0].mxu0
  %v513 = vadd.f32 0.0, %v512
  %v514 = vpop.f32.mrb[0].mxu0
  %515 = vmatprep.mubr.bf16.mxu0 0
  %516 = vmatmul.mubr.bf16.gmra.mrb[0].mxu0 %v357
  %v517 = vpop.f32.mrb[0].mxu0
  %v518 = vadd.f32 0.0, %v517
  %v519 = vpop.f32.mrb[0].mxu0
  %v520 = vpop.f32.mrb[0].mxu0
  %v521 = vadd.f32 0.0, %v520
  %v522 = vpop.f32.mrb[0].mxu0
  %523 = vmatprep.mubr.bf16.mxu0 0
  %524 = vmatmul.mubr.bf16.gmra.mrb[0].mxu0 %v358
  %v525 = vpop.f32.mrb[0].mxu0
  %v526 = vadd.f32 0.0, %v525
  %v527 = vpop.f32.mrb[0].mxu0
  %v528 = vpop.f32.mrb[0].mxu0
  %v529 = vadd.f32 0.0, %v528
  %v530 = vpop.f32.mrb[0].mxu0
  %531 = vmatprep.mubr.bf16.mxu0 0
  %532 = vmatmul.mubr.bf16.gmra.mrb[0].mxu0 %v359
  %v533 = vpop.f32.mrb[0].mxu0
  %v534 = vadd.f32 0.0, %v533
  %v535 = vpop.f32.mrb[0].mxu0
  %v536 = vpop.f32.mrb[0].mxu0
  %v537 = vadd.f32 0.0, %v536
  %v538 = vpop.f32.mrb[0].mxu0
  %539 = vmatprep.mubr.bf16.mxu0 0
  %540 = vmatmul.mubr.bf16.gmra.mrb[0].mxu0 %v360
  %v541 = vpop.f32.mrb[0].mxu0
  %v542 = vadd.f32 0.0, %v541
  %v543 = vpop.f32.mrb[0].mxu0
  %v544 = vpop.f32.mrb[0].mxu0
  %v545 = vadd.f32 0.0, %v544
  %v546 = vpop.f32.mrb[0].mxu0
  %547 = vmatprep.mubr.bf16.mxu0 0
  %548 = vmatmul.mubr.bf16.gmra.mrb[0].mxu0 %v361
  %v549 = vpop.f32.mrb[0].mxu0
  %v550 = vadd.f32 0.0, %v549
  %v551 = vpop.f32.mrb[0].mxu0
  %v552 = vpop.f32.mrb[0].mxu0
  %v553 = vadd.f32 0.0, %v552
  %v554 = vpop.f32.mrb[0].mxu0
  %555 = vmatprep.mubr.bf16.mxu0 0
  %556 = vmatmul.mubr.bf16.gmra.mrb[0].mxu0 %v362
  %v557 = vpop.f32.mrb[0].mxu0
  %v558 = vadd.f32 0.0, %v557
  %v559 = vpop.f32.mrb[0].mxu0
  %v560 = vpop.f32.mrb[0].mxu0
  %v561 = vadd.f32 0.0, %v560
  %v562 = vpop.f32.mrb[0].mxu0
  %563 = vmatprep.mubr.bf16.mxu0 0
  %564 = vmatmul.mubr.bf16.gmra.mrb[0].mxu0 %v363
  %v565 = vpop.f32.mrb[0].mxu0
  %v566 = vadd.f32 0.0, %v565
  %v567 = vpop.f32.mrb[0].mxu0
  %v568 = vpop.f32.mrb[0].mxu0
  %v569 = vadd.f32 0.0, %v568
  %v570 = vpop.f32.mrb[0].mxu0
  %571 = vmatprep.mubr.bf16.mxu0 0
  %572 = vmatmul.mubr.bf16.gmra.mrb[0].mxu0 %v364
  %v573 = vpop.f32.mrb[0].mxu0
  %v574 = vadd.f32 0.0, %v573
  %v575 = vpop.f32.mrb[0].mxu0
  %v576 = vpop.f32.mrb[0].mxu0
  %v577 = vadd.f32 0.0, %v576
  %v578 = vpop.f32.mrb[0].mxu0
  %579 = vmatprep.mubr.bf16.mxu0 0
  %580 = vmatmul.mubr.bf16.gmra.mrb[0].mxu0 %v365
  %v581 = vpop.f32.mrb[0].mxu0
  %v582 = vadd.f32 0.0, %v581
  %v583 = vpop.f32.mrb[0].mxu0
  %v584 = vpop.f32.mrb[0].mxu0
  %v585 = vadd.f32 0.0, %v584
  %v586 = vpop.f32.mrb[0].mxu0
  %587 = vmatprep.mubr.bf16.mxu0 0
  %588 = vmatmul.mubr.bf16.gmra.mrb[0].mxu0 %v366
  %v589 = vpop.f32.mrb[0].mxu0
  %v590 = vadd.f32 0.0, %v589
  %v591 = vpop.f32.mrb[0].mxu0
  %v592 = vpop.f32.mrb[0].mxu0
  %v593 = vadd.f32 0.0, %v592
  %v594 = vpop.f32.mrb[0].mxu0
  %595 = vmatprep.mubr.bf16.mxu0 0
  %596 = vmatmul.mubr.bf16.gmra.mrb[0].mxu0 %v367
  %v597 = vpop.f32.mrb[0].mxu0
  %v598 = vadd.f32 0.0, %v597
  %v599 = vpop.f32.mrb[0].mxu0
  %v600 = vpop.f32.mrb[0].mxu0
  %v601 = vadd.f32 0.0, %v600
  %v602 = vpop.f32.mrb[0].mxu0
  %603 = vmatprep.mubr.bf16.mxu0 0
  %604 = vmatmul.mubr.bf16.gmra.mrb[0].mxu0 %v368
  %v605 = vpop.f32.mrb[0].mxu0
  %v606 = vadd.f32 0.0, %v605
  %v607 = vpop.f32.mrb[0].mxu0
  %v608 = vpop.f32.mrb[0].mxu0
  %v609 = vadd.f32 0.0, %v608
  %v610 = vpop.f32.mrb[0].mxu0
  %611 = vmatprep.mubr.bf16.mxu0 0
  %612 = vmatmul.mubr.bf16.gmra.mrb[0].mxu0 %v369
  %v613 = vpop.f32.mrb[0].mxu0
  %v614 = vadd.f32 0.0, %v613
  %v615 = vpop.f32.mrb[0].mxu0
  %v616 = vpop.f32.mrb[0].mxu0
  %v617 = vadd.f32 0.0, %v616
  %v618 = vpop.f32.mrb[0].mxu0
  %619 = vmatprep.mubr.bf16.mxu0 0
  %620 = vmatmul.mubr.bf16.gmra.mrb[0].mxu0 %v370
  %v621 = vpop.f32.mrb[0].mxu0
  %v622 = vadd.f32 0.0, %v621
  %v623 = vpop.f32.mrb[0].mxu0
  %v624 = vpop.f32.mrb[0].mxu0
  %v625 = vadd.f32 0.0, %v624
  %v626 = vpop.f32.mrb[0].mxu0
  %627 = vmatprep.mubr.bf16.mxu0 0
  %628 = vmatmul.mubr.bf16.gmra.mrb[0].mxu0 %v371
  %v629 = vpop.f32.mrb[0].mxu0
  %v630 = vadd.f32 0.0, %v629
  %v631 = vpop.f32.mrb[0].mxu0
  %v632 = vpop.f32.mrb[0].mxu0
  %v633 = vadd.f32 0.0, %v632
  %v634 = vpop.f32.mrb[0].mxu0
  %635 = vmatprep.mubr.bf16.mxu0 0
  %636 = vmatmul.mubr.bf16.gmra.mrb[0].mxu0 %v372
  %v637 = vpop.f32.mrb[0].mxu0
  %v638 = vadd.f32 0.0, %v637
  %v639 = vpop.f32.mrb[0].mxu0
  %v640 = vpop.f32.mrb[0].mxu0
  %v641 = vadd.f32 0.0, %v640
  %v642 = vpop.f32.mrb[0].mxu0
  %643 = vmatprep.mubr.bf16.mxu0 0
  %644 = vmatmul.mubr.bf16.gmra.mrb[0].mxu0 %v373
  %v645 = vpop.f32.mrb[0].mxu0
  %v646 = vadd.f32 0.0, %v645
  %v647 = vpop.f32.mrb[0].mxu0
  %v648 = vpop.f32.mrb[0].mxu0
  %v649 = vadd.f32 0.0, %v648
  %v650 = vpop.f32.mrb[0].mxu0
  %651 = vmatprep.mubr.bf16.mxu0 0
  %652 = vmatmul.mubr.bf16.gmra.mrb[0].mxu0 %v374
  %v653 = vpop.f32.mrb[0].mxu0
  %v654 = vadd.f32 0.0, %v653
  %v655 = vpop.f32.mrb[0].mxu0
  %v656 = vpop.f32.mrb[0].mxu0
  %v657 = vadd.f32 0.0, %v656
  %v658 = vpop.f32.mrb[0].mxu0
  %659 = vmatprep.mubr.bf16.mxu0 0
  %660 = vmatmul.mubr.bf16.gmra.mrb[0].mxu0 %v375
  %v661 = vpop.f32.mrb[0].mxu0
  %v662 = vadd.f32 0.0, %v661
  %v663 = vpop.f32.mrb[0].mxu0
  %v664 = vpop.f32.mrb[0].mxu0
  %v665 = vadd.f32 0.0, %v664
  %v666 = vpop.f32.mrb[0].mxu0
  %667 = vmatprep.mubr.bf16.mxu0 0
  %668 = vmatmul.mubr.bf16.gmra.mrb[0].mxu0 %v376
  %v669 = vpop.f32.mrb[0].mxu0
  %v670 = vadd.f32 0.0, %v669
  %v671 = vpop.f32.mrb[0].mxu0
  %v672 = vpop.f32.mrb[0].mxu0
  %v673 = vadd.f32 0.0, %v672
  %v674 = vpop.f32.mrb[0].mxu0
  %675 = vmatprep.mubr.bf16.mxu0 0
  %676 = vmatmul.mubr.bf16.gmra.mrb[0].mxu0 %v377
  %v677 = vpop.f32.mrb[0].mxu0
  %v678 = vadd.f32 0.0, %v677
  %v679 = vpop.f32.mrb[0].mxu0
  %v680 = vpop.f32.mrb[0].mxu0
  %v681 = vadd.f32 0.0, %v680
  %v682 = vpop.f32.mrb[0].mxu0
  %683 = vmatprep.mubr.bf16.mxu0 0
  %684 = vmatmul.mubr.bf16.gmra.mrb[0].mxu0 %v378
  %v685 = vpop.f32.mrb[0].mxu0
  %v686 = vadd.f32 0.0, %v685
  %v687 = vpop.f32.mrb[0].mxu0
  %v688 = vpop.f32.mrb[0].mxu0
  %v689 = vadd.f32 0.0, %v688
  %v690 = vpop.f32.mrb[0].mxu0
  %691 = vmatprep.mubr.bf16.mxu0 0
  %692 = vmatmul.mubr.bf16.gmra.mrb[0].mxu0 %v379
  %v693 = vpop.f32.mrb[0].mxu0
  %v694 = vadd.f32 0.0, %v693
  %v695 = vpop.f32.mrb[0].mxu0
  %v696 = vpop.f32.mrb[0].mxu0
  %v697 = vadd.f32 0.0, %v696
  %v698 = vpop.f32.mrb[0].mxu0
  %699 = vmatprep.mubr.bf16.mxu0 0
  %700 = vmatmul.mubr.bf16.gmra.mrb[0].mxu0 %v380
  %v701 = vpop.f32.mrb[0].mxu0
  %v702 = vadd.f32 0.0, %v701
  %v703 = vpop.f32.mrb[0].mxu0
  %v704 = vpop.f32.mrb[0].mxu0
  %v705 = vadd.f32 0.0, %v704
  %v706 = vpop.f32.mrb[0].mxu0
  %707 = vmatprep.mubr.bf16.mxu0 0
  %708 = vmatmul.mubr.bf16.gmra.mrb[0].mxu0 %v381
  %v709 = vpop.f32.mrb[0].mxu0
  %v710 = vadd.f32 0.0, %v709
  %v711 = vpop.f32.mrb[0].mxu0
  %v712 = vpop.f32.mrb[0].mxu0
  %v713 = vadd.f32 0.0, %v712
  %v714 = vpop.f32.mrb[0].mxu0
  %715 = vmatprep.mubr.bf16.mxu0 0
  %716 = vmatmul.mubr.bf16.gmra.mrb[0].mxu0 %v382
  %v717 = vpop.f32.mrb[0].mxu0
  %v718 = vadd.f32 0.0, %v717
  %v719 = vpop.f32.mrb[0].mxu0
  %v720 = vpop.f32.mrb[0].mxu0
  %v721 = vadd.f32 0.0, %v720
  %v722 = vpop.f32.mrb[0].mxu0
  %723 = vmatprep.mubr.bf16.mxu0 0
  %724 = vmatmul.mubr.bf16.gmra.mrb[0].mxu0 %v383
  %v725 = vpop.f32.mrb[0].mxu0
  %v726 = vadd.f32 0.0, %v725
  %v727 = vpop.f32.mrb[0].mxu0
  %v728 = vpop.f32.mrb[0].mxu0
  %v729 = vadd.f32 0.0, %v728
  %v730 = vpop.f32.mrb[0].mxu0
  %731 = vmatprep.mubr.bf16.mxu0 0
  %732 = vmatmul.mubr.bf16.gmra.mrb[0].mxu0 %v384
  %v733 = vpop.f32.mrb[0].mxu0
  %v734 = vadd.f32 0.0, %v733
  %v735 = vpop.f32.mrb[0].mxu0
  %v736 = vpop.f32.mrb[0].mxu0
  %v737 = vadd.f32 0.0, %v736
  %v738 = vpop.f32.mrb[0].mxu0
  %739 = vmatprep.mubr.bf16.mxu0 0
  %740 = vmatmul.mubr.bf16.gmra.mrb[0].mxu0 %v385
  %v741 = vpop.f32.mrb[0].mxu0
  %v742 = vadd.f32 0.0, %v741
  %v743 = vpop.f32.mrb[0].mxu0
  %v744 = vpop.f32.mrb[0].mxu0
  %v745 = vadd.f32 0.0, %v744
  %v746 = vpop.f32.mrb[0].mxu0
  %747 = vmatprep.mubr.bf16.mxu0 0
  %748 = vmatmul.mubr.bf16.gmra.mrb[0].mxu0 %v386
  %v749 = vpop.f32.mrb[0].mxu0
  %v750 = vadd.f32 0.0, %v749
  %v751 = vpop.f32.mrb[0].mxu0
  %v752 = vpop.f32.mrb[0].mxu0
  %v753 = vadd.f32 0.0, %v752
  %v754 = vpop.f32.mrb[0].mxu0
  %755 = vdwg.mxu0
  %v756 = vadd.f32 %v83, %v502
  %v757 = vadd.f32 %v84, %v505
  %v758 = vadd.f32 %v85, %v510
  %v759 = vadd.f32 %v86, %v513
  %v760 = vadd.f32 %v87, %v518
  %v761 = vadd.f32 %v88, %v521
  %v762 = vadd.f32 %v89, %v526
  %v763 = vadd.f32 %v90, %v529
  %v764 = vadd.f32 %v91, %v534
  %v765 = vadd.f32 %v92, %v537
  %v766 = vadd.f32 %v93, %v542
  %v767 = vadd.f32 %v94, %v545
  %v768 = vadd.f32 %v95, %v550
  %v769 = vadd.f32 %v96, %v553
  %v770 = vadd.f32 %v97, %v558
  %v771 = vadd.f32 %v98, %v561
  %v772 = vadd.f32 %v99, %v566
  %v773 = vadd.f32 %v100, %v569
  %v774 = vadd.f32 %v101, %v574
  %v775 = vadd.f32 %v102, %v577
  %v776 = vadd.f32 %v103, %v582
  %v777 = vadd.f32 %v104, %v585
  %v778 = vadd.f32 %v105, %v590
  %v779 = vadd.f32 %v106, %v593
  %v780 = vadd.f32 %v107, %v598
  %v781 = vadd.f32 %v108, %v601
  %v782 = vadd.f32 %v109, %v606
  %v783 = vadd.f32 %v110, %v609
  %v784 = vadd.f32 %v111, %v614
  %v785 = vadd.f32 %v112, %v617
  %v786 = vadd.f32 %v113, %v622
  %v787 = vadd.f32 %v114, %v625
  %v788 = vadd.f32 %v115, %v630
  %v789 = vadd.f32 %v116, %v633
  %v790 = vadd.f32 %v117, %v638
  %v791 = vadd.f32 %v118, %v641
  %v792 = vadd.f32 %v119, %v646
  %v793 = vadd.f32 %v120, %v649
  %v794 = vadd.f32 %v121, %v654
  %v795 = vadd.f32 %v122, %v657
  %v796 = vadd.f32 %v123, %v662
  %v797 = vadd.f32 %v124, %v665
  %v798 = vadd.f32 %v125, %v670
  %v799 = vadd.f32 %v126, %v673
  %v800 = vadd.f32 %v127, %v678
  %v801 = vadd.f32 %v128, %v681
  %v802 = vadd.f32 %v129, %v686
  %v803 = vadd.f32 %v130, %v689
  %v804 = vadd.f32 %v131, %v694
  %v805 = vadd.f32 %v132, %v697
  %v806 = vadd.f32 %v133, %v702
  %v807 = vadd.f32 %v134, %v705
  %v808 = vadd.f32 %v135, %v710
  %v809 = vadd.f32 %v136, %v713
  %v810 = vadd.f32 %v137, %v718
  %v811 = vadd.f32 %v138, %v721
  %v812 = vadd.f32 %v139, %v726
  %v813 = vadd.f32 %v140, %v729
  %v814 = vadd.f32 %v141, %v734
  %v815 = vadd.f32 %v142, %v737
  %v816 = vadd.f32 %v143, %v742
  %v817 = vadd.f32 %v144, %v745
  %v818 = vadd.f32 %v145, %v750
  %v819 = vadd.f32 %v146, %v753
  %820 = vst [vmem:[#allocation2] sm:$0xff] %v756
  %821 = vst [vmem:[#allocation2 + $0x8] sm:$0xff] %v757
  %822 = vst [vmem:[#allocation2 + $0x10] sm:$0xff] %v758
  %823 = vst [vmem:[#allocation2 + $0x18] sm:$0xff] %v759
  %824 = vst [vmem:[#allocation2 + $0x20] sm:$0xff] %v760
  %825 = vst [vmem:[#allocation2 + $0x28] sm:$0xff] %v761
  %826 = vst [vmem:[#allocation2 + $0x30] sm:$0xff] %v762
  %827 = vst [vmem:[#allocation2 + $0x38] sm:$0xff] %v763
  %828 = vst [vmem:[#allocation2 + $0x40] sm:$0xff] %v764
  %829 = vst [vmem:[#allocation2 + $0x48] sm:$0xff] %v765
  %830 = vst [vmem:[#allocation2 + $0x50] sm:$0xff] %v766
  %831 = vst [vmem:[#allocation2 + $0x58] sm:$0xff] %v767
  %832 = vst [vmem:[#allocation2 + $0x60] sm:$0xff] %v768
  %833 = vst [vmem:[#allocation2 + $0x68] sm:$0xff] %v769
  %834 = vst [vmem:[#allocation2 + $0x70] sm:$0xff] %v770
  %835 = vst [vmem:[#allocation2 + $0x78] sm:$0xff] %v771
  %836 = vst [vmem:[#allocation2 + $0x80] sm:$0xff] %v772
  %837 = vst [vmem:[#allocation2 + $0x88] sm:$0xff] %v773
  %838 = vst [vmem:[#allocation2 + $0x90] sm:$0xff] %v774
  %839 = vst [vmem:[#allocation2 + $0x98] sm:$0xff] %v775
  %840 = vst [vmem:[#allocation2 + $0xa0] sm:$0xff] %v776
  %841 = vst [vmem:[#allocation2 + $0xa8] sm:$0xff] %v777
  %842 = vst [vmem:[#allocation2 + $0xb0] sm:$0xff] %v778
  %843 = vst [vmem:[#allocation2 + $0xb8] sm:$0xff] %v779
  %844 = vst [vmem:[#allocation2 + $0xc0] sm:$0xff] %v780
  %845 = vst [vmem:[#allocation2 + $0xc8] sm:$0xff] %v781
  %846 = vst [vmem:[#allocation2 + $0xd0] sm:$0xff] %v782
  %847 = vst [vmem:[#allocation2 + $0xd8] sm:$0xff] %v783
  %848 = vst [vmem:[#allocation2 + $0xe0] sm:$0xff] %v784
  %849 = vst [vmem:[#allocation2 + $0xe8] sm:$0xff] %v785
  %850 = vst [vmem:[#allocation2 + $0xf0] sm:$0xff] %v786
  %851 = vst [vmem:[#allocation2 + $0xf8] sm:$0xff] %v787
  %852 = vst [vmem:[#allocation2 + $0x100] sm:$0xff] %v788
  %853 = vst [vmem:[#allocation2 + $0x108] sm:$0xff] %v789
  %854 = vst [vmem:[#allocation2 + $0x110] sm:$0xff] %v790
  %855 = vst [vmem:[#allocation2 + $0x118] sm:$0xff] %v791
  %856 = vst [vmem:[#allocation2 + $0x120] sm:$0xff] %v792
  %857 = vst [vmem:[#allocation2 + $0x128] sm:$0xff] %v793
  %858 = vst [vmem:[#allocation2 + $0x130] sm:$0xff] %v794
  %859 = vst [vmem:[#allocation2 + $0x138] sm:$0xff] %v795
  %860 = vst [vmem:[#allocation2 + $0x140] sm:$0xff] %v796
  %861 = vst [vmem:[#allocation2 + $0x148] sm:$0xff] %v797
  %862 = vst [vmem:[#allocation2 + $0x150] sm:$0xff] %v798
  %863 = vst [vmem:[#allocation2 + $0x158] sm:$0xff] %v799
  %864 = vst [vmem:[#allocation2 + $0x160] sm:$0xff] %v800
  %865 = vst [vmem:[#allocation2 + $0x168] sm:$0xff] %v801
  %866 = vst [vmem:[#allocation2 + $0x170] sm:$0xff] %v802
  %867 = vst [vmem:[#allocation2 + $0x178] sm:$0xff] %v803
  %868 = vst [vmem:[#allocation2 + $0x180] sm:$0xff] %v804
  %869 = vst [vmem:[#allocation2 + $0x188] sm:$0xff] %v805
  %870 = vst [vmem:[#allocation2 + $0x190] sm:$0xff] %v806
  %871 = vst [vmem:[#allocation2 + $0x198] sm:$0xff] %v807
  %872 = vst [vmem:[#allocation2 + $0x1a0] sm:$0xff] %v808
  %873 = vst [vmem:[#allocation2 + $0x1a8] sm:$0xff] %v809
  %874 = vst [vmem:[#allocation2 + $0x1b0] sm:$0xff] %v810
  %875 = vst [vmem:[#allocation2 + $0x1b8] sm:$0xff] %v811
  %876 = vst [vmem:[#allocation2 + $0x1c0] sm:$0xff] %v812
  %877 = vst [vmem:[#allocation2 + $0x1c8] sm:$0xff] %v813
  %878 = vst [vmem:[#allocation2 + $0x1d0] sm:$0xff] %v814
  %879 = vst [vmem:[#allocation2 + $0x1d8] sm:$0xff] %v815
  %880 = vst [vmem:[#allocation2 + $0x1e0] sm:$0xff] %v816
  %881 = vst [vmem:[#allocation2 + $0x1e8] sm:$0xff] %v817
  %882 = vst [vmem:[#allocation2 + $0x1f0] sm:$0xff] %v818
  %883 = vst [vmem:[#allocation2 + $0x1f8] sm:$0xff] %v819
  // Predicated region
  $region18: #{_lambda_.9} parent=0 // pred_check
    %p884 = pneg %p15
  $region19: #{_lambda_.9} parent=0 // pred_check_branch
    %886 = sbr.rel (%p884) target = $region21
  $region20: #{_lambda_.9} parent=0 // pred_region
    %v887 = vld [vmem:[#allocation2] sm:$0xff]
    %v888 = vld [vmem:[#allocation2 + $0x8] sm:$0xff]
    %v889 = vld [vmem:[#allocation2 + $0x10] sm:$0xff]
    %v890 = vld [vmem:[#allocation2 + $0x18] sm:$0xff]
    %v891 = vld [vmem:[#allocation2 + $0x20] sm:$0xff]
    %v892 = vld [vmem:[#allocation2 + $0x28] sm:$0xff]
    %v893 = vld [vmem:[#allocation2 + $0x30] sm:$0xff]
    %v894 = vld [vmem:[#allocation2 + $0x38] sm:$0xff]
    %v895 = vld [vmem:[#allocation2 + $0x40] sm:$0xff]
    %v896 = vld [vmem:[#allocation2 + $0x48] sm:$0xff]
    %v897 = vld [vmem:[#allocation2 + $0x50] sm:$0xff]
    %v898 = vld [vmem:[#allocation2 + $0x58] sm:$0xff]
    %v899 = vld [vmem:[#allocation2 + $0x60] sm:$0xff]
    %v900 = vld [vmem:[#allocation2 + $0x68] sm:$0xff]
    %v901 = vld [vmem:[#allocation2 + $0x70] sm:$0xff]
    %v902 = vld [vmem:[#allocation2 + $0x78] sm:$0xff]
    %v903 = vld [vmem:[#allocation2 + $0x80] sm:$0xff]
    %v904 = vld [vmem:[#allocation2 + $0x88] sm:$0xff]
    %v905 = vld [vmem:[#allocation2 + $0x90] sm:$0xff]
    %v906 = vld [vmem:[#allocation2 + $0x98] sm:$0xff]
    %v907 = vld [vmem:[#allocation2 + $0xa0] sm:$0xff]
    %v908 = vld [vmem:[#allocation2 + $0xa8] sm:$0xff]
    %v909 = vld [vmem:[#allocation2 + $0xb0] sm:$0xff]
    %v910 = vld [vmem:[#allocation2 + $0xb8] sm:$0xff]
    %v911 = vld [vmem:[#allocation2 + $0xc0] sm:$0xff]
    %v912 = vld [vmem:[#allocation2 + $0xc8] sm:$0xff]
    %v913 = vld [vmem:[#allocation2 + $0xd0] sm:$0xff]
    %v914 = vld [vmem:[#allocation2 + $0xd8] sm:$0xff]
    %v915 = vld [vmem:[#allocation2 + $0xe0] sm:$0xff]
    %v916 = vld [vmem:[#allocation2 + $0xe8] sm:$0xff]
    %v917 = vld [vmem:[#allocation2 + $0xf0] sm:$0xff]
    %v918 = vld [vmem:[#allocation2 + $0xf8] sm:$0xff]
    %v919 = vld [vmem:[#allocation2 + $0x100] sm:$0xff]
    %v920 = vld [vmem:[#allocation2 + $0x108] sm:$0xff]
    %v921 = vld [vmem:[#allocation2 + $0x110] sm:$0xff]
    %v922 = vld [vmem:[#allocation2 + $0x118] sm:$0xff]
    %v923 = vld [vmem:[#allocation2 + $0x120] sm:$0xff]
    %v924 = vld [vmem:[#allocation2 + $0x128] sm:$0xff]
    %v925 = vld [vmem:[#allocation2 + $0x130] sm:$0xff]
    %v926 = vld [vmem:[#allocation2 + $0x138] sm:$0xff]
    %v927 = vld [vmem:[#allocation2 + $0x140] sm:$0xff]
    %v928 = vld [vmem:[#allocation2 + $0x148] sm:$0xff]
    %v929 = vld [vmem:[#allocation2 + $0x150] sm:$0xff]
    %v930 = vld [vmem:[#allocation2 + $0x158] sm:$0xff]
    %v931 = vld [vmem:[#allocation2 + $0x160] sm:$0xff]
    %v932 = vld [vmem:[#allocation2 + $0x168] sm:$0xff]
    %v933 = vld [vmem:[#allocation2 + $0x170] sm:$0xff]
    %v934 = vld [vmem:[#allocation2 + $0x178] sm:$0xff]
    %v935 = vld [vmem:[#allocation2 + $0x180] sm:$0xff]
    %v936 = vld [vmem:[#allocation2 + $0x188] sm:$0xff]
    %v937 = vld [vmem:[#allocation2 + $0x190] sm:$0xff]
    %v938 = vld [vmem:[#allocation2 + $0x198] sm:$0xff]
    %v939 = vld [vmem:[#allocation2 + $0x1a0] sm:$0xff]
    %v940 = vld [vmem:[#allocation2 + $0x1a8] sm:$0xff]
    %v941 = vld [vmem:[#allocation2 + $0x1b0] sm:$0xff]
    %v942 = vld [vmem:[#allocation2 + $0x1b8] sm:$0xff]
    %v943 = vld [vmem:[#allocation2 + $0x1c0] sm:$0xff]
    %v944 = vld [vmem:[#allocation2 + $0x1c8] sm:$0xff]
    %v945 = vld [vmem:[#allocation2 + $0x1d0] sm:$0xff]
    %v946 = vld [vmem:[#allocation2 + $0x1d8] sm:$0xff]
    %v947 = vld [vmem:[#allocation2 + $0x1e0] sm:$0xff]
    %v948 = vld [vmem:[#allocation2 + $0x1e8] sm:$0xff]
    %v949 = vld [vmem:[#allocation2 + $0x1f0] sm:$0xff]
    %v950 = vld [vmem:[#allocation2 + $0x1f8] sm:$0xff]
    %v951 = vld [vmem:[%s2] sm:$0x1]
    %v953 = vlaneseq
    %v954 = vshrl.u32 %v953, 7
    %v955 = vsub.s32 0, %v954
    %v956 = vrot.slane %v951, %v955
    %v958 = vadd.f32 %v887, %v956
    %v959 = vadd.f32 %v888, %v956
    %v960 = vadd.f32 %v889, %v956
    %v961 = vadd.f32 %v890, %v956
    %v962 = vadd.f32 %v891, %v956
    %v963 = vadd.f32 %v892, %v956
    %v964 = vadd.f32 %v893, %v956
    %v965 = vadd.f32 %v894, %v956
    %v966 = vadd.f32 %v895, %v956
    %v967 = vadd.f32 %v896, %v956
    %v968 = vadd.f32 %v897, %v956
    %v969 = vadd.f32 %v898, %v956
    %v970 = vadd.f32 %v899, %v956
    %v971 = vadd.f32 %v900, %v956
    %v972 = vadd.f32 %v901, %v956
    %v973 = vadd.f32 %v902, %v956
    %v974 = vadd.f32 %v903, %v956
    %v975 = vadd.f32 %v904, %v956
    %v976 = vadd.f32 %v905, %v956
    %v977 = vadd.f32 %v906, %v956
    %v978 = vadd.f32 %v907, %v956
    %v979 = vadd.f32 %v908, %v956
    %v980 = vadd.f32 %v909, %v956
    %v981 = vadd.f32 %v910, %v956
    %v982 = vadd.f32 %v911, %v956
    %v983 = vadd.f32 %v912, %v956
    %v984 = vadd.f32 %v913, %v956
    %v985 = vadd.f32 %v914, %v956
    %v986 = vadd.f32 %v915, %v956
    %v987 = vadd.f32 %v916, %v956
    %v988 = vadd.f32 %v917, %v956
    %v989 = vadd.f32 %v918, %v956
    %v990 = vadd.f32 %v919, %v956
    %v991 = vadd.f32 %v920, %v956
    %v992 = vadd.f32 %v921, %v956
    %v993 = vadd.f32 %v922, %v956
    %v994 = vadd.f32 %v923, %v956
    %v995 = vadd.f32 %v924, %v956
    %v996 = vadd.f32 %v925, %v956
    %v997 = vadd.f32 %v926, %v956
    %v998 = vadd.f32 %v927, %v956
    %v999 = vadd.f32 %v928, %v956
    %v1000 = vadd.f32 %v929, %v956
    %v1001 = vadd.f32 %v930, %v956
    %v1002 = vadd.f32 %v931, %v956
    %v1003 = vadd.f32 %v932, %v956
    %v1004 = vadd.f32 %v933, %v956
    %v1005 = vadd.f32 %v934, %v956
    %v1006 = vadd.f32 %v935, %v956
    %v1007 = vadd.f32 %v936, %v956
    %v1008 = vadd.f32 %v937, %v956
    %v1009 = vadd.f32 %v938, %v956
    %v1010 = vadd.f32 %v939, %v956
    %v1011 = vadd.f32 %v940, %v956
    %v1012 = vadd.f32 %v941, %v956
    %v1013 = vadd.f32 %v942, %v956
    %v1014 = vadd.f32 %v943, %v956
    %v1015 = vadd.f32 %v944, %v956
    %v1016 = vadd.f32 %v945, %v956
    %v1017 = vadd.f32 %v946, %v956
    %v1018 = vadd.f32 %v947, %v956
    %v1019 = vadd.f32 %v948, %v956
    %v1020 = vadd.f32 %v949, %v956
    %v1021 = vadd.f32 %v950, %v956
    %vm1022 = vcmp.ge.f32.partialorder %v958, 0.0
    %vm1023 = vcmp.ge.f32.partialorder %v959, 0.0
    %vm1024 = vcmp.ge.f32.partialorder %v960, 0.0
    %vm1025 = vcmp.ge.f32.partialorder %v961, 0.0
    %vm1026 = vcmp.ge.f32.partialorder %v962, 0.0
    %vm1027 = vcmp.ge.f32.partialorder %v963, 0.0
    %vm1028 = vcmp.ge.f32.partialorder %v964, 0.0
    %vm1029 = vcmp.ge.f32.partialorder %v965, 0.0
    %vm1030 = vcmp.ge.f32.partialorder %v966, 0.0
    %vm1031 = vcmp.ge.f32.partialorder %v967, 0.0
    %vm1032 = vcmp.ge.f32.partialorder %v968, 0.0
    %vm1033 = vcmp.ge.f32.partialorder %v969, 0.0
    %vm1034 = vcmp.ge.f32.partialorder %v970, 0.0
    %vm1035 = vcmp.ge.f32.partialorder %v971, 0.0
    %vm1036 = vcmp.ge.f32.partialorder %v972, 0.0
    %vm1037 = vcmp.ge.f32.partialorder %v973, 0.0
    %vm1038 = vcmp.ge.f32.partialorder %v974, 0.0
    %vm1039 = vcmp.ge.f32.partialorder %v975, 0.0
    %vm1040 = vcmp.ge.f32.partialorder %v976, 0.0
    %vm1041 = vcmp.ge.f32.partialorder %v977, 0.0
    %vm1042 = vcmp.ge.f32.partialorder %v978, 0.0
    %vm1043 = vcmp.ge.f32.partialorder %v979, 0.0
    %vm1044 = vcmp.ge.f32.partialorder %v980, 0.0
    %vm1045 = vcmp.ge.f32.partialorder %v981, 0.0
    %vm1046 = vcmp.ge.f32.partialorder %v982, 0.0
    %vm1047 = vcmp.ge.f32.partialorder %v983, 0.0
    %vm1048 = vcmp.ge.f32.partialorder %v984, 0.0
    %vm1049 = vcmp.ge.f32.partialorder %v985, 0.0
    %vm1050 = vcmp.ge.f32.partialorder %v986, 0.0
    %vm1051 = vcmp.ge.f32.partialorder %v987, 0.0
    %vm1052 = vcmp.ge.f32.partialorder %v988, 0.0
    %vm1053 = vcmp.ge.f32.partialorder %v989, 0.0
    %vm1054 = vcmp.ge.f32.partialorder %v990, 0.0
    %vm1055 = vcmp.ge.f32.partialorder %v991, 0.0
    %vm1056 = vcmp.ge.f32.partialorder %v992, 0.0
    %vm1057 = vcmp.ge.f32.partialorder %v993, 0.0
    %vm1058 = vcmp.ge.f32.partialorder %v994, 0.0
    %vm1059 = vcmp.ge.f32.partialorder %v995, 0.0
    %vm1060 = vcmp.ge.f32.partialorder %v996, 0.0
    %vm1061 = vcmp.ge.f32.partialorder %v997, 0.0
    %vm1062 = vcmp.ge.f32.partialorder %v998, 0.0
    %vm1063 = vcmp.ge.f32.partialorder %v999, 0.0
    %vm1064 = vcmp.ge.f32.partialorder %v1000, 0.0
    %vm1065 = vcmp.ge.f32.partialorder %v1001, 0.0
    %vm1066 = vcmp.ge.f32.partialorder %v1002, 0.0
    %vm1067 = vcmp.ge.f32.partialorder %v1003, 0.0
    %vm1068 = vcmp.ge.f32.partialorder %v1004, 0.0
    %vm1069 = vcmp.ge.f32.partialorder %v1005, 0.0
    %vm1070 = vcmp.ge.f32.partialorder %v1006, 0.0
    %vm1071 = vcmp.ge.f32.partialorder %v1007, 0.0
    %vm1072 = vcmp.ge.f32.partialorder %v1008, 0.0
    %vm1073 = vcmp.ge.f32.partialorder %v1009, 0.0
    %vm1074 = vcmp.ge.f32.partialorder %v1010, 0.0
    %vm1075 = vcmp.ge.f32.partialorder %v1011, 0.0
    %vm1076 = vcmp.ge.f32.partialorder %v1012, 0.0
    %vm1077 = vcmp.ge.f32.partialorder %v1013, 0.0
    %vm1078 = vcmp.ge.f32.partialorder %v1014, 0.0
    %vm1079 = vcmp.ge.f32.partialorder %v1015, 0.0
    %vm1080 = vcmp.ge.f32.partialorder %v1016, 0.0
    %vm1081 = vcmp.ge.f32.partialorder %v1017, 0.0
    %vm1082 = vcmp.ge.f32.partialorder %v1018, 0.0
    %vm1083 = vcmp.ge.f32.partialorder %v1019, 0.0
    %vm1084 = vcmp.ge.f32.partialorder %v1020, 0.0
    %vm1085 = vcmp.ge.f32.partialorder %v1021, 0.0
    %v1086 = vmul.f32 %v958, 0.2
    %v1087 = vmul.f32 %v959, 0.2
    %v1088 = vmul.f32 %v960, 0.2
    %v1089 = vmul.f32 %v961, 0.2
    %v1090 = vmul.f32 %v962, 0.2
    %v1091 = vmul.f32 %v963, 0.2
    %v1092 = vmul.f32 %v964, 0.2
    %v1093 = vmul.f32 %v965, 0.2
    %v1094 = vmul.f32 %v966, 0.2
    %v1095 = vmul.f32 %v967, 0.2
    %v1096 = vmul.f32 %v968, 0.2
    %v1097 = vmul.f32 %v969, 0.2
    %v1098 = vmul.f32 %v970, 0.2
    %v1099 = vmul.f32 %v971, 0.2
    %v1100 = vmul.f32 %v972, 0.2
    %v1101 = vmul.f32 %v973, 0.2
    %v1102 = vmul.f32 %v974, 0.2
    %v1103 = vmul.f32 %v975, 0.2
    %v1104 = vmul.f32 %v976, 0.2
    %v1105 = vmul.f32 %v977, 0.2
    %v1106 = vmul.f32 %v978, 0.2
    %v1107 = vmul.f32 %v979, 0.2
    %v1108 = vmul.f32 %v980, 0.2
    %v1109 = vmul.f32 %v981, 0.2
    %v1110 = vmul.f32 %v982, 0.2
    %v1111 = vmul.f32 %v983, 0.2
    %v1112 = vmul.f32 %v984, 0.2
    %v1113 = vmul.f32 %v985, 0.2
    %v1114 = vmul.f32 %v986, 0.2
    %v1115 = vmul.f32 %v987, 0.2
    %v1116 = vmul.f32 %v988, 0.2
    %v1117 = vmul.f32 %v989, 0.2
    %v1118 = vmul.f32 %v990, 0.2
    %v1119 = vmul.f32 %v991, 0.2
    %v1120 = vmul.f32 %v992, 0.2
    %v1121 = vmul.f32 %v993, 0.2
    %v1122 = vmul.f32 %v994, 0.2
    %v1123 = vmul.f32 %v995, 0.2
    %v1124 = vmul.f32 %v996, 0.2
    %v1125 = vmul.f32 %v997, 0.2
    %v1126 = vmul.f32 %v998, 0.2
    %v1127 = vmul.f32 %v999, 0.2
    %v1128 = vmul.f32 %v1000, 0.2
    %v1129 = vmul.f32 %v1001, 0.2
    %v1130 = vmul.f32 %v1002, 0.2
    %v1131 = vmul.f32 %v1003, 0.2
    %v1132 = vmul.f32 %v1004, 0.2
    %v1133 = vmul.f32 %v1005, 0.2
    %v1134 = vmul.f32 %v1006, 0.2
    %v1135 = vmul.f32 %v1007, 0.2
    %v1136 = vmul.f32 %v1008, 0.2
    %v1137 = vmul.f32 %v1009, 0.2
    %v1138 = vmul.f32 %v1010, 0.2
    %v1139 = vmul.f32 %v1011, 0.2
    %v1140 = vmul.f32 %v1012, 0.2
    %v1141 = vmul.f32 %v1013, 0.2
    %v1142 = vmul.f32 %v1014, 0.2
    %v1143 = vmul.f32 %v1015, 0.2
    %v1144 = vmul.f32 %v1016, 0.2
    %v1145 = vmul.f32 %v1017, 0.2
    %v1146 = vmul.f32 %v1018, 0.2
    %v1147 = vmul.f32 %v1019, 0.2
    %v1148 = vmul.f32 %v1020, 0.2
    %v1149 = vmul.f32 %v1021, 0.2
    %v1150 = vsel %vm1022, %v958, %v1086
    %v1151 = vsel %vm1023, %v959, %v1087
    %v1152 = vsel %vm1024, %v960, %v1088
    %v1153 = vsel %vm1025, %v961, %v1089
    %v1154 = vsel %vm1026, %v962, %v1090
    %v1155 = vsel %vm1027, %v963, %v1091
    %v1156 = vsel %vm1028, %v964, %v1092
    %v1157 = vsel %vm1029, %v965, %v1093
    %v1158 = vsel %vm1030, %v966, %v1094
    %v1159 = vsel %vm1031, %v967, %v1095
    %v1160 = vsel %vm1032, %v968, %v1096
    %v1161 = vsel %vm1033, %v969, %v1097
    %v1162 = vsel %vm1034, %v970, %v1098
    %v1163 = vsel %vm1035, %v971, %v1099
    %v1164 = vsel %vm1036, %v972, %v1100
    %v1165 = vsel %vm1037, %v973, %v1101
    %v1166 = vsel %vm1038, %v974, %v1102
    %v1167 = vsel %vm1039, %v975, %v1103
    %v1168 = vsel %vm1040, %v976, %v1104
    %v1169 = vsel %vm1041, %v977, %v1105
    %v1170 = vsel %vm1042, %v978, %v1106
    %v1171 = vsel %vm1043, %v979, %v1107
    %v1172 = vsel %vm1044, %v980, %v1108
    %v1173 = vsel %vm1045, %v981, %v1109
    %v1174 = vsel %vm1046, %v982, %v1110
    %v1175 = vsel %vm1047, %v983, %v1111
    %v1176 = vsel %vm1048, %v984, %v1112
    %v1177 = vsel %vm1049, %v985, %v1113
    %v1178 = vsel %vm1050, %v986, %v1114
    %v1179 = vsel %vm1051, %v987, %v1115
    %v1180 = vsel %vm1052, %v988, %v1116
    %v1181 = vsel %vm1053, %v989, %v1117
    %v1182 = vsel %vm1054, %v990, %v1118
    %v1183 = vsel %vm1055, %v991, %v1119
    %v1184 = vsel %vm1056, %v992, %v1120
    %v1185 = vsel %vm1057, %v993, %v1121
    %v1186 = vsel %vm1058, %v994, %v1122
    %v1187 = vsel %vm1059, %v995, %v1123
    %v1188 = vsel %vm1060, %v996, %v1124
    %v1189 = vsel %vm1061, %v997, %v1125
    %v1190 = vsel %vm1062, %v998, %v1126
    %v1191 = vsel %vm1063, %v999, %v1127
    %v1192 = vsel %vm1064, %v1000, %v1128
    %v1193 = vsel %vm1065, %v1001, %v1129
    %v1194 = vsel %vm1066, %v1002, %v1130
    %v1195 = vsel %vm1067, %v1003, %v1131
    %v1196 = vsel %vm1068, %v1004, %v1132
    %v1197 = vsel %vm1069, %v1005, %v1133
    %v1198 = vsel %vm1070, %v1006, %v1134
    %v1199 = vsel %vm1071, %v1007, %v1135
    %v1200 = vsel %vm1072, %v1008, %v1136
    %v1201 = vsel %vm1073, %v1009, %v1137
    %v1202 = vsel %vm1074, %v1010, %v1138
    %v1203 = vsel %vm1075, %v1011, %v1139
    %v1204 = vsel %vm1076, %v1012, %v1140
    %v1205 = vsel %vm1077, %v1013, %v1141
    %v1206 = vsel %vm1078, %v1014, %v1142
    %v1207 = vsel %vm1079, %v1015, %v1143
    %v1208 = vsel %vm1080, %v1016, %v1144
    %v1209 = vsel %vm1081, %v1017, %v1145
    %v1210 = vsel %vm1082, %v1018, %v1146
    %v1211 = vsel %vm1083, %v1019, %v1147
    %v1212 = vsel %vm1084, %v1020, %v1148
    %v1213 = vsel %vm1085, %v1021, %v1149
    %1214 = vst [vmem:[%s3] sm:$0xff] %v1150
    %1215 = vst [vmem:[%s3 + $0x8] sm:$0xff] %v1151
    %1216 = vst [vmem:[%s3 + $0x10] sm:$0xff] %v1152
    %1217 = vst [vmem:[%s3 + $0x18] sm:$0xff] %v1153
    %1218 = vst [vmem:[%s3 + $0x20] sm:$0xff] %v1154
    %1219 = vst [vmem:[%s3 + $0x28] sm:$0xff] %v1155
    %1220 = vst [vmem:[%s3 + $0x30] sm:$0xff] %v1156
    %1221 = vst [vmem:[%s3 + $0x38] sm:$0xff] %v1157
    %1222 = vst [vmem:[%s3 + $0x40] sm:$0xff] %v1158
    %1223 = vst [vmem:[%s3 + $0x48] sm:$0xff] %v1159
    %1224 = vst [vmem:[%s3 + $0x50] sm:$0xff] %v1160
    %1225 = vst [vmem:[%s3 + $0x58] sm:$0xff] %v1161
    %1226 = vst [vmem:[%s3 + $0x60] sm:$0xff] %v1162
    %1227 = vst [vmem:[%s3 + $0x68] sm:$0xff] %v1163
    %1228 = vst [vmem:[%s3 + $0x70] sm:$0xff] %v1164
    %1229 = vst [vmem:[%s3 + $0x78] sm:$0xff] %v1165
    %1230 = vst [vmem:[%s3 + $0x80] sm:$0xff] %v1166
    %1231 = vst [vmem:[%s3 + $0x88] sm:$0xff] %v1167
    %1232 = vst [vmem:[%s3 + $0x90] sm:$0xff] %v1168
    %1233 = vst [vmem:[%s3 + $0x98] sm:$0xff] %v1169
    %1234 = vst [vmem:[%s3 + $0xa0] sm:$0xff] %v1170
    %1235 = vst [vmem:[%s3 + $0xa8] sm:$0xff] %v1171
    %1236 = vst [vmem:[%s3 + $0xb0] sm:$0xff] %v1172
    %1237 = vst [vmem:[%s3 + $0xb8] sm:$0xff] %v1173
    %1238 = vst [vmem:[%s3 + $0xc0] sm:$0xff] %v1174
    %1239 = vst [vmem:[%s3 + $0xc8] sm:$0xff] %v1175
    %1240 = vst [vmem:[%s3 + $0xd0] sm:$0xff] %v1176
    %1241 = vst [vmem:[%s3 + $0xd8] sm:$0xff] %v1177
    %1242 = vst [vmem:[%s3 + $0xe0] sm:$0xff] %v1178
    %1243 = vst [vmem:[%s3 + $0xe8] sm:$0xff] %v1179
    %1244 = vst [vmem:[%s3 + $0xf0] sm:$0xff] %v1180
    %1245 = vst [vmem:[%s3 + $0xf8] sm:$0xff] %v1181
    %1246 = vst [vmem:[%s3 + $0x100] sm:$0xff] %v1182
    %1247 = vst [vmem:[%s3 + $0x108] sm:$0xff] %v1183
    %1248 = vst [vmem:[%s3 + $0x110] sm:$0xff] %v1184
    %1249 = vst [vmem:[%s3 + $0x118] sm:$0xff] %v1185
    %1250 = vst [vmem:[%s3 + $0x120] sm:$0xff] %v1186
    %1251 = vst [vmem:[%s3 + $0x128] sm:$0xff] %v1187
    %1252 = vst [vmem:[%s3 + $0x130] sm:$0xff] %v1188
    %1253 = vst [vmem:[%s3 + $0x138] sm:$0xff] %v1189
    %1254 = vst [vmem:[%s3 + $0x140] sm:$0xff] %v1190
    %1255 = vst [vmem:[%s3 + $0x148] sm:$0xff] %v1191
    %1256 = vst [vmem:[%s3 + $0x150] sm:$0xff] %v1192
    %1257 = vst [vmem:[%s3 + $0x158] sm:$0xff] %v1193
    %1258 = vst [vmem:[%s3 + $0x160] sm:$0xff] %v1194
    %1259 = vst [vmem:[%s3 + $0x168] sm:$0xff] %v1195
    %1260 = vst [vmem:[%s3 + $0x170] sm:$0xff] %v1196
    %1261 = vst [vmem:[%s3 + $0x178] sm:$0xff] %v1197
    %1262 = vst [vmem:[%s3 + $0x180] sm:$0xff] %v1198
    %1263 = vst [vmem:[%s3 + $0x188] sm:$0xff] %v1199
    %1264 = vst [vmem:[%s3 + $0x190] sm:$0xff] %v1200
    %1265 = vst [vmem:[%s3 + $0x198] sm:$0xff] %v1201
    %1266 = vst [vmem:[%s3 + $0x1a0] sm:$0xff] %v1202
    %1267 = vst [vmem:[%s3 + $0x1a8] sm:$0xff] %v1203
    %1268 = vst [vmem:[%s3 + $0x1b0] sm:$0xff] %v1204
    %1269 = vst [vmem:[%s3 + $0x1b8] sm:$0xff] %v1205
    %1270 = vst [vmem:[%s3 + $0x1c0] sm:$0xff] %v1206
    %1271 = vst [vmem:[%s3 + $0x1c8] sm:$0xff] %v1207
    %1272 = vst [vmem:[%s3 + $0x1d0] sm:$0xff] %v1208
    %1273 = vst [vmem:[%s3 + $0x1d8] sm:$0xff] %v1209
    %1274 = vst [vmem:[%s3 + $0x1e0] sm:$0xff] %v1210
    %1275 = vst [vmem:[%s3 + $0x1e8] sm:$0xff] %v1211
    %1276 = vst [vmem:[%s3 + $0x1f0] sm:$0xff] %v1212
    %1277 = vst [vmem:[%s3 + $0x1f8] sm:$0xff] %v1213
  $region21: #{_lambda_.9} parent=0 // pred_fallthru
    _
  // Predicated region
  $region22: #{_lambda_.9} parent=0 // pred_check
    _
  $region23: #{_lambda_.9} parent=0 // pred_check_branch
    %1279 = sbr.rel (0) target = $region25
  $region24: #{_lambda_.9} parent=0 // pred_region
    _
  $region25: #{_lambda_.9} parent=0 // pred_fallthru
    _
  // Predicated region
  $region26: #{_lambda_.9} parent=0 // pred_check
    _
  $region27: #{_lambda_.9} parent=0 // pred_check_branch
    %1281 = sbr.rel (0) target = $region29
  $region28: #{_lambda_.9} parent=0 // pred_region
    _
  $region29: #{_lambda_.9} parent=0 // pred_fallthru
    _

// kernel: _lambda_.10
$region0: #{_lambda_.10}
  #allocation0 [shape = 'u32[]', space=smem, size = 0x4, offset = 0x4, fixed_abs, tag = 'smem constant byte address 0x4 - core index']
  #allocation1 [shape = 'u32[144,128]{1,0:T(1,128)}', space=vmem, size = 0x12000, scoped, tag = 'internal scratch']
  #allocation2 [shape = 'f32[256,128]{1,0:T(8,128)}', space=vmem, size = 0x20000, scoped, tag = 'scratch operand']
  %s0 = inlined_call_operand.vmem [shape: bf16[256,256], index: 0, kind: input, shape index: {}]
  %s1 = inlined_call_operand.vmem [shape: bf16[256,128], index: 1, kind: input, shape index: {}]
  %s2 = inlined_call_operand.vmem [shape: f32[1,128], index: 2, kind: input, shape index: {}]
  %s3 = inlined_call_operand.vmem [shape: f32[256,128], index: 3, kind: output, shape index: {}]
  %s4 = sld [smem:[#allocation0]]
  $region30: #{_lambda_.10} parent=0
    _
  %s6 = ssub.s32 1, %s4
  %s7 = scalar_select 0, %s6, %s4
  // Predicated region
  $region2: #{_lambda_.10} parent=0 // pred_check
    _
  $region3: #{_lambda_.10} parent=0 // pred_check_branch
    %9 = sbr.rel (0) target = $region5
  $region4: #{_lambda_.10} parent=0 // pred_region
    _
  $region5: #{_lambda_.10} parent=0 // pred_fallthru
    _
  // Predicated region
  $region6: #{_lambda_.10} parent=0 // pred_check
    _
  $region7: #{_lambda_.10} parent=0 // pred_check_branch
    %11 = sbr.rel (0) target = $region9
  $region8: #{_lambda_.10} parent=0 // pred_region
    _
  $region9: #{_lambda_.10} parent=0 // pred_fallthru
    _
  // Predicated region
  $region10: #{_lambda_.10} parent=0 // pred_check
    _
  $region11: #{_lambda_.10} parent=0 // pred_check_branch
    %13 = sbr.rel (0) target = $region13
  $region12: #{_lambda_.10} parent=0 // pred_region
    _
  $region13: #{_lambda_.10} parent=0 // pred_fallthru
    _
  %p15 = scmp.eq.s32.totalorder 0, 0
  // Predicated region
  $region14: #{_lambda_.10} parent=0 // pred_check
    %p16 = pneg %p15
  $region15: #{_lambda_.10} parent=0 // pred_check_branch
    %18 = sbr.rel (%p16) target = $region17
  $region16: #{_lambda_.10} parent=0 // pred_region
    %19 = vst [vmem:[#allocation2] sm:$0xff] 0.0
    %20 = vst [vmem:[#allocation2 + $0x8] sm:$0xff] 0.0
    %21 = vst [vmem:[#allocation2 + $0x10] sm:$0xff] 0.0
    %22 = vst [vmem:[#allocation2 + $0x18] sm:$0xff] 0.0
    %23 = vst [vmem:[#allocation2 + $0x20] sm:$0xff] 0.0
    %24 = vst [vmem:[#allocation2 + $0x28] sm:$0xff] 0.0
    %25 = vst [vmem:[#allocation2 + $0x30] sm:$0xff] 0.0
    %26 = vst [vmem:[#allocation2 + $0x38] sm:$0xff] 0.0
    %27 = vst [vmem:[#allocation2 + $0x40] sm:$0xff] 0.0
    %28 = vst [vmem:[#allocation2 + $0x48] sm:$0xff] 0.0
    %29 = vst [vmem:[#allocation2 + $0x50] sm:$0xff] 0.0
    %30 = vst [vmem:[#allocation2 + $0x58] sm:$0xff] 0.0
    %31 = vst [vmem:[#allocation2 + $0x60] sm:$0xff] 0.0
    %32 = vst [vmem:[#allocation2 + $0x68] sm:$0xff] 0.0
    %33 = vst [vmem:[#allocation2 + $0x70] sm:$0xff] 0.0
    %34 = vst [vmem:[#allocation2 + $0x78] sm:$0xff] 0.0
    %35 = vst [vmem:[#allocation2 + $0x80] sm:$0xff] 0.0
    %36 = vst [vmem:[#allocation2 + $0x88] sm:$0xff] 0.0
    %37 = vst [vmem:[#allocation2 + $0x90] sm:$0xff] 0.0
    %38 = vst [vmem:[#allocation2 + $0x98] sm:$0xff] 0.0
    %39 = vst [vmem:[#allocation2 + $0xa0] sm:$0xff] 0.0
    %40 = vst [vmem:[#allocation2 + $0xa8] sm:$0xff] 0.0
    %41 = vst [vmem:[#allocation2 + $0xb0] sm:$0xff] 0.0
    %42 = vst [vmem:[#allocation2 + $0xb8] sm:$0xff] 0.0
    %43 = vst [vmem:[#allocation2 + $0xc0] sm:$0xff] 0.0
    %44 = vst [vmem:[#allocation2 + $0xc8] sm:$0xff] 0.0
    %45 = vst [vmem:[#allocation2 + $0xd0] sm:$0xff] 0.0
    %46 = vst [vmem:[#allocation2 + $0xd8] sm:$0xff] 0.0
    %47 = vst [vmem:[#allocation2 + $0xe0] sm:$0xff] 0.0
    %48 = vst [vmem:[#allocation2 + $0xe8] sm:$0xff] 0.0
    %49 = vst [vmem:[#allocation2 + $0xf0] sm:$0xff] 0.0
    %50 = vst [vmem:[#allocation2 + $0xf8] sm:$0xff] 0.0
  $region17: #{_lambda_.10} parent=0 // pred_fallthru
    _
  %v51 = vld [vmem:[#allocation2] sm:$0xff]
  %v52 = vld [vmem:[#allocation2 + $0x8] sm:$0xff]
  %v53 = vld [vmem:[#allocation2 + $0x10] sm:$0xff]
  %v54 = vld [vmem:[#allocation2 + $0x18] sm:$0xff]
  %v55 = vld [vmem:[#allocation2 + $0x20] sm:$0xff]
  %v56 = vld [vmem:[#allocation2 + $0x28] sm:$0xff]
  %v57 = vld [vmem:[#allocation2 + $0x30] sm:$0xff]
  %v58 = vld [vmem:[#allocation2 + $0x38] sm:$0xff]
  %v59 = vld [vmem:[#allocation2 + $0x40] sm:$0xff]
  %v60 = vld [vmem:[#allocation2 + $0x48] sm:$0xff]
  %v61 = vld [vmem:[#allocation2 + $0x50] sm:$0xff]
  %v62 = vld [vmem:[#allocation2 + $0x58] sm:$0xff]
  %v63 = vld [vmem:[#allocation2 + $0x60] sm:$0xff]
  %v64 = vld [vmem:[#allocation2 + $0x68] sm:$0xff]
  %v65 = vld [vmem:[#allocation2 + $0x70] sm:$0xff]
  %v66 = vld [vmem:[#allocation2 + $0x78] sm:$0xff]
  %v67 = vld [vmem:[#allocation2 + $0x80] sm:$0xff]
  %v68 = vld [vmem:[#allocation2 + $0x88] sm:$0xff]
  %v69 = vld [vmem:[#allocation2 + $0x90] sm:$0xff]
  %v70 = vld [vmem:[#allocation2 + $0x98] sm:$0xff]
  %v71 = vld [vmem:[#allocation2 + $0xa0] sm:$0xff]
  %v72 = vld [vmem:[#allocation2 + $0xa8] sm:$0xff]
  %v73 = vld [vmem:[#allocation2 + $0xb0] sm:$0xff]
  %v74 = vld [vmem:[#allocation2 + $0xb8] sm:$0xff]
  %v75 = vld [vmem:[#allocation2 + $0xc0] sm:$0xff]
  %v76 = vld [vmem:[#allocation2 + $0xc8] sm:$0xff]
  %v77 = vld [vmem:[#allocation2 + $0xd0] sm:$0xff]
  %v78 = vld [vmem:[#allocation2 + $0xd8] sm:$0xff]
  %v79 = vld [vmem:[#allocation2 + $0xe0] sm:$0xff]
  %v80 = vld [vmem:[#allocation2 + $0xe8] sm:$0xff]
  %v81 = vld [vmem:[#allocation2 + $0xf0] sm:$0xff]
  %v82 = vld [vmem:[#allocation2 + $0xf8] sm:$0xff]
  %v83 = vld [vmem:[%s0] sm:$0xff]
  %v84 = vld [vmem:[%s0 + $0x8] sm:$0xff]
  %v85 = vld [vmem:[%s0 + $0x10] sm:$0xff]
  %v86 = vld [vmem:[%s0 + $0x18] sm:$0xff]
  %v87 = vld [vmem:[%s0 + $0x20] sm:$0xff]
  %v88 = vld [vmem:[%s0 + $0x28] sm:$0xff]
  %v89 = vld [vmem:[%s0 + $0x30] sm:$0xff]
  %v90 = vld [vmem:[%s0 + $0x38] sm:$0xff]
  %v91 = vld [vmem:[%s0 + $0x40] sm:$0xff]
  %v92 = vld [vmem:[%s0 + $0x48] sm:$0xff]
  %v93 = vld [vmem:[%s0 + $0x50] sm:$0xff]
  %v94 = vld [vmem:[%s0 + $0x58] sm:$0xff]
  %v95 = vld [vmem:[%s0 + $0x60] sm:$0xff]
  %v96 = vld [vmem:[%s0 + $0x68] sm:$0xff]
  %v97 = vld [vmem:[%s0 + $0x70] sm:$0xff]
  %v98 = vld [vmem:[%s0 + $0x78] sm:$0xff]
  %v99 = vld [vmem:[%s0 + $0x80] sm:$0xff]
  %v100 = vld [vmem:[%s0 + $0x88] sm:$0xff]
  %v101 = vld [vmem:[%s0 + $0x90] sm:$0xff]
  %v102 = vld [vmem:[%s0 + $0x98] sm:$0xff]
  %v103 = vld [vmem:[%s0 + $0xa0] sm:$0xff]
  %v104 = vld [vmem:[%s0 + $0xa8] sm:$0xff]
  %v105 = vld [vmem:[%s0 + $0xb0] sm:$0xff]
  %v106 = vld [vmem:[%s0 + $0xb8] sm:$0xff]
  %v107 = vld [vmem:[%s0 + $0xc0] sm:$0xff]
  %v108 = vld [vmem:[%s0 + $0xc8] sm:$0xff]
  %v109 = vld [vmem:[%s0 + $0xd0] sm:$0xff]
  %v110 = vld [vmem:[%s0 + $0xd8] sm:$0xff]
  %v111 = vld [vmem:[%s0 + $0xe0] sm:$0xff]
  %v112 = vld [vmem:[%s0 + $0xe8] sm:$0xff]
  %v113 = vld [vmem:[%s0 + $0xf0] sm:$0xff]
  %v114 = vld [vmem:[%s0 + $0xf8] sm:$0xff]
  %v115 = vld [vmem:[%s1] sm:$0xf]
  %v116 = vld [vmem:[%s1 + $0x4] sm:$0xf]
  %v117 = vld [vmem:[%s1 + $0x8] sm:$0xf]
  %v118 = vld [vmem:[%s1 + $0xc] sm:$0xf]
  %v119 = vld [vmem:[%s1 + $0x10] sm:$0xf]
  %v120 = vld [vmem:[%s1 + $0x14] sm:$0xf]
  %v121 = vld [vmem:[%s1 + $0x18] sm:$0xf]
  %v122 = vld [vmem:[%s1 + $0x1c] sm:$0xf]
  %v123 = vld [vmem:[%s1 + $0x20] sm:$0xf]
  %v124 = vld [vmem:[%s1 + $0x24] sm:$0xf]
  %v125 = vld [vmem:[%s1 + $0x28] sm:$0xf]
  %v126 = vld [vmem:[%s1 + $0x2c] sm:$0xf]
  %v127 = vld [vmem:[%s1 + $0x30] sm:$0xf]
  %v128 = vld [vmem:[%s1 + $0x34] sm:$0xf]
  %v129 = vld [vmem:[%s1 + $0x38] sm:$0xf]
  %v130 = vld [vmem:[%s1 + $0x3c] sm:$0xf]
  %v131 = vld [vmem:[%s1 + $0x40] sm:$0xf]
  %v132 = vld [vmem:[%s1 + $0x44] sm:$0xf]
  %v133 = vld [vmem:[%s1 + $0x48] sm:$0xf]
  %v134 = vld [vmem:[%s1 + $0x4c] sm:$0xf]
  %v135 = vld [vmem:[%s1 + $0x50] sm:$0xf]
  %v136 = vld [vmem:[%s1 + $0x54] sm:$0xf]
  %v137 = vld [vmem:[%s1 + $0x58] sm:$0xf]
  %v138 = vld [vmem:[%s1 + $0x5c] sm:$0xf]
  %v139 = vld [vmem:[%s1 + $0x60] sm:$0xf]
  %v140 = vld [vmem:[%s1 + $0x64] sm:$0xf]
  %v141 = vld [vmem:[%s1 + $0x68] sm:$0xf]
  %v142 = vld [vmem:[%s1 + $0x6c] sm:$0xf]
  %v143 = vld [vmem:[%s1 + $0x70] sm:$0xf]
  %v144 = vld [vmem:[%s1 + $0x74] sm:$0xf]
  %v145 = vld [vmem:[%s1 + $0x78] sm:$0xf]
  %v146 = vld [vmem:[%s1 + $0x7c] sm:$0xf]
  %v179 = vunpack.c.l.b16 %v83
  %v180 = vunpack.c.h.b16 %v83
  %v181 = vunpack.c.l.b16 %v84
  %v182 = vunpack.c.h.b16 %v84
  %v183 = vunpack.c.l.b16 %v85
  %v184 = vunpack.c.h.b16 %v85
  %v185 = vunpack.c.l.b16 %v86
  %v186 = vunpack.c.h.b16 %v86
  %v187 = vunpack.c.l.b16 %v87
  %v188 = vunpack.c.h.b16 %v87
  %v189 = vunpack.c.l.b16 %v88
  %v190 = vunpack.c.h.b16 %v88
  %v191 = vunpack.c.l.b16 %v89
  %v192 = vunpack.c.h.b16 %v89
  %v193 = vunpack.c.l.b16 %v90
  %v194 = vunpack.c.h.b16 %v90
  %v195 = vunpack.c.l.b16 %v91
  %v196 = vunpack.c.h.b16 %v91
  %v197 = vunpack.c.l.b16 %v92
  %v198 = vunpack.c.h.b16 %v92
  %v199 = vunpack.c.l.b16 %v93
  %v200 = vunpack.c.h.b16 %v93
  %v201 = vunpack.c.l.b16 %v94
  %v202 = vunpack.c.h.b16 %v94
  %v203 = vunpack.c.l.b16 %v95
  %v204 = vunpack.c.h.b16 %v95
  %v205 = vunpack.c.l.b16 %v96
  %v206 = vunpack.c.h.b16 %v96
  %v207 = vunpack.c.l.b16 %v97
  %v208 = vunpack.c.h.b16 %v97
  %v209 = vunpack.c.l.b16 %v98
  %v210 = vunpack.c.h.b16 %v98
  %v211 = vunpack.c.l.b16 %v99
  %v212 = vunpack.c.h.b16 %v99
  %v213 = vunpack.c.l.b16 %v100
  %v214 = vunpack.c.h.b16 %v100
  %v215 = vunpack.c.l.b16 %v101
  %v216 = vunpack.c.h.b16 %v101
  %v217 = vunpack.c.l.b16 %v102
  %v218 = vunpack.c.h.b16 %v102
  %v219 = vunpack.c.l.b16 %v103
  %v220 = vunpack.c.h.b16 %v103
  %v221 = vunpack.c.l.b16 %v104
  %v222 = vunpack.c.h.b16 %v104
  %v223 = vunpack.c.l.b16 %v105
  %v224 = vunpack.c.h.b16 %v105
  %v225 = vunpack.c.l.b16 %v106
  %v226 = vunpack.c.h.b16 %v106
  %v227 = vunpack.c.l.b16 %v107
  %v228 = vunpack.c.h.b16 %v107
  %v229 = vunpack.c.l.b16 %v108
  %v230 = vunpack.c.h.b16 %v108
  %v231 = vunpack.c.l.b16 %v109
  %v232 = vunpack.c.h.b16 %v109
  %v233 = vunpack.c.l.b16 %v110
  %v234 = vunpack.c.h.b16 %v110
  %v235 = vunpack.c.l.b16 %v111
  %v236 = vunpack.c.h.b16 %v111
  %v237 = vunpack.c.l.b16 %v112
  %v238 = vunpack.c.h.b16 %v112
  %v239 = vunpack.c.l.b16 %v113
  %v240 = vunpack.c.h.b16 %v113
  %v241 = vunpack.c.l.b16 %v114
  %v242 = vunpack.c.h.b16 %v114
  %v243 = vpack.c.b16 %v181, %v179
  %v244 = vpack.c.b16 %v182, %v180
  %v245 = vpack.c.b16 %v185, %v183
  %v246 = vpack.c.b16 %v186, %v184
  %v247 = vpack.c.b16 %v189, %v187
  %v248 = vpack.c.b16 %v190, %v188
  %v249 = vpack.c.b16 %v193, %v191
  %v250 = vpack.c.b16 %v194, %v192
  %v251 = vpack.c.b16 %v197, %v195
  %v252 = vpack.c.b16 %v198, %v196
  %v253 = vpack.c.b16 %v201, %v199
  %v254 = vpack.c.b16 %v202, %v200
  %v255 = vpack.c.b16 %v205, %v203
  %v256 = vpack.c.b16 %v206, %v204
  %v257 = vpack.c.b16 %v209, %v207
  %v258 = vpack.c.b16 %v210, %v208
  %v259 = vpack.c.b16 %v213, %v211
  %v260 = vpack.c.b16 %v214, %v212
  %v261 = vpack.c.b16 %v217, %v215
  %v262 = vpack.c.b16 %v218, %v216
  %v263 = vpack.c.b16 %v221, %v219
  %v264 = vpack.c.b16 %v222, %v220
  %v265 = vpack.c.b16 %v225, %v223
  %v266 = vpack.c.b16 %v226, %v224
  %v267 = vpack.c.b16 %v229, %v227
  %v268 = vpack.c.b16 %v230, %v228
  %v269 = vpack.c.b16 %v233, %v231
  %v270 = vpack.c.b16 %v234, %v232
  %v271 = vpack.c.b16 %v237, %v235
  %v272 = vpack.c.b16 %v238, %v236
  %v273 = vpack.c.b16 %v241, %v239
  %v274 = vpack.c.b16 %v242, %v240
  %v339 = vunpack.c.l.b16 %v115
  %v340 = vunpack.c.l.b16 %v116
  %v341 = vunpack.c.l.b16 %v117
  %v342 = vunpack.c.l.b16 %v118
  %v343 = vunpack.c.l.b16 %v119
  %v344 = vunpack.c.l.b16 %v120
  %v345 = vunpack.c.l.b16 %v121
  %v346 = vunpack.c.l.b16 %v122
  %v347 = vunpack.c.l.b16 %v123
  %v348 = vunpack.c.l.b16 %v124
  %v349 = vunpack.c.l.b16 %v125
  %v350 = vunpack.c.l.b16 %v126
  %v351 = vunpack.c.l.b16 %v127
  %v352 = vunpack.c.l.b16 %v128
  %v353 = vunpack.c.l.b16 %v129
  %v354 = vunpack.c.l.b16 %v130
  %v355 = vunpack.c.l.b16 %v131
  %v356 = vunpack.c.l.b16 %v132
  %v357 = vunpack.c.l.b16 %v133
  %v358 = vunpack.c.l.b16 %v134
  %v359 = vunpack.c.l.b16 %v135
  %v360 = vunpack.c.l.b16 %v136
  %v361 = vunpack.c.l.b16 %v137
  %v362 = vunpack.c.l.b16 %v138
  %v363 = vunpack.c.l.b16 %v139
  %v364 = vunpack.c.l.b16 %v140
  %v365 = vunpack.c.l.b16 %v141
  %v366 = vunpack.c.l.b16 %v142
  %v367 = vunpack.c.l.b16 %v143
  %v368 = vunpack.c.l.b16 %v144
  %v369 = vunpack.c.l.b16 %v145
  %v370 = vunpack.c.l.b16 %v146
  %v371 = vpack.c.b16 %v340, %v339
  %v372 = vpack.c.b16 %v342, %v341
  %v373 = vpack.c.b16 %v344, %v343
  %v374 = vpack.c.b16 %v346, %v345
  %v375 = vpack.c.b16 %v348, %v347
  %v376 = vpack.c.b16 %v350, %v349
  %v377 = vpack.c.b16 %v352, %v351
  %v378 = vpack.c.b16 %v354, %v353
  %v379 = vpack.c.b16 %v356, %v355
  %v380 = vpack.c.b16 %v358, %v357
  %v381 = vpack.c.b16 %v360, %v359
  %v382 = vpack.c.b16 %v362, %v361
  %v383 = vpack.c.b16 %v364, %v363
  %v384 = vpack.c.b16 %v366, %v365
  %v385 = vpack.c.b16 %v368, %v367
  %v386 = vpack.c.b16 %v370, %v369
  %403 = vmatprep.subr.bf16.mxu0 0
  %404 = vmatpush1.bf16.msra.mxu0 %v371
  %405 = vmatprep.subr.bf16.mxu0 0
  %406 = vmatpush1.bf16.msra.mxu0 %v372
  %407 = vmatprep.subr.bf16.mxu0 0
  %408 = vmatpush1.bf16.msra.mxu0 %v373
  %409 = vmatprep.subr.bf16.mxu0 0
  %410 = vmatpush1.bf16.msra.mxu0 %v374
  %411 = vmatprep.subr.bf16.mxu0 0
  %412 = vmatpush1.bf16.msra.mxu0 %v375
  %413 = vmatprep.subr.bf16.mxu0 0
  %414 = vmatpush1.bf16.msra.mxu0 %v376
  %415 = vmatprep.subr.bf16.mxu0 0
  %416 = vmatpush1.bf16.msra.mxu0 %v377
  %417 = vmatprep.subr.bf16.mxu0 0
  %418 = vmatpush1.bf16.msra.mxu0 %v378
  %419 = vmatprep.subr.bf16.mxu0 0
  %420 = vmatpush1.bf16.msra.mxu0 %v379
  %421 = vmatprep.subr.bf16.mxu0 0
  %422 = vmatpush1.bf16.msra.mxu0 %v380
  %423 = vmatprep.subr.bf16.mxu0 0
  %424 = vmatpush1.bf16.msra.mxu0 %v381
  %425 = vmatprep.subr.bf16.mxu0 0
  %426 = vmatpush1.bf16.msra.mxu0 %v382
  %427 = vmatprep.subr.bf16.mxu0 0
  %428 = vmatpush1.bf16.msra.mxu0 %v383
  %429 = vmatprep.subr.bf16.mxu0 0
  %430 = vmatpush1.bf16.msra.mxu0 %v384
  %431 = vmatprep.subr.bf16.mxu0 0
  %432 = vmatpush1.bf16.msra.mxu0 %v385
  %433 = vmatprep.subr.bf16.mxu0 0
  %434 = vmatpush1.bf16.msra.mxu0 %v386
  %435 = vmatprep.mubr.bf16.mxu0 %v244
  %436 = vmatmul.mubr.bf16.gmra.mrb[0].mxu0 %v243
  %v437 = vpop.f32.mrb[0].mxu0
  %v438 = vadd.f32 0.0, %v437
  %v439 = vpop.f32.mrb[0].mxu0
  %v440 = vpop.f32.mrb[0].mxu0
  %v441 = vadd.f32 0.0, %v440
  %v442 = vpop.f32.mrb[0].mxu0
  %443 = vmatprep.mubr.bf16.mxu0 %v246
  %444 = vmatmul.mubr.bf16.gmra.mrb[0].mxu0 %v245
  %v445 = vpop.f32.mrb[0].mxu0
  %v446 = vadd.f32 0.0, %v445
  %v447 = vpop.f32.mrb[0].mxu0
  %v448 = vpop.f32.mrb[0].mxu0
  %v449 = vadd.f32 0.0, %v448
  %v450 = vpop.f32.mrb[0].mxu0
  %451 = vmatprep.mubr.bf16.mxu0 %v248
  %452 = vmatmul.mubr.bf16.gmra.mrb[0].mxu0 %v247
  %v453 = vpop.f32.mrb[0].mxu0
  %v454 = vadd.f32 0.0, %v453
  %v455 = vpop.f32.mrb[0].mxu0
  %v456 = vpop.f32.mrb[0].mxu0
  %v457 = vadd.f32 0.0, %v456
  %v458 = vpop.f32.mrb[0].mxu0
  %459 = vmatprep.mubr.bf16.mxu0 %v250
  %460 = vmatmul.mubr.bf16.gmra.mrb[0].mxu0 %v249
  %v461 = vpop.f32.mrb[0].mxu0
  %v462 = vadd.f32 0.0, %v461
  %v463 = vpop.f32.mrb[0].mxu0
  %v464 = vpop.f32.mrb[0].mxu0
  %v465 = vadd.f32 0.0, %v464
  %v466 = vpop.f32.mrb[0].mxu0
  %467 = vmatprep.mubr.bf16.mxu0 %v252
  %468 = vmatmul.mubr.bf16.gmra.mrb[0].mxu0 %v251
  %v469 = vpop.f32.mrb[0].mxu0
  %v470 = vadd.f32 0.0, %v469
  %v471 = vpop.f32.mrb[0].mxu0
  %v472 = vpop.f32.mrb[0].mxu0
  %v473 = vadd.f32 0.0, %v472
  %v474 = vpop.f32.mrb[0].mxu0
  %475 = vmatprep.mubr.bf16.mxu0 %v254
  %476 = vmatmul.mubr.bf16.gmra.mrb[0].mxu0 %v253
  %v477 = vpop.f32.mrb[0].mxu0
  %v478 = vadd.f32 0.0, %v477
  %v479 = vpop.f32.mrb[0].mxu0
  %v480 = vpop.f32.mrb[0].mxu0
  %v481 = vadd.f32 0.0, %v480
  %v482 = vpop.f32.mrb[0].mxu0
  %483 = vmatprep.mubr.bf16.mxu0 %v256
  %484 = vmatmul.mubr.bf16.gmra.mrb[0].mxu0 %v255
  %v485 = vpop.f32.mrb[0].mxu0
  %v486 = vadd.f32 0.0, %v485
  %v487 = vpop.f32.mrb[0].mxu0
  %v488 = vpop.f32.mrb[0].mxu0
  %v489 = vadd.f32 0.0, %v488
  %v490 = vpop.f32.mrb[0].mxu0
  %491 = vmatprep.mubr.bf16.mxu0 %v258
  %492 = vmatmul.mubr.bf16.gmra.mrb[0].mxu0 %v257
  %v493 = vpop.f32.mrb[0].mxu0
  %v494 = vadd.f32 0.0, %v493
  %v495 = vpop.f32.mrb[0].mxu0
  %v496 = vpop.f32.mrb[0].mxu0
  %v497 = vadd.f32 0.0, %v496
  %v498 = vpop.f32.mrb[0].mxu0
  %499 = vmatprep.mubr.bf16.mxu0 %v260
  %500 = vmatmul.mubr.bf16.gmra.mrb[0].mxu0 %v259
  %v501 = vpop.f32.mrb[0].mxu0
  %v502 = vadd.f32 0.0, %v501
  %v503 = vpop.f32.mrb[0].mxu0
  %v504 = vpop.f32.mrb[0].mxu0
  %v505 = vadd.f32 0.0, %v504
  %v506 = vpop.f32.mrb[0].mxu0
  %507 = vmatprep.mubr.bf16.mxu0 %v262
  %508 = vmatmul.mubr.bf16.gmra.mrb[0].mxu0 %v261
  %v509 = vpop.f32.mrb[0].mxu0
  %v510 = vadd.f32 0.0, %v509
  %v511 = vpop.f32.mrb[0].mxu0
  %v512 = vpop.f32.mrb[0].mxu0
  %v513 = vadd.f32 0.0, %v512
  %v514 = vpop.f32.mrb[0].mxu0
  %515 = vmatprep.mubr.bf16.mxu0 %v264
  %516 = vmatmul.mubr.bf16.gmra.mrb[0].mxu0 %v263
  %v517 = vpop.f32.mrb[0].mxu0
  %v518 = vadd.f32 0.0, %v517
  %v519 = vpop.f32.mrb[0].mxu0
  %v520 = vpop.f32.mrb[0].mxu0
  %v521 = vadd.f32 0.0, %v520
  %v522 = vpop.f32.mrb[0].mxu0
  %523 = vmatprep.mubr.bf16.mxu0 %v266
  %524 = vmatmul.mubr.bf16.gmra.mrb[0].mxu0 %v265
  %v525 = vpop.f32.mrb[0].mxu0
  %v526 = vadd.f32 0.0, %v525
  %v527 = vpop.f32.mrb[0].mxu0
  %v528 = vpop.f32.mrb[0].mxu0
  %v529 = vadd.f32 0.0, %v528
  %v530 = vpop.f32.mrb[0].mxu0
  %531 = vmatprep.mubr.bf16.mxu0 %v268
  %532 = vmatmul.mubr.bf16.gmra.mrb[0].mxu0 %v267
  %v533 = vpop.f32.mrb[0].mxu0
  %v534 = vadd.f32 0.0, %v533
  %v535 = vpop.f32.mrb[0].mxu0
  %v536 = vpop.f32.mrb[0].mxu0
  %v537 = vadd.f32 0.0, %v536
  %v538 = vpop.f32.mrb[0].mxu0
  %539 = vmatprep.mubr.bf16.mxu0 %v270
  %540 = vmatmul.mubr.bf16.gmra.mrb[0].mxu0 %v269
  %v541 = vpop.f32.mrb[0].mxu0
  %v542 = vadd.f32 0.0, %v541
  %v543 = vpop.f32.mrb[0].mxu0
  %v544 = vpop.f32.mrb[0].mxu0
  %v545 = vadd.f32 0.0, %v544
  %v546 = vpop.f32.mrb[0].mxu0
  %547 = vmatprep.mubr.bf16.mxu0 %v272
  %548 = vmatmul.mubr.bf16.gmra.mrb[0].mxu0 %v271
  %v549 = vpop.f32.mrb[0].mxu0
  %v550 = vadd.f32 0.0, %v549
  %v551 = vpop.f32.mrb[0].mxu0
  %v552 = vpop.f32.mrb[0].mxu0
  %v553 = vadd.f32 0.0, %v552
  %v554 = vpop.f32.mrb[0].mxu0
  %555 = vmatprep.mubr.bf16.mxu0 %v274
  %556 = vmatmul.mubr.bf16.gmra.mrb[0].mxu0 %v273
  %v557 = vpop.f32.mrb[0].mxu0
  %v558 = vadd.f32 0.0, %v557
  %v559 = vpop.f32.mrb[0].mxu0
  %v560 = vpop.f32.mrb[0].mxu0
  %v561 = vadd.f32 0.0, %v560
  %v562 = vpop.f32.mrb[0].mxu0
  %563 = vdwg.mxu0
  %v564 = vadd.f32 %v51, %v438
  %v565 = vadd.f32 %v52, %v441
  %v566 = vadd.f32 %v53, %v446
  %v567 = vadd.f32 %v54, %v449
  %v568 = vadd.f32 %v55, %v454
  %v569 = vadd.f32 %v56, %v457
  %v570 = vadd.f32 %v57, %v462
  %v571 = vadd.f32 %v58, %v465
  %v572 = vadd.f32 %v59, %v470
  %v573 = vadd.f32 %v60, %v473
  %v574 = vadd.f32 %v61, %v478
  %v575 = vadd.f32 %v62, %v481
  %v576 = vadd.f32 %v63, %v486
  %v577 = vadd.f32 %v64, %v489
  %v578 = vadd.f32 %v65, %v494
  %v579 = vadd.f32 %v66, %v497
  %v580 = vadd.f32 %v67, %v502
  %v581 = vadd.f32 %v68, %v505
  %v582 = vadd.f32 %v69, %v510
  %v583 = vadd.f32 %v70, %v513
  %v584 = vadd.f32 %v71, %v518
  %v585 = vadd.f32 %v72, %v521
  %v586 = vadd.f32 %v73, %v526
  %v587 = vadd.f32 %v74, %v529
  %v588 = vadd.f32 %v75, %v534
  %v589 = vadd.f32 %v76, %v537
  %v590 = vadd.f32 %v77, %v542
  %v591 = vadd.f32 %v78, %v545
  %v592 = vadd.f32 %v79, %v550
  %v593 = vadd.f32 %v80, %v553
  %v594 = vadd.f32 %v81, %v558
  %v595 = vadd.f32 %v82, %v561
  %596 = vst [vmem:[#allocation2] sm:$0xff] %v564
  %597 = vst [vmem:[#allocation2 + $0x8] sm:$0xff] %v565
  %598 = vst [vmem:[#allocation2 + $0x10] sm:$0xff] %v566
  %599 = vst [vmem:[#allocation2 + $0x18] sm:$0xff] %v567
  %600 = vst [vmem:[#allocation2 + $0x20] sm:$0xff] %v568
  %601 = vst [vmem:[#allocation2 + $0x28] sm:$0xff] %v569
  %602 = vst [vmem:[#allocation2 + $0x30] sm:$0xff] %v570
  %603 = vst [vmem:[#allocation2 + $0x38] sm:$0xff] %v571
  %604 = vst [vmem:[#allocation2 + $0x40] sm:$0xff] %v572
  %605 = vst [vmem:[#allocation2 + $0x48] sm:$0xff] %v573
  %606 = vst [vmem:[#allocation2 + $0x50] sm:$0xff] %v574
  %607 = vst [vmem:[#allocation2 + $0x58] sm:$0xff] %v575
  %608 = vst [vmem:[#allocation2 + $0x60] sm:$0xff] %v576
  %609 = vst [vmem:[#allocation2 + $0x68] sm:$0xff] %v577
  %610 = vst [vmem:[#allocation2 + $0x70] sm:$0xff] %v578
  %611 = vst [vmem:[#allocation2 + $0x78] sm:$0xff] %v579
  %612 = vst [vmem:[#allocation2 + $0x80] sm:$0xff] %v580
  %613 = vst [vmem:[#allocation2 + $0x88] sm:$0xff] %v581
  %614 = vst [vmem:[#allocation2 + $0x90] sm:$0xff] %v582
  %615 = vst [vmem:[#allocation2 + $0x98] sm:$0xff] %v583
  %616 = vst [vmem:[#allocation2 + $0xa0] sm:$0xff] %v584
  %617 = vst [vmem:[#allocation2 + $0xa8] sm:$0xff] %v585
  %618 = vst [vmem:[#allocation2 + $0xb0] sm:$0xff] %v586
  %619 = vst [vmem:[#allocation2 + $0xb8] sm:$0xff] %v587
  %620 = vst [vmem:[#allocation2 + $0xc0] sm:$0xff] %v588
  %621 = vst [vmem:[#allocation2 + $0xc8] sm:$0xff] %v589
  %622 = vst [vmem:[#allocation2 + $0xd0] sm:$0xff] %v590
  %623 = vst [vmem:[#allocation2 + $0xd8] sm:$0xff] %v591
  %624 = vst [vmem:[#allocation2 + $0xe0] sm:$0xff] %v592
  %625 = vst [vmem:[#allocation2 + $0xe8] sm:$0xff] %v593
  %626 = vst [vmem:[#allocation2 + $0xf0] sm:$0xff] %v594
  %627 = vst [vmem:[#allocation2 + $0xf8] sm:$0xff] %v595
  // Predicated region
  $region18: #{_lambda_.10} parent=0 // pred_check
    %p628 = pneg %p15
  $region19: #{_lambda_.10} parent=0 // pred_check_branch
    %630 = sbr.rel (%p628) target = $region21
  $region20: #{_lambda_.10} parent=0 // pred_region
    %v631 = vld [vmem:[#allocation2] sm:$0xff]
    %v632 = vld [vmem:[#allocation2 + $0x8] sm:$0xff]
    %v633 = vld [vmem:[#allocation2 + $0x10] sm:$0xff]
    %v634 = vld [vmem:[#allocation2 + $0x18] sm:$0xff]
    %v635 = vld [vmem:[#allocation2 + $0x20] sm:$0xff]
    %v636 = vld [vmem:[#allocation2 + $0x28] sm:$0xff]
    %v637 = vld [vmem:[#allocation2 + $0x30] sm:$0xff]
    %v638 = vld [vmem:[#allocation2 + $0x38] sm:$0xff]
    %v639 = vld [vmem:[#allocation2 + $0x40] sm:$0xff]
    %v640 = vld [vmem:[#allocation2 + $0x48] sm:$0xff]
    %v641 = vld [vmem:[#allocation2 + $0x50] sm:$0xff]
    %v642 = vld [vmem:[#allocation2 + $0x58] sm:$0xff]
    %v643 = vld [vmem:[#allocation2 + $0x60] sm:$0xff]
    %v644 = vld [vmem:[#allocation2 + $0x68] sm:$0xff]
    %v645 = vld [vmem:[#allocation2 + $0x70] sm:$0xff]
    %v646 = vld [vmem:[#allocation2 + $0x78] sm:$0xff]
    %v647 = vld [vmem:[#allocation2 + $0x80] sm:$0xff]
    %v648 = vld [vmem:[#allocation2 + $0x88] sm:$0xff]
    %v649 = vld [vmem:[#allocation2 + $0x90] sm:$0xff]
    %v650 = vld [vmem:[#allocation2 + $0x98] sm:$0xff]
    %v651 = vld [vmem:[#allocation2 + $0xa0] sm:$0xff]
    %v652 = vld [vmem:[#allocation2 + $0xa8] sm:$0xff]
    %v653 = vld [vmem:[#allocation2 + $0xb0] sm:$0xff]
    %v654 = vld [vmem:[#allocation2 + $0xb8] sm:$0xff]
    %v655 = vld [vmem:[#allocation2 + $0xc0] sm:$0xff]
    %v656 = vld [vmem:[#allocation2 + $0xc8] sm:$0xff]
    %v657 = vld [vmem:[#allocation2 + $0xd0] sm:$0xff]
    %v658 = vld [vmem:[#allocation2 + $0xd8] sm:$0xff]
    %v659 = vld [vmem:[#allocation2 + $0xe0] sm:$0xff]
    %v660 = vld [vmem:[#allocation2 + $0xe8] sm:$0xff]
    %v661 = vld [vmem:[#allocation2 + $0xf0] sm:$0xff]
    %v662 = vld [vmem:[#allocation2 + $0xf8] sm:$0xff]
    %v663 = vld [vmem:[%s2] sm:$0x1]
    %v665 = vlaneseq
    %v666 = vshrl.u32 %v665, 7
    %v667 = vsub.s32 0, %v666
    %v668 = vrot.slane %v663, %v667
    %v670 = vadd.f32 %v631, %v668
    %v671 = vadd.f32 %v632, %v668
    %v672 = vadd.f32 %v633, %v668
    %v673 = vadd.f32 %v634, %v668
    %v674 = vadd.f32 %v635, %v668
    %v675 = vadd.f32 %v636, %v668
    %v676 = vadd.f32 %v637, %v668
    %v677 = vadd.f32 %v638, %v668
    %v678 = vadd.f32 %v639, %v668
    %v679 = vadd.f32 %v640, %v668
    %v680 = vadd.f32 %v641, %v668
    %v681 = vadd.f32 %v642, %v668
    %v682 = vadd.f32 %v643, %v668
    %v683 = vadd.f32 %v644, %v668
    %v684 = vadd.f32 %v645, %v668
    %v685 = vadd.f32 %v646, %v668
    %v686 = vadd.f32 %v647, %v668
    %v687 = vadd.f32 %v648, %v668
    %v688 = vadd.f32 %v649, %v668
    %v689 = vadd.f32 %v650, %v668
    %v690 = vadd.f32 %v651, %v668
    %v691 = vadd.f32 %v652, %v668
    %v692 = vadd.f32 %v653, %v668
    %v693 = vadd.f32 %v654, %v668
    %v694 = vadd.f32 %v655, %v668
    %v695 = vadd.f32 %v656, %v668
    %v696 = vadd.f32 %v657, %v668
    %v697 = vadd.f32 %v658, %v668
    %v698 = vadd.f32 %v659, %v668
    %v699 = vadd.f32 %v660, %v668
    %v700 = vadd.f32 %v661, %v668
    %v701 = vadd.f32 %v662, %v668
    %vm702 = vcmp.ge.f32.partialorder %v670, 0.0
    %vm703 = vcmp.ge.f32.partialorder %v671, 0.0
    %vm704 = vcmp.ge.f32.partialorder %v672, 0.0
    %vm705 = vcmp.ge.f32.partialorder %v673, 0.0
    %vm706 = vcmp.ge.f32.partialorder %v674, 0.0
    %vm707 = vcmp.ge.f32.partialorder %v675, 0.0
    %vm708 = vcmp.ge.f32.partialorder %v676, 0.0
    %vm709 = vcmp.ge.f32.partialorder %v677, 0.0
    %vm710 = vcmp.ge.f32.partialorder %v678, 0.0
    %vm711 = vcmp.ge.f32.partialorder %v679, 0.0
    %vm712 = vcmp.ge.f32.partialorder %v680, 0.0
    %vm713 = vcmp.ge.f32.partialorder %v681, 0.0
    %vm714 = vcmp.ge.f32.partialorder %v682, 0.0
    %vm715 = vcmp.ge.f32.partialorder %v683, 0.0
    %vm716 = vcmp.ge.f32.partialorder %v684, 0.0
    %vm717 = vcmp.ge.f32.partialorder %v685, 0.0
    %vm718 = vcmp.ge.f32.partialorder %v686, 0.0
    %vm719 = vcmp.ge.f32.partialorder %v687, 0.0
    %vm720 = vcmp.ge.f32.partialorder %v688, 0.0
    %vm721 = vcmp.ge.f32.partialorder %v689, 0.0
    %vm722 = vcmp.ge.f32.partialorder %v690, 0.0
    %vm723 = vcmp.ge.f32.partialorder %v691, 0.0
    %vm724 = vcmp.ge.f32.partialorder %v692, 0.0
    %vm725 = vcmp.ge.f32.partialorder %v693, 0.0
    %vm726 = vcmp.ge.f32.partialorder %v694, 0.0
    %vm727 = vcmp.ge.f32.partialorder %v695, 0.0
    %vm728 = vcmp.ge.f32.partialorder %v696, 0.0
    %vm729 = vcmp.ge.f32.partialorder %v697, 0.0
    %vm730 = vcmp.ge.f32.partialorder %v698, 0.0
    %vm731 = vcmp.ge.f32.partialorder %v699, 0.0
    %vm732 = vcmp.ge.f32.partialorder %v700, 0.0
    %vm733 = vcmp.ge.f32.partialorder %v701, 0.0
    %v734 = vmul.f32 %v670, 0.2
    %v735 = vmul.f32 %v671, 0.2
    %v736 = vmul.f32 %v672, 0.2
    %v737 = vmul.f32 %v673, 0.2
    %v738 = vmul.f32 %v674, 0.2
    %v739 = vmul.f32 %v675, 0.2
    %v740 = vmul.f32 %v676, 0.2
    %v741 = vmul.f32 %v677, 0.2
    %v742 = vmul.f32 %v678, 0.2
    %v743 = vmul.f32 %v679, 0.2
    %v744 = vmul.f32 %v680, 0.2
    %v745 = vmul.f32 %v681, 0.2
    %v746 = vmul.f32 %v682, 0.2
    %v747 = vmul.f32 %v683, 0.2
    %v748 = vmul.f32 %v684, 0.2
    %v749 = vmul.f32 %v685, 0.2
    %v750 = vmul.f32 %v686, 0.2
    %v751 = vmul.f32 %v687, 0.2
    %v752 = vmul.f32 %v688, 0.2
    %v753 = vmul.f32 %v689, 0.2
    %v754 = vmul.f32 %v690, 0.2
    %v755 = vmul.f32 %v691, 0.2
    %v756 = vmul.f32 %v692, 0.2
    %v757 = vmul.f32 %v693, 0.2
    %v758 = vmul.f32 %v694, 0.2
    %v759 = vmul.f32 %v695, 0.2
    %v760 = vmul.f32 %v696, 0.2
    %v761 = vmul.f32 %v697, 0.2
    %v762 = vmul.f32 %v698, 0.2
    %v763 = vmul.f32 %v699, 0.2
    %v764 = vmul.f32 %v700, 0.2
    %v765 = vmul.f32 %v701, 0.2
    %v766 = vsel %vm702, %v670, %v734
    %v767 = vsel %vm703, %v671, %v735
    %v768 = vsel %vm704, %v672, %v736
    %v769 = vsel %vm705, %v673, %v737
    %v770 = vsel %vm706, %v674, %v738
    %v771 = vsel %vm707, %v675, %v739
    %v772 = vsel %vm708, %v676, %v740
    %v773 = vsel %vm709, %v677, %v741
    %v774 = vsel %vm710, %v678, %v742
    %v775 = vsel %vm711, %v679, %v743
    %v776 = vsel %vm712, %v680, %v744
    %v777 = vsel %vm713, %v681, %v745
    %v778 = vsel %vm714, %v682, %v746
    %v779 = vsel %vm715, %v683, %v747
    %v780 = vsel %vm716, %v684, %v748
    %v781 = vsel %vm717, %v685, %v749
    %v782 = vsel %vm718, %v686, %v750
    %v783 = vsel %vm719, %v687, %v751
    %v784 = vsel %vm720, %v688, %v752
    %v785 = vsel %vm721, %v689, %v753
    %v786 = vsel %vm722, %v690, %v754
    %v787 = vsel %vm723, %v691, %v755
    %v788 = vsel %vm724, %v692, %v756
    %v789 = vsel %vm725, %v693, %v757
    %v790 = vsel %vm726, %v694, %v758
    %v791 = vsel %vm727, %v695, %v759
    %v792 = vsel %vm728, %v696, %v760
    %v793 = vsel %vm729, %v697, %v761
    %v794 = vsel %vm730, %v698, %v762
    %v795 = vsel %vm731, %v699, %v763
    %v796 = vsel %vm732, %v700, %v764
    %v797 = vsel %vm733, %v701, %v765
    %798 = vst [vmem:[%s3] sm:$0xff] %v766
    %799 = vst [vmem:[%s3 + $0x8] sm:$0xff] %v767
    %800 = vst [vmem:[%s3 + $0x10] sm:$0xff] %v768
    %801 = vst [vmem:[%s3 + $0x18] sm:$0xff] %v769
    %802 = vst [vmem:[%s3 + $0x20] sm:$0xff] %v770
    %803 = vst [vmem:[%s3 + $0x28] sm:$0xff] %v771
    %804 = vst [vmem:[%s3 + $0x30] sm:$0xff] %v772
    %805 = vst [vmem:[%s3 + $0x38] sm:$0xff] %v773
    %806 = vst [vmem:[%s3 + $0x40] sm:$0xff] %v774
    %807 = vst [vmem:[%s3 + $0x48] sm:$0xff] %v775
    %808 = vst [vmem:[%s3 + $0x50] sm:$0xff] %v776
    %809 = vst [vmem:[%s3 + $0x58] sm:$0xff] %v777
    %810 = vst [vmem:[%s3 + $0x60] sm:$0xff] %v778
    %811 = vst [vmem:[%s3 + $0x68] sm:$0xff] %v779
    %812 = vst [vmem:[%s3 + $0x70] sm:$0xff] %v780
    %813 = vst [vmem:[%s3 + $0x78] sm:$0xff] %v781
    %814 = vst [vmem:[%s3 + $0x80] sm:$0xff] %v782
    %815 = vst [vmem:[%s3 + $0x88] sm:$0xff] %v783
    %816 = vst [vmem:[%s3 + $0x90] sm:$0xff] %v784
    %817 = vst [vmem:[%s3 + $0x98] sm:$0xff] %v785
    %818 = vst [vmem:[%s3 + $0xa0] sm:$0xff] %v786
    %819 = vst [vmem:[%s3 + $0xa8] sm:$0xff] %v787
    %820 = vst [vmem:[%s3 + $0xb0] sm:$0xff] %v788
    %821 = vst [vmem:[%s3 + $0xb8] sm:$0xff] %v789
    %822 = vst [vmem:[%s3 + $0xc0] sm:$0xff] %v790
    %823 = vst [vmem:[%s3 + $0xc8] sm:$0xff] %v791
    %824 = vst [vmem:[%s3 + $0xd0] sm:$0xff] %v792
    %825 = vst [vmem:[%s3 + $0xd8] sm:$0xff] %v793
    %826 = vst [vmem:[%s3 + $0xe0] sm:$0xff] %v794
    %827 = vst [vmem:[%s3 + $0xe8] sm:$0xff] %v795
    %828 = vst [vmem:[%s3 + $0xf0] sm:$0xff] %v796
    %829 = vst [vmem:[%s3 + $0xf8] sm:$0xff] %v797
  $region21: #{_lambda_.10} parent=0 // pred_fallthru
    _
  // Predicated region
  $region22: #{_lambda_.10} parent=0 // pred_check
    _
  $region23: #{_lambda_.10} parent=0 // pred_check_branch
    %831 = sbr.rel (0) target = $region25
  $region24: #{_lambda_.10} parent=0 // pred_region
    _
  $region25: #{_lambda_.10} parent=0 // pred_fallthru
    _
  // Predicated region
  $region26: #{_lambda_.10} parent=0 // pred_check
    _
  $region27: #{_lambda_.10} parent=0 // pred_check_branch
    %833 = sbr.rel (0) target = $region29
  $region28: #{_lambda_.10} parent=0 // pred_region
    _
  $region29: #{_lambda_.10} parent=0 // pred_fallthru
    _

// kernel: _lambda_.11
$region0: #{_lambda_.11}
  #allocation0 [shape = 'u32[]', space=smem, size = 0x4, offset = 0x4, fixed_abs, tag = 'smem constant byte address 0x4 - core index']
  #allocation1 [shape = 'u32[144,128]{1,0:T(1,128)}', space=vmem, size = 0x12000, scoped, tag = 'internal scratch']
  #allocation2 [shape = 'f32[64,128]{1,0:T(8,128)}', space=vmem, size = 0x8000, scoped, tag = 'scratch operand']
  %s0 = inlined_call_operand.vmem [shape: bf16[64,256], index: 0, kind: input, shape index: {}]
  %s1 = inlined_call_operand.vmem [shape: bf16[256,128], index: 1, kind: input, shape index: {}]
  %s2 = inlined_call_operand.vmem [shape: f32[64,128], index: 2, kind: output, shape index: {0}]
  %s3 = inlined_call_operand.vmem [shape: f32[8,128], index: 3, kind: output, shape index: {1}]
  %4 = xla_tuple %s2, %s3
  %s5 = sld [smem:[#allocation0]]
  $region34: #{_lambda_.11} parent=0
    _
  %s7 = ssub.s32 1, %s5
  %s8 = scalar_select 0, %s7, %s5
  // Predicated region
  $region2: #{_lambda_.11} parent=0 // pred_check
    _
  $region3: #{_lambda_.11} parent=0 // pred_check_branch
    %10 = sbr.rel (0) target = $region5
  $region4: #{_lambda_.11} parent=0 // pred_region
    _
  $region5: #{_lambda_.11} parent=0 // pred_fallthru
    _
  // Predicated region
  $region6: #{_lambda_.11} parent=0 // pred_check
    _
  $region7: #{_lambda_.11} parent=0 // pred_check_branch
    %12 = sbr.rel (0) target = $region9
  $region8: #{_lambda_.11} parent=0 // pred_region
    _
  $region9: #{_lambda_.11} parent=0 // pred_fallthru
    _
  %p14 = scmp.eq.s32.totalorder 0, 0
  // Predicated region
  $region10: #{_lambda_.11} parent=0 // pred_check
    %p15 = pneg %p14
  $region11: #{_lambda_.11} parent=0 // pred_check_branch
    %17 = sbr.rel (%p15) target = $region13
  $region12: #{_lambda_.11} parent=0 // pred_region
    %18 = vst [vmem:[#allocation2] sm:$0xff] 0.0
    %19 = vst [vmem:[#allocation2 + $0x8] sm:$0xff] 0.0
    %20 = vst [vmem:[#allocation2 + $0x10] sm:$0xff] 0.0
    %21 = vst [vmem:[#allocation2 + $0x18] sm:$0xff] 0.0
    %22 = vst [vmem:[#allocation2 + $0x20] sm:$0xff] 0.0
    %23 = vst [vmem:[#allocation2 + $0x28] sm:$0xff] 0.0
    %24 = vst [vmem:[#allocation2 + $0x30] sm:$0xff] 0.0
    %25 = vst [vmem:[#allocation2 + $0x38] sm:$0xff] 0.0
  $region13: #{_lambda_.11} parent=0 // pred_fallthru
    _
  %v26 = vld [vmem:[#allocation2] sm:$0xff]
  %v27 = vld [vmem:[#allocation2 + $0x8] sm:$0xff]
  %v28 = vld [vmem:[#allocation2 + $0x10] sm:$0xff]
  %v29 = vld [vmem:[#allocation2 + $0x18] sm:$0xff]
  %v30 = vld [vmem:[#allocation2 + $0x20] sm:$0xff]
  %v31 = vld [vmem:[#allocation2 + $0x28] sm:$0xff]
  %v32 = vld [vmem:[#allocation2 + $0x30] sm:$0xff]
  %v33 = vld [vmem:[#allocation2 + $0x38] sm:$0xff]
  %v34 = vld [vmem:[%s0] sm:$0xff]
  %v35 = vld [vmem:[%s0 + $0x8] sm:$0xff]
  %v36 = vld [vmem:[%s0 + $0x10] sm:$0xff]
  %v37 = vld [vmem:[%s0 + $0x18] sm:$0xff]
  %v38 = vld [vmem:[%s0 + $0x20] sm:$0xff]
  %v39 = vld [vmem:[%s0 + $0x28] sm:$0xff]
  %v40 = vld [vmem:[%s0 + $0x30] sm:$0xff]
  %v41 = vld [vmem:[%s0 + $0x38] sm:$0xff]
  %v42 = vld [vmem:[%s1] sm:$0xf]
  %v43 = vld [vmem:[%s1 + $0x4] sm:$0xf]
  %v44 = vld [vmem:[%s1 + $0x8] sm:$0xf]
  %v45 = vld [vmem:[%s1 + $0xc] sm:$0xf]
  %v46 = vld [vmem:[%s1 + $0x10] sm:$0xf]
  %v47 = vld [vmem:[%s1 + $0x14] sm:$0xf]
  %v48 = vld [vmem:[%s1 + $0x18] sm:$0xf]
  %v49 = vld [vmem:[%s1 + $0x1c] sm:$0xf]
  %v50 = vld [vmem:[%s1 + $0x20] sm:$0xf]
  %v51 = vld [vmem:[%s1 + $0x24] sm:$0xf]
  %v52 = vld [vmem:[%s1 + $0x28] sm:$0xf]
  %v53 = vld [vmem:[%s1 + $0x2c] sm:$0xf]
  %v54 = vld [vmem:[%s1 + $0x30] sm:$0xf]
  %v55 = vld [vmem:[%s1 + $0x34] sm:$0xf]
  %v56 = vld [vmem:[%s1 + $0x38] sm:$0xf]
  %v57 = vld [vmem:[%s1 + $0x3c] sm:$0xf]
  %v58 = vld [vmem:[%s1 + $0x40] sm:$0xf]
  %v59 = vld [vmem:[%s1 + $0x44] sm:$0xf]
  %v60 = vld [vmem:[%s1 + $0x48] sm:$0xf]
  %v61 = vld [vmem:[%s1 + $0x4c] sm:$0xf]
  %v62 = vld [vmem:[%s1 + $0x50] sm:$0xf]
  %v63 = vld [vmem:[%s1 + $0x54] sm:$0xf]
  %v64 = vld [vmem:[%s1 + $0x58] sm:$0xf]
  %v65 = vld [vmem:[%s1 + $0x5c] sm:$0xf]
  %v66 = vld [vmem:[%s1 + $0x60] sm:$0xf]
  %v67 = vld [vmem:[%s1 + $0x64] sm:$0xf]
  %v68 = vld [vmem:[%s1 + $0x68] sm:$0xf]
  %v69 = vld [vmem:[%s1 + $0x6c] sm:$0xf]
  %v70 = vld [vmem:[%s1 + $0x70] sm:$0xf]
  %v71 = vld [vmem:[%s1 + $0x74] sm:$0xf]
  %v72 = vld [vmem:[%s1 + $0x78] sm:$0xf]
  %v73 = vld [vmem:[%s1 + $0x7c] sm:$0xf]
  %v82 = vunpack.c.l.b16 %v34
  %v83 = vunpack.c.h.b16 %v34
  %v84 = vunpack.c.l.b16 %v35
  %v85 = vunpack.c.h.b16 %v35
  %v86 = vunpack.c.l.b16 %v36
  %v87 = vunpack.c.h.b16 %v36
  %v88 = vunpack.c.l.b16 %v37
  %v89 = vunpack.c.h.b16 %v37
  %v90 = vunpack.c.l.b16 %v38
  %v91 = vunpack.c.h.b16 %v38
  %v92 = vunpack.c.l.b16 %v39
  %v93 = vunpack.c.h.b16 %v39
  %v94 = vunpack.c.l.b16 %v40
  %v95 = vunpack.c.h.b16 %v40
  %v96 = vunpack.c.l.b16 %v41
  %v97 = vunpack.c.h.b16 %v41
  %v98 = vpack.c.b16 %v84, %v82
  %v99 = vpack.c.b16 %v85, %v83
  %v100 = vpack.c.b16 %v88, %v86
  %v101 = vpack.c.b16 %v89, %v87
  %v102 = vpack.c.b16 %v92, %v90
  %v103 = vpack.c.b16 %v93, %v91
  %v104 = vpack.c.b16 %v96, %v94
  %v105 = vpack.c.b16 %v97, %v95
  %v146 = vunpack.c.l.b16 %v42
  %v147 = vunpack.c.l.b16 %v43
  %v148 = vunpack.c.l.b16 %v44
  %v149 = vunpack.c.l.b16 %v45
  %v150 = vunpack.c.l.b16 %v46
  %v151 = vunpack.c.l.b16 %v47
  %v152 = vunpack.c.l.b16 %v48
  %v153 = vunpack.c.l.b16 %v49
  %v154 = vunpack.c.l.b16 %v50
  %v155 = vunpack.c.l.b16 %v51
  %v156 = vunpack.c.l.b16 %v52
  %v157 = vunpack.c.l.b16 %v53
  %v158 = vunpack.c.l.b16 %v54
  %v159 = vunpack.c.l.b16 %v55
  %v160 = vunpack.c.l.b16 %v56
  %v161 = vunpack.c.l.b16 %v57
  %v162 = vunpack.c.l.b16 %v58
  %v163 = vunpack.c.l.b16 %v59
  %v164 = vunpack.c.l.b16 %v60
  %v165 = vunpack.c.l.b16 %v61
  %v166 = vunpack.c.l.b16 %v62
  %v167 = vunpack.c.l.b16 %v63
  %v168 = vunpack.c.l.b16 %v64
  %v169 = vunpack.c.l.b16 %v65
  %v170 = vunpack.c.l.b16 %v66
  %v171 = vunpack.c.l.b16 %v67
  %v172 = vunpack.c.l.b16 %v68
  %v173 = vunpack.c.l.b16 %v69
  %v174 = vunpack.c.l.b16 %v70
  %v175 = vunpack.c.l.b16 %v71
  %v176 = vunpack.c.l.b16 %v72
  %v177 = vunpack.c.l.b16 %v73
  %v178 = vpack.c.b16 %v147, %v146
  %v179 = vpack.c.b16 %v149, %v148
  %v180 = vpack.c.b16 %v151, %v150
  %v181 = vpack.c.b16 %v153, %v152
  %v182 = vpack.c.b16 %v155, %v154
  %v183 = vpack.c.b16 %v157, %v156
  %v184 = vpack.c.b16 %v159, %v158
  %v185 = vpack.c.b16 %v161, %v160
  %v186 = vpack.c.b16 %v163, %v162
  %v187 = vpack.c.b16 %v165, %v164
  %v188 = vpack.c.b16 %v167, %v166
  %v189 = vpack.c.b16 %v169, %v168
  %v190 = vpack.c.b16 %v171, %v170
  %v191 = vpack.c.b16 %v173, %v172
  %v192 = vpack.c.b16 %v175, %v174
  %v193 = vpack.c.b16 %v177, %v176
  %210 = vmatprep.subr.bf16.mxu0 0
  %211 = vmatpush1.bf16.msra.mxu0 %v178
  %212 = vmatprep.subr.bf16.mxu0 0
  %213 = vmatpush1.bf16.msra.mxu0 %v179
  %214 = vmatprep.subr.bf16.mxu0 0
  %215 = vmatpush1.bf16.msra.mxu0 %v180
  %216 = vmatprep.subr.bf16.mxu0 0
  %217 = vmatpush1.bf16.msra.mxu0 %v181
  %218 = vmatprep.subr.bf16.mxu0 0
  %219 = vmatpush1.bf16.msra.mxu0 %v182
  %220 = vmatprep.subr.bf16.mxu0 0
  %221 = vmatpush1.bf16.msra.mxu0 %v183
  %222 = vmatprep.subr.bf16.mxu0 0
  %223 = vmatpush1.bf16.msra.mxu0 %v184
  %224 = vmatprep.subr.bf16.mxu0 0
  %225 = vmatpush1.bf16.msra.mxu0 %v185
  %226 = vmatprep.subr.bf16.mxu0 0
  %227 = vmatpush1.bf16.msra.mxu0 %v186
  %228 = vmatprep.subr.bf16.mxu0 0
  %229 = vmatpush1.bf16.msra.mxu0 %v187
  %230 = vmatprep.subr.bf16.mxu0 0
  %231 = vmatpush1.bf16.msra.mxu0 %v188
  %232 = vmatprep.subr.bf16.mxu0 0
  %233 = vmatpush1.bf16.msra.mxu0 %v189
  %234 = vmatprep.subr.bf16.mxu0 0
  %235 = vmatpush1.bf16.msra.mxu0 %v190
  %236 = vmatprep.subr.bf16.mxu0 0
  %237 = vmatpush1.bf16.msra.mxu0 %v191
  %238 = vmatprep.subr.bf16.mxu0 0
  %239 = vmatpush1.bf16.msra.mxu0 %v192
  %240 = vmatprep.subr.bf16.mxu0 0
  %241 = vmatpush1.bf16.msra.mxu0 %v193
  %242 = vmatprep.mubr.bf16.mxu0 %v99
  %243 = vmatmul.mubr.bf16.gmra.mrb[0].mxu0 %v98
  %v244 = vpop.f32.mrb[0].mxu0
  %v245 = vadd.f32 0.0, %v244
  %v246 = vpop.f32.mrb[0].mxu0
  %v247 = vpop.f32.mrb[0].mxu0
  %v248 = vadd.f32 0.0, %v247
  %v249 = vpop.f32.mrb[0].mxu0
  %250 = vmatprep.mubr.bf16.mxu0 %v101
  %251 = vmatmul.mubr.bf16.gmra.mrb[0].mxu0 %v100
  %v252 = vpop.f32.mrb[0].mxu0
  %v253 = vadd.f32 0.0, %v252
  %v254 = vpop.f32.mrb[0].mxu0
  %v255 = vpop.f32.mrb[0].mxu0
  %v256 = vadd.f32 0.0, %v255
  %v257 = vpop.f32.mrb[0].mxu0
  %258 = vmatprep.mubr.bf16.mxu0 %v103
  %259 = vmatmul.mubr.bf16.gmra.mrb[0].mxu0 %v102
  %v260 = vpop.f32.mrb[0].mxu0
  %v261 = vadd.f32 0.0, %v260
  %v262 = vpop.f32.mrb[0].mxu0
  %v263 = vpop.f32.mrb[0].mxu0
  %v264 = vadd.f32 0.0, %v263
  %v265 = vpop.f32.mrb[0].mxu0
  %266 = vmatprep.mubr.bf16.mxu0 %v105
  %267 = vmatmul.mubr.bf16.gmra.mrb[0].mxu0 %v104
  %v268 = vpop.f32.mrb[0].mxu0
  %v269 = vadd.f32 0.0, %v268
  %v270 = vpop.f32.mrb[0].mxu0
  %v271 = vpop.f32.mrb[0].mxu0
  %v272 = vadd.f32 0.0, %v271
  %v273 = vpop.f32.mrb[0].mxu0
  %274 = vdwg.mxu0
  %v275 = vadd.f32 %v26, %v245
  %v276 = vadd.f32 %v27, %v248
  %v277 = vadd.f32 %v28, %v253
  %v278 = vadd.f32 %v29, %v256
  %v279 = vadd.f32 %v30, %v261
  %v280 = vadd.f32 %v31, %v264
  %v281 = vadd.f32 %v32, %v269
  %v282 = vadd.f32 %v33, %v272
  %283 = vst [vmem:[#allocation2] sm:$0xff] %v275
  %284 = vst [vmem:[#allocation2 + $0x8] sm:$0xff] %v276
  %285 = vst [vmem:[#allocation2 + $0x10] sm:$0xff] %v277
  %286 = vst [vmem:[#allocation2 + $0x18] sm:$0xff] %v278
  %287 = vst [vmem:[#allocation2 + $0x20] sm:$0xff] %v279
  %288 = vst [vmem:[#allocation2 + $0x28] sm:$0xff] %v280
  %289 = vst [vmem:[#allocation2 + $0x30] sm:$0xff] %v281
  %290 = vst [vmem:[#allocation2 + $0x38] sm:$0xff] %v282
  // Predicated region
  $region14: #{_lambda_.11} parent=0 // pred_check
    %p291 = pneg %p14
  $region15: #{_lambda_.11} parent=0 // pred_check_branch
    %293 = sbr.rel (%p291) target = $region17
  $region16: #{_lambda_.11} parent=0 // pred_region
    %v294 = vld [vmem:[#allocation2] sm:$0xff]
    %v295 = vld [vmem:[#allocation2 + $0x8] sm:$0xff]
    %v296 = vld [vmem:[#allocation2 + $0x10] sm:$0xff]
    %v297 = vld [vmem:[#allocation2 + $0x18] sm:$0xff]
    %v298 = vld [vmem:[#allocation2 + $0x20] sm:$0xff]
    %v299 = vld [vmem:[#allocation2 + $0x28] sm:$0xff]
    %v300 = vld [vmem:[#allocation2 + $0x30] sm:$0xff]
    %v301 = vld [vmem:[#allocation2 + $0x38] sm:$0xff]
    %302 = vst [vmem:[%s2] sm:$0xff] %v294
    %303 = vst [vmem:[%s2 + $0x8] sm:$0xff] %v295
    %304 = vst [vmem:[%s2 + $0x10] sm:$0xff] %v296
    %305 = vst [vmem:[%s2 + $0x18] sm:$0xff] %v297
    %306 = vst [vmem:[%s2 + $0x20] sm:$0xff] %v298
    %307 = vst [vmem:[%s2 + $0x28] sm:$0xff] %v299
    %308 = vst [vmem:[%s2 + $0x30] sm:$0xff] %v300
    %309 = vst [vmem:[%s2 + $0x38] sm:$0xff] %v301
    %v310 = vadd.f32 %v294, %v295
    %v311 = vadd.f32 %v310, %v296
    %v312 = vadd.f32 %v311, %v297
    %v313 = vadd.f32 %v312, %v298
    %v314 = vadd.f32 %v313, %v299
    %v315 = vadd.f32 %v314, %v300
    %v316 = vadd.f32 %v315, %v301
    %v317 = vrot.slane %v316, 4
    %v318 = vadd.f32 %v316, %v317
    %v319 = vrot.slane %v318, 2
    %v320 = vadd.f32 %v318, %v319
    %v321 = vrot.slane %v320, 1
    %v322 = vadd.f32 %v320, %v321
    %v323 = vmul.f32 %v294, %v294
    %v324 = vmul.f32 %v295, %v295
    %v325 = vmul.f32 %v296, %v296
    %v326 = vmul.f32 %v297, %v297
    %v327 = vmul.f32 %v298, %v298
    %v328 = vmul.f32 %v299, %v299
    %v329 = vmul.f32 %v300, %v300
    %v330 = vmul.f32 %v301, %v301
    %v331 = vadd.f32 %v323, %v324
    %v332 = vadd.f32 %v331, %v325
    %v333 = vadd.f32 %v332, %v326
    %v334 = vadd.f32 %v333, %v327
    %v335 = vadd.f32 %v334, %v328
    %v336 = vadd.f32 %v335, %v329
    %v337 = vadd.f32 %v336, %v330
    %v338 = vrot.slane %v337, 4
    %v339 = vadd.f32 %v337, %v338
    %v340 = vrot.slane %v339, 2
    %v341 = vadd.f32 %v339, %v340
    %v342 = vrot.slane %v341, 1
    %v343 = vadd.f32 %v341, %v342
    %v344 = vlaneseq
    %v345 = vshrl.u32 %v344, 7
    %vm346 = vcmp.eq.s32.totalorder %v345, 0
    %vm347 = vcmp.eq.s32.totalorder %v345, 1
    %v348 = vsel %vm347, %v343, 0.0
    %v349 = vsel %vm346, %v322, %v348
    %350 = vst [vmem:[%s3] sm:$0xff] %v349
  $region17: #{_lambda_.11} parent=0 // pred_fallthru
    _
  // Predicated region
  $region18: #{_lambda_.11} parent=0 // pred_check
    _
  $region19: #{_lambda_.11} parent=0 // pred_check_branch
    %352 = sbr.rel (0) target = $region21
  $region20: #{_lambda_.11} parent=0 // pred_region
    _
  $region21: #{_lambda_.11} parent=0 // pred_fallthru
    _
  // Predicated region
  $region22: #{_lambda_.11} parent=0 // pred_check
    _
  $region23: #{_lambda_.11} parent=0 // pred_check_branch
    %354 = sbr.rel (0) target = $region25
  $region24: #{_lambda_.11} parent=0 // pred_region
    _
  $region25: #{_lambda_.11} parent=0 // pred_fallthru
    _
  // Predicated region
  $region26: #{_lambda_.11} parent=0 // pred_check
    _
  $region27: #{_lambda_.11} parent=0 // pred_check_branch
    %356 = sbr.rel (0) target = $region29
  $region28: #{_lambda_.11} parent=0 // pred_region
    _
  $region29: #{_lambda_.11} parent=0 // pred_fallthru
    _
  // Predicated region
  $region30: #{_lambda_.11} parent=0 // pred_check
    _
  $region31: #{_lambda_.11} parent=0 // pred_check_branch
    %358 = sbr.rel (0) target = $region33
  $region32: #{_lambda_.11} parent=0 // pred_region
    _
  $region33: #{_lambda_.11} parent=0 // pred_fallthru
    _

// kernel: _lambda_.12
$region0: #{_lambda_.12}
  #allocation0 [shape = 'u32[]', space=smem, size = 0x4, offset = 0x4, fixed_abs, tag = 'smem constant byte address 0x4 - core index']
  #allocation1 [shape = 'u32[144,128]{1,0:T(1,128)}', space=vmem, size = 0x12000, scoped, tag = 'internal scratch']
  %s0 = inlined_call_operand.vmem [shape: f32[64,128], index: 0, kind: input, shape index: {}]
  %s1 = inlined_call_operand.vmem [shape: f32[1,128], index: 1, kind: input, shape index: {}]
  %s2 = inlined_call_operand.vmem [shape: f32[1,128], index: 2, kind: input, shape index: {}]
  %s3 = inlined_call_operand.vmem [shape: f32[64,128], index: 3, kind: output, shape index: {}]
  %s4 = sld [smem:[#allocation0]]
  $region22: #{_lambda_.12} parent=0
    _
  %s6 = ssub.s32 1, %s4
  %s7 = scalar_select 0, %s6, %s4
  // Predicated region
  $region2: #{_lambda_.12} parent=0 // pred_check
    _
  $region3: #{_lambda_.12} parent=0 // pred_check_branch
    %9 = sbr.rel (0) target = $region5
  $region4: #{_lambda_.12} parent=0 // pred_region
    _
  $region5: #{_lambda_.12} parent=0 // pred_fallthru
    _
  // Predicated region
  $region6: #{_lambda_.12} parent=0 // pred_check
    _
  $region7: #{_lambda_.12} parent=0 // pred_check_branch
    %11 = sbr.rel (0) target = $region9
  $region8: #{_lambda_.12} parent=0 // pred_region
    _
  $region9: #{_lambda_.12} parent=0 // pred_fallthru
    _
  // Predicated region
  $region10: #{_lambda_.12} parent=0 // pred_check
    _
  $region11: #{_lambda_.12} parent=0 // pred_check_branch
    %13 = sbr.rel (0) target = $region13
  $region12: #{_lambda_.12} parent=0 // pred_region
    _
  $region13: #{_lambda_.12} parent=0 // pred_fallthru
    _
  %v14 = vld [vmem:[%s0] sm:$0xff]
  %v15 = vld [vmem:[%s0 + $0x8] sm:$0xff]
  %v16 = vld [vmem:[%s0 + $0x10] sm:$0xff]
  %v17 = vld [vmem:[%s0 + $0x18] sm:$0xff]
  %v18 = vld [vmem:[%s0 + $0x20] sm:$0xff]
  %v19 = vld [vmem:[%s0 + $0x28] sm:$0xff]
  %v20 = vld [vmem:[%s0 + $0x30] sm:$0xff]
  %v21 = vld [vmem:[%s0 + $0x38] sm:$0xff]
  %v22 = vld [vmem:[%s1] sm:$0x1]
  %v24 = vlaneseq
  %v25 = vshrl.u32 %v24, 7
  %v26 = vsub.s32 0, %v25
  %v27 = vrot.slane %v22, %v26
  %v29 = vmul.f32 %v14, %v27
  %v30 = vmul.f32 %v15, %v27
  %v31 = vmul.f32 %v16, %v27
  %v32 = vmul.f32 %v17, %v27
  %v33 = vmul.f32 %v18, %v27
  %v34 = vmul.f32 %v19, %v27
  %v35 = vmul.f32 %v20, %v27
  %v36 = vmul.f32 %v21, %v27
  %v37 = vld [vmem:[%s2] sm:$0x1]
  %v39 = vlaneseq
  %v40 = vshrl.u32 %v39, 7
  %v41 = vsub.s32 0, %v40
  %v42 = vrot.slane %v37, %v41
  %v44 = vadd.f32 %v29, %v42
  %v45 = vadd.f32 %v30, %v42
  %v46 = vadd.f32 %v31, %v42
  %v47 = vadd.f32 %v32, %v42
  %v48 = vadd.f32 %v33, %v42
  %v49 = vadd.f32 %v34, %v42
  %v50 = vadd.f32 %v35, %v42
  %v51 = vadd.f32 %v36, %v42
  %vm52 = vcmp.ge.f32.partialorder %v44, 0.0
  %vm53 = vcmp.ge.f32.partialorder %v45, 0.0
  %vm54 = vcmp.ge.f32.partialorder %v46, 0.0
  %vm55 = vcmp.ge.f32.partialorder %v47, 0.0
  %vm56 = vcmp.ge.f32.partialorder %v48, 0.0
  %vm57 = vcmp.ge.f32.partialorder %v49, 0.0
  %vm58 = vcmp.ge.f32.partialorder %v50, 0.0
  %vm59 = vcmp.ge.f32.partialorder %v51, 0.0
  %v60 = vmul.f32 %v44, 0.2
  %v61 = vmul.f32 %v45, 0.2
  %v62 = vmul.f32 %v46, 0.2
  %v63 = vmul.f32 %v47, 0.2
  %v64 = vmul.f32 %v48, 0.2
  %v65 = vmul.f32 %v49, 0.2
  %v66 = vmul.f32 %v50, 0.2
  %v67 = vmul.f32 %v51, 0.2
  %v68 = vsel %vm52, %v44, %v60
  %v69 = vsel %vm53, %v45, %v61
  %v70 = vsel %vm54, %v46, %v62
  %v71 = vsel %vm55, %v47, %v63
  %v72 = vsel %vm56, %v48, %v64
  %v73 = vsel %vm57, %v49, %v65
  %v74 = vsel %vm58, %v50, %v66
  %v75 = vsel %vm59, %v51, %v67
  %76 = vst [vmem:[%s3] sm:$0xff] %v68
  %77 = vst [vmem:[%s3 + $0x8] sm:$0xff] %v69
  %78 = vst [vmem:[%s3 + $0x10] sm:$0xff] %v70
  %79 = vst [vmem:[%s3 + $0x18] sm:$0xff] %v71
  %80 = vst [vmem:[%s3 + $0x20] sm:$0xff] %v72
  %81 = vst [vmem:[%s3 + $0x28] sm:$0xff] %v73
  %82 = vst [vmem:[%s3 + $0x30] sm:$0xff] %v74
  %83 = vst [vmem:[%s3 + $0x38] sm:$0xff] %v75
  // Predicated region
  $region14: #{_lambda_.12} parent=0 // pred_check
    _
  $region15: #{_lambda_.12} parent=0 // pred_check_branch
    %85 = sbr.rel (0) target = $region17
  $region16: #{_lambda_.12} parent=0 // pred_region
    _
  $region17: #{_lambda_.12} parent=0 // pred_fallthru
    _
  // Predicated region
  $region18: #{_lambda_.12} parent=0 // pred_check
    _
  $region19: #{_lambda_.12} parent=0 // pred_check_branch
    %87 = sbr.rel (0) target = $region21
  $region20: #{_lambda_.12} parent=0 // pred_region
    _
  $region21: #{_lambda_.12} parent=0 // pred_fallthru
    _

// kernel: _lambda_.14
$region0: #{_lambda_.14}
  #allocation0 [shape = 'u32[]', space=smem, size = 0x4, offset = 0x4, fixed_abs, tag = 'smem constant byte address 0x4 - core index']
  #allocation1 [shape = 'u32[144,128]{1,0:T(1,128)}', space=vmem, size = 0x12000, scoped, tag = 'internal scratch']
  %s0 = inlined_call_operand.vmem [shape: f32[16,128], index: 0, kind: input, shape index: {}]
  %s1 = inlined_call_operand.vmem [shape: f32[1,128], index: 1, kind: input, shape index: {}]
  %s2 = inlined_call_operand.vmem [shape: f32[1,128], index: 2, kind: input, shape index: {}]
  %s3 = inlined_call_operand.vmem [shape: f32[16,128], index: 3, kind: output, shape index: {}]
  %s4 = sld [smem:[#allocation0]]
  $region22: #{_lambda_.14} parent=0
    _
  %s6 = ssub.s32 1, %s4
  %s7 = scalar_select 0, %s6, %s4
  // Predicated region
  $region2: #{_lambda_.14} parent=0 // pred_check
    _
  $region3: #{_lambda_.14} parent=0 // pred_check_branch
    %9 = sbr.rel (0) target = $region5
  $region4: #{_lambda_.14} parent=0 // pred_region
    _
  $region5: #{_lambda_.14} parent=0 // pred_fallthru
    _
  // Predicated region
  $region6: #{_lambda_.14} parent=0 // pred_check
    _
  $region7: #{_lambda_.14} parent=0 // pred_check_branch
    %11 = sbr.rel (0) target = $region9
  $region8: #{_lambda_.14} parent=0 // pred_region
    _
  $region9: #{_lambda_.14} parent=0 // pred_fallthru
    _
  // Predicated region
  $region10: #{_lambda_.14} parent=0 // pred_check
    _
  $region11: #{_lambda_.14} parent=0 // pred_check_branch
    %13 = sbr.rel (0) target = $region13
  $region12: #{_lambda_.14} parent=0 // pred_region
    _
  $region13: #{_lambda_.14} parent=0 // pred_fallthru
    _
  %v14 = vld [vmem:[%s0] sm:$0xff]
  %v15 = vld [vmem:[%s0 + $0x8] sm:$0xff]
  %v16 = vld [vmem:[%s1] sm:$0x1]
  %v18 = vlaneseq
  %v19 = vshrl.u32 %v18, 7
  %v20 = vsub.s32 0, %v19
  %v21 = vrot.slane %v16, %v20
  %v23 = vmul.f32 %v14, %v21
  %v24 = vmul.f32 %v15, %v21
  %v25 = vld [vmem:[%s2] sm:$0x1]
  %v27 = vlaneseq
  %v28 = vshrl.u32 %v27, 7
  %v29 = vsub.s32 0, %v28
  %v30 = vrot.slane %v25, %v29
  %v32 = vadd.f32 %v23, %v30
  %v33 = vadd.f32 %v24, %v30
  %vm34 = vcmp.ge.f32.partialorder %v32, 0.0
  %vm35 = vcmp.ge.f32.partialorder %v33, 0.0
  %v36 = vmul.f32 %v32, 0.2
  %v37 = vmul.f32 %v33, 0.2
  %v38 = vsel %vm34, %v32, %v36
  %v39 = vsel %vm35, %v33, %v37
  %40 = vst [vmem:[%s3] sm:$0xff] %v38
  %41 = vst [vmem:[%s3 + $0x8] sm:$0xff] %v39
  // Predicated region
  $region14: #{_lambda_.14} parent=0 // pred_check
    _
  $region15: #{_lambda_.14} parent=0 // pred_check_branch
    %43 = sbr.rel (0) target = $region17
  $region16: #{_lambda_.14} parent=0 // pred_region
    _
  $region17: #{_lambda_.14} parent=0 // pred_fallthru
    _
  // Predicated region
  $region18: #{_lambda_.14} parent=0 // pred_check
    _
  $region19: #{_lambda_.14} parent=0 // pred_check_branch
    %45 = sbr.rel (0) target = $region21
  $region20: #{_lambda_.14} parent=0 // pred_region
    _
  $region21: #{_lambda_.14} parent=0 // pred_fallthru
    _

// kernel: _lambda_.13
$region0: #{_lambda_.13}
  #allocation0 [shape = 'u32[]', space=smem, size = 0x4, offset = 0x4, fixed_abs, tag = 'smem constant byte address 0x4 - core index']
  #allocation1 [shape = 'u32[144,128]{1,0:T(1,128)}', space=vmem, size = 0x12000, scoped, tag = 'internal scratch']
  #allocation2 [shape = 'f32[16,128]{1,0:T(8,128)}', space=vmem, size = 0x2000, scoped, tag = 'scratch operand']
  %s0 = inlined_call_operand.vmem [shape: bf16[16,512], index: 0, kind: input, shape index: {}]
  %s1 = inlined_call_operand.vmem [shape: bf16[512,128], index: 1, kind: input, shape index: {}]
  %s2 = inlined_call_operand.vmem [shape: f32[16,128], index: 2, kind: output, shape index: {0}]
  %s3 = inlined_call_operand.vmem [shape: f32[8,128], index: 3, kind: output, shape index: {1}]
  %4 = xla_tuple %s2, %s3
  %s5 = sld [smem:[#allocation0]]
  $region34: #{_lambda_.13} parent=0
    _
  %s7 = ssub.s32 1, %s5
  %s8 = scalar_select 0, %s7, %s5
  // Predicated region
  $region2: #{_lambda_.13} parent=0 // pred_check
    _
  $region3: #{_lambda_.13} parent=0 // pred_check_branch
    %10 = sbr.rel (0) target = $region5
  $region4: #{_lambda_.13} parent=0 // pred_region
    _
  $region5: #{_lambda_.13} parent=0 // pred_fallthru
    _
  // Predicated region
  $region6: #{_lambda_.13} parent=0 // pred_check
    _
  $region7: #{_lambda_.13} parent=0 // pred_check_branch
    %12 = sbr.rel (0) target = $region9
  $region8: #{_lambda_.13} parent=0 // pred_region
    _
  $region9: #{_lambda_.13} parent=0 // pred_fallthru
    _
  %p14 = scmp.eq.s32.totalorder 0, 0
  // Predicated region
  $region10: #{_lambda_.13} parent=0 // pred_check
    %p15 = pneg %p14
  $region11: #{_lambda_.13} parent=0 // pred_check_branch
    %17 = sbr.rel (%p15) target = $region13
  $region12: #{_lambda_.13} parent=0 // pred_region
    %18 = vst [vmem:[#allocation2] sm:$0xff] 0.0
    %19 = vst [vmem:[#allocation2 + $0x8] sm:$0xff] 0.0
  $region13: #{_lambda_.13} parent=0 // pred_fallthru
    _
  %v20 = vld [vmem:[#allocation2] sm:$0xff]
  %v21 = vld [vmem:[#allocation2 + $0x8] sm:$0xff]
  %v22 = vld [vmem:[%s0] sm:$0xff]
  %v23 = vld [vmem:[%s0 + $0x8] sm:$0xff]
  %v24 = vld [vmem:[%s0 + $0x10] sm:$0xff]
  %v25 = vld [vmem:[%s0 + $0x18] sm:$0xff]
  %v26 = vld [vmem:[%s1] sm:$0xf]
  %v27 = vld [vmem:[%s1 + $0x4] sm:$0xf]
  %v28 = vld [vmem:[%s1 + $0x8] sm:$0xf]
  %v29 = vld [vmem:[%s1 + $0xc] sm:$0xf]
  %v30 = vld [vmem:[%s1 + $0x10] sm:$0xf]
  %v31 = vld [vmem:[%s1 + $0x14] sm:$0xf]
  %v32 = vld [vmem:[%s1 + $0x18] sm:$0xf]
  %v33 = vld [vmem:[%s1 + $0x1c] sm:$0xf]
  %v34 = vld [vmem:[%s1 + $0x20] sm:$0xf]
  %v35 = vld [vmem:[%s1 + $0x24] sm:$0xf]
  %v36 = vld [vmem:[%s1 + $0x28] sm:$0xf]
  %v37 = vld [vmem:[%s1 + $0x2c] sm:$0xf]
  %v38 = vld [vmem:[%s1 + $0x30] sm:$0xf]
  %v39 = vld [vmem:[%s1 + $0x34] sm:$0xf]
  %v40 = vld [vmem:[%s1 + $0x38] sm:$0xf]
  %v41 = vld [vmem:[%s1 + $0x3c] sm:$0xf]
  %v42 = vld [vmem:[%s1 + $0x40] sm:$0xf]
  %v43 = vld [vmem:[%s1 + $0x44] sm:$0xf]
  %v44 = vld [vmem:[%s1 + $0x48] sm:$0xf]
  %v45 = vld [vmem:[%s1 + $0x4c] sm:$0xf]
  %v46 = vld [vmem:[%s1 + $0x50] sm:$0xf]
  %v47 = vld [vmem:[%s1 + $0x54] sm:$0xf]
  %v48 = vld [vmem:[%s1 + $0x58] sm:$0xf]
  %v49 = vld [vmem:[%s1 + $0x5c] sm:$0xf]
  %v50 = vld [vmem:[%s1 + $0x60] sm:$0xf]
  %v51 = vld [vmem:[%s1 + $0x64] sm:$0xf]
  %v52 = vld [vmem:[%s1 + $0x68] sm:$0xf]
  %v53 = vld [vmem:[%s1 + $0x6c] sm:$0xf]
  %v54 = vld [vmem:[%s1 + $0x70] sm:$0xf]
  %v55 = vld [vmem:[%s1 + $0x74] sm:$0xf]
  %v56 = vld [vmem:[%s1 + $0x78] sm:$0xf]
  %v57 = vld [vmem:[%s1 + $0x7c] sm:$0xf]
  %v58 = vld [vmem:[%s1 + $0x80] sm:$0xf]
  %v59 = vld [vmem:[%s1 + $0x84] sm:$0xf]
  %v60 = vld [vmem:[%s1 + $0x88] sm:$0xf]
  %v61 = vld [vmem:[%s1 + $0x8c] sm:$0xf]
  %v62 = vld [vmem:[%s1 + $0x90] sm:$0xf]
  %v63 = vld [vmem:[%s1 + $0x94] sm:$0xf]
  %v64 = vld [vmem:[%s1 + $0x98] sm:$0xf]
  %v65 = vld [vmem:[%s1 + $0x9c] sm:$0xf]
  %v66 = vld [vmem:[%s1 + $0xa0] sm:$0xf]
  %v67 = vld [vmem:[%s1 + $0xa4] sm:$0xf]
  %v68 = vld [vmem:[%s1 + $0xa8] sm:$0xf]
  %v69 = vld [vmem:[%s1 + $0xac] sm:$0xf]
  %v70 = vld [vmem:[%s1 + $0xb0] sm:$0xf]
  %v71 = vld [vmem:[%s1 + $0xb4] sm:$0xf]
  %v72 = vld [vmem:[%s1 + $0xb8] sm:$0xf]
  %v73 = vld [vmem:[%s1 + $0xbc] sm:$0xf]
  %v74 = vld [vmem:[%s1 + $0xc0] sm:$0xf]
  %v75 = vld [vmem:[%s1 + $0xc4] sm:$0xf]
  %v76 = vld [vmem:[%s1 + $0xc8] sm:$0xf]
  %v77 = vld [vmem:[%s1 + $0xcc] sm:$0xf]
  %v78 = vld [vmem:[%s1 + $0xd0] sm:$0xf]
  %v79 = vld [vmem:[%s1 + $0xd4] sm:$0xf]
  %v80 = vld [vmem:[%s1 + $0xd8] sm:$0xf]
  %v81 = vld [vmem:[%s1 + $0xdc] sm:$0xf]
  %v82 = vld [vmem:[%s1 + $0xe0] sm:$0xf]
  %v83 = vld [vmem:[%s1 + $0xe4] sm:$0xf]
  %v84 = vld [vmem:[%s1 + $0xe8] sm:$0xf]
  %v85 = vld [vmem:[%s1 + $0xec] sm:$0xf]
  %v86 = vld [vmem:[%s1 + $0xf0] sm:$0xf]
  %v87 = vld [vmem:[%s1 + $0xf4] sm:$0xf]
  %v88 = vld [vmem:[%s1 + $0xf8] sm:$0xf]
  %v89 = vld [vmem:[%s1 + $0xfc] sm:$0xf]
  %v94 = vunpack.c.l.b16 %v22
  %v95 = vunpack.c.h.b16 %v22
  %v96 = vunpack.c.l.b16 %v23
  %v97 = vunpack.c.h.b16 %v23
  %v98 = vunpack.c.l.b16 %v24
  %v99 = vunpack.c.h.b16 %v24
  %v100 = vunpack.c.l.b16 %v25
  %v101 = vunpack.c.h.b16 %v25
  %v102 = vpack.c.b16 %v98, %v94
  %v103 = vpack.c.b16 %v99, %v95
  %v104 = vpack.c.b16 %v100, %v96
  %v105 = vpack.c.b16 %v101, %v97
  %v174 = vunpack.c.l.b16 %v26
  %v175 = vunpack.c.l.b16 %v27
  %v176 = vunpack.c.l.b16 %v28
  %v177 = vunpack.c.l.b16 %v29
  %v178 = vunpack.c.l.b16 %v30
  %v179 = vunpack.c.l.b16 %v31
  %v180 = vunpack.c.l.b16 %v32
  %v181 = vunpack.c.l.b16 %v33
  %v182 = vunpack.c.l.b16 %v34
  %v183 = vunpack.c.l.b16 %v35
  %v184 = vunpack.c.l.b16 %v36
  %v185 = vunpack.c.l.b16 %v37
  %v186 = vunpack.c.l.b16 %v38
  %v187 = vunpack.c.l.b16 %v39
  %v188 = vunpack.c.l.b16 %v40
  %v189 = vunpack.c.l.b16 %v41
  %v190 = vunpack.c.l.b16 %v42
  %v191 = vunpack.c.l.b16 %v43
  %v192 = vunpack.c.l.b16 %v44
  %v193 = vunpack.c.l.b16 %v45
  %v194 = vunpack.c.l.b16 %v46
  %v195 = vunpack.c.l.b16 %v47
  %v196 = vunpack.c.l.b16 %v48
  %v197 = vunpack.c.l.b16 %v49
  %v198 = vunpack.c.l.b16 %v50
  %v199 = vunpack.c.l.b16 %v51
  %v200 = vunpack.c.l.b16 %v52
  %v201 = vunpack.c.l.b16 %v53
  %v202 = vunpack.c.l.b16 %v54
  %v203 = vunpack.c.l.b16 %v55
  %v204 = vunpack.c.l.b16 %v56
  %v205 = vunpack.c.l.b16 %v57
  %v206 = vunpack.c.l.b16 %v58
  %v207 = vunpack.c.l.b16 %v59
  %v208 = vunpack.c.l.b16 %v60
  %v209 = vunpack.c.l.b16 %v61
  %v210 = vunpack.c.l.b16 %v62
  %v211 = vunpack.c.l.b16 %v63
  %v212 = vunpack.c.l.b16 %v64
  %v213 = vunpack.c.l.b16 %v65
  %v214 = vunpack.c.l.b16 %v66
  %v215 = vunpack.c.l.b16 %v67
  %v216 = vunpack.c.l.b16 %v68
  %v217 = vunpack.c.l.b16 %v69
  %v218 = vunpack.c.l.b16 %v70
  %v219 = vunpack.c.l.b16 %v71
  %v220 = vunpack.c.l.b16 %v72
  %v221 = vunpack.c.l.b16 %v73
  %v222 = vunpack.c.l.b16 %v74
  %v223 = vunpack.c.l.b16 %v75
  %v224 = vunpack.c.l.b16 %v76
  %v225 = vunpack.c.l.b16 %v77
  %v226 = vunpack.c.l.b16 %v78
  %v227 = vunpack.c.l.b16 %v79
  %v228 = vunpack.c.l.b16 %v80
  %v229 = vunpack.c.l.b16 %v81
  %v230 = vunpack.c.l.b16 %v82
  %v231 = vunpack.c.l.b16 %v83
  %v232 = vunpack.c.l.b16 %v84
  %v233 = vunpack.c.l.b16 %v85
  %v234 = vunpack.c.l.b16 %v86
  %v235 = vunpack.c.l.b16 %v87
  %v236 = vunpack.c.l.b16 %v88
  %v237 = vunpack.c.l.b16 %v89
  %v238 = vpack.c.b16 %v175, %v174
  %v239 = vpack.c.b16 %v177, %v176
  %v240 = vpack.c.b16 %v179, %v178
  %v241 = vpack.c.b16 %v181, %v180
  %v242 = vpack.c.b16 %v183, %v182
  %v243 = vpack.c.b16 %v185, %v184
  %v244 = vpack.c.b16 %v187, %v186
  %v245 = vpack.c.b16 %v189, %v188
  %v246 = vpack.c.b16 %v191, %v190
  %v247 = vpack.c.b16 %v193, %v192
  %v248 = vpack.c.b16 %v195, %v194
  %v249 = vpack.c.b16 %v197, %v196
  %v250 = vpack.c.b16 %v199, %v198
  %v251 = vpack.c.b16 %v201, %v200
  %v252 = vpack.c.b16 %v203, %v202
  %v253 = vpack.c.b16 %v205, %v204
  %v254 = vpack.c.b16 %v207, %v206
  %v255 = vpack.c.b16 %v209, %v208
  %v256 = vpack.c.b16 %v211, %v210
  %v257 = vpack.c.b16 %v213, %v212
  %v258 = vpack.c.b16 %v215, %v214
  %v259 = vpack.c.b16 %v217, %v216
  %v260 = vpack.c.b16 %v219, %v218
  %v261 = vpack.c.b16 %v221, %v220
  %v262 = vpack.c.b16 %v223, %v222
  %v263 = vpack.c.b16 %v225, %v224
  %v264 = vpack.c.b16 %v227, %v226
  %v265 = vpack.c.b16 %v229, %v228
  %v266 = vpack.c.b16 %v231, %v230
  %v267 = vpack.c.b16 %v233, %v232
  %v268 = vpack.c.b16 %v235, %v234
  %v269 = vpack.c.b16 %v237, %v236
  %302 = vmatprep.subr.bf16.mxu0 0
  %303 = vmatpush1.bf16.msra.mxu0 %v238
  %304 = vmatprep.subr.bf16.mxu0 0
  %305 = vmatpush1.bf16.msra.mxu0 %v239
  %306 = vmatprep.subr.bf16.mxu0 0
  %307 = vmatpush1.bf16.msra.mxu0 %v240
  %308 = vmatprep.subr.bf16.mxu0 0
  %309 = vmatpush1.bf16.msra.mxu0 %v241
  %310 = vmatprep.subr.bf16.mxu0 0
  %311 = vmatpush1.bf16.msra.mxu0 %v242
  %312 = vmatprep.subr.bf16.mxu0 0
  %313 = vmatpush1.bf16.msra.mxu0 %v243
  %314 = vmatprep.subr.bf16.mxu0 0
  %315 = vmatpush1.bf16.msra.mxu0 %v244
  %316 = vmatprep.subr.bf16.mxu0 0
  %317 = vmatpush1.bf16.msra.mxu0 %v245
  %318 = vmatprep.subr.bf16.mxu0 0
  %319 = vmatpush1.bf16.msra.mxu0 %v246
  %320 = vmatprep.subr.bf16.mxu0 0
  %321 = vmatpush1.bf16.msra.mxu0 %v247
  %322 = vmatprep.subr.bf16.mxu0 0
  %323 = vmatpush1.bf16.msra.mxu0 %v248
  %324 = vmatprep.subr.bf16.mxu0 0
  %325 = vmatpush1.bf16.msra.mxu0 %v249
  %326 = vmatprep.subr.bf16.mxu0 0
  %327 = vmatpush1.bf16.msra.mxu0 %v250
  %328 = vmatprep.subr.bf16.mxu0 0
  %329 = vmatpush1.bf16.msra.mxu0 %v251
  %330 = vmatprep.subr.bf16.mxu0 0
  %331 = vmatpush1.bf16.msra.mxu0 %v252
  %332 = vmatprep.subr.bf16.mxu0 0
  %333 = vmatpush1.bf16.msra.mxu0 %v253
  %334 = vmatprep.mubr.bf16.mxu0 %v103
  %335 = vmatmul.mubr.bf16.gmra.mrb[0].mxu0 %v102
  %v336 = vpop.f32.mrb[0].mxu0
  %v337 = vadd.f32 0.0, %v336
  %v338 = vpop.f32.mrb[0].mxu0
  %v339 = vpop.f32.mrb[0].mxu0
  %v340 = vadd.f32 0.0, %v339
  %v341 = vpop.f32.mrb[0].mxu0
  %342 = vdwg.mxu0
  %343 = vmatprep.subr.bf16.mxu0 0
  %344 = vmatpush1.bf16.msra.mxu0 %v254
  %345 = vmatprep.subr.bf16.mxu0 0
  %346 = vmatpush1.bf16.msra.mxu0 %v255
  %347 = vmatprep.subr.bf16.mxu0 0
  %348 = vmatpush1.bf16.msra.mxu0 %v256
  %349 = vmatprep.subr.bf16.mxu0 0
  %350 = vmatpush1.bf16.msra.mxu0 %v257
  %351 = vmatprep.subr.bf16.mxu0 0
  %352 = vmatpush1.bf16.msra.mxu0 %v258
  %353 = vmatprep.subr.bf16.mxu0 0
  %354 = vmatpush1.bf16.msra.mxu0 %v259
  %355 = vmatprep.subr.bf16.mxu0 0
  %356 = vmatpush1.bf16.msra.mxu0 %v260
  %357 = vmatprep.subr.bf16.mxu0 0
  %358 = vmatpush1.bf16.msra.mxu0 %v261
  %359 = vmatprep.subr.bf16.mxu0 0
  %360 = vmatpush1.bf16.msra.mxu0 %v262
  %361 = vmatprep.subr.bf16.mxu0 0
  %362 = vmatpush1.bf16.msra.mxu0 %v263
  %363 = vmatprep.subr.bf16.mxu0 0
  %364 = vmatpush1.bf16.msra.mxu0 %v264
  %365 = vmatprep.subr.bf16.mxu0 0
  %366 = vmatpush1.bf16.msra.mxu0 %v265
  %367 = vmatprep.subr.bf16.mxu0 0
  %368 = vmatpush1.bf16.msra.mxu0 %v266
  %369 = vmatprep.subr.bf16.mxu0 0
  %370 = vmatpush1.bf16.msra.mxu0 %v267
  %371 = vmatprep.subr.bf16.mxu0 0
  %372 = vmatpush1.bf16.msra.mxu0 %v268
  %373 = vmatprep.subr.bf16.mxu0 0
  %374 = vmatpush1.bf16.msra.mxu0 %v269
  %375 = vmatprep.mubr.bf16.mxu0 %v105
  %376 = vmatmul.mubr.bf16.gmra.mrb[0].mxu0 %v104
  %v377 = vpop.f32.mrb[0].mxu0
  %v378 = vadd.f32 %v337, %v377
  %v379 = vpop.f32.mrb[0].mxu0
  %v380 = vpop.f32.mrb[0].mxu0
  %v381 = vadd.f32 %v340, %v380
  %v382 = vpop.f32.mrb[0].mxu0
  %383 = vdwg.mxu0
  %v384 = vadd.f32 %v20, %v378
  %v385 = vadd.f32 %v21, %v381
  %386 = vst [vmem:[#allocation2] sm:$0xff] %v384
  %387 = vst [vmem:[#allocation2 + $0x8] sm:$0xff] %v385
  // Predicated region
  $region14: #{_lambda_.13} parent=0 // pred_check
    %p388 = pneg %p14
  $region15: #{_lambda_.13} parent=0 // pred_check_branch
    %390 = sbr.rel (%p388) target = $region17
  $region16: #{_lambda_.13} parent=0 // pred_region
    %v391 = vld [vmem:[#allocation2] sm:$0xff]
    %v392 = vld [vmem:[#allocation2 + $0x8] sm:$0xff]
    %393 = vst [vmem:[%s2] sm:$0xff] %v391
    %394 = vst [vmem:[%s2 + $0x8] sm:$0xff] %v392
    %v395 = vadd.f32 %v391, %v392
    %v396 = vrot.slane %v395, 4
    %v397 = vadd.f32 %v395, %v396
    %v398 = vrot.slane %v397, 2
    %v399 = vadd.f32 %v397, %v398
    %v400 = vrot.slane %v399, 1
    %v401 = vadd.f32 %v399, %v400
    %v402 = vmul.f32 %v391, %v391
    %v403 = vmul.f32 %v392, %v392
    %v404 = vadd.f32 %v402, %v403
    %v405 = vrot.slane %v404, 4
    %v406 = vadd.f32 %v404, %v405
    %v407 = vrot.slane %v406, 2
    %v408 = vadd.f32 %v406, %v407
    %v409 = vrot.slane %v408, 1
    %v410 = vadd.f32 %v408, %v409
    %v411 = vlaneseq
    %v412 = vshrl.u32 %v411, 7
    %vm413 = vcmp.eq.s32.totalorder %v412, 0
    %vm414 = vcmp.eq.s32.totalorder %v412, 1
    %v415 = vsel %vm414, %v410, 0.0
    %v416 = vsel %vm413, %v401, %v415
    %417 = vst [vmem:[%s3] sm:$0xff] %v416
  $region17: #{_lambda_.13} parent=0 // pred_fallthru
    _
  // Predicated region
  $region18: #{_lambda_.13} parent=0 // pred_check
    _
  $region19: #{_lambda_.13} parent=0 // pred_check_branch
    %419 = sbr.rel (0) target = $region21
  $region20: #{_lambda_.13} parent=0 // pred_region
    _
  $region21: #{_lambda_.13} parent=0 // pred_fallthru
    _
  // Predicated region
  $region22: #{_lambda_.13} parent=0 // pred_check
    _
  $region23: #{_lambda_.13} parent=0 // pred_check_branch
    %421 = sbr.rel (0) target = $region25
  $region24: #{_lambda_.13} parent=0 // pred_region
    _
  $region25: #{_lambda_.13} parent=0 // pred_fallthru
    _
  // Predicated region
  $region26: #{_lambda_.13} parent=0 // pred_check
    _
  $region27: #{_lambda_.13} parent=0 // pred_check_branch
    %423 = sbr.rel (0) target = $region29
  $region28: #{_lambda_.13} parent=0 // pred_region
    _
  $region29: #{_lambda_.13} parent=0 // pred_fallthru
    _
  // Predicated region
  $region30: #{_lambda_.13} parent=0 // pred_check
    _
  $region31: #{_lambda_.13} parent=0 // pred_check_branch
    %425 = sbr.rel (0) target = $region33
  $region32: #{_lambda_.13} parent=0 // pred_region
    _
  $region33: #{_lambda_.13} parent=0 // pred_fallthru
    _

// kernel: _lambda_.15
$region0: #{_lambda_.15}
  #allocation0 [shape = 'u32[]', space=smem, size = 0x4, offset = 0x4, fixed_abs, tag = 'smem constant byte address 0x4 - core index']
  #allocation1 [shape = 'u32[144,128]{1,0:T(1,128)}', space=vmem, size = 0x12000, scoped, tag = 'internal scratch']
  #allocation2 [shape = 'f32[16,128]{1,0:T(8,128)}', space=vmem, size = 0x2000, scoped, tag = 'scratch operand']
  %s0 = inlined_call_operand.vmem [shape: bf16[16,1024], index: 0, kind: input, shape index: {}]
  %s1 = inlined_call_operand.vmem [shape: bf16[1024,128], index: 1, kind: input, shape index: {}]
  %s2 = inlined_call_operand.vmem [shape: f32[16,128], index: 2, kind: output, shape index: {0}]
  %s3 = inlined_call_operand.vmem [shape: f32[8,128], index: 3, kind: output, shape index: {1}]
  %4 = xla_tuple %s2, %s3
  %s5 = sld [smem:[#allocation0]]
  $region80: #{_lambda_.15} parent=0
    _
  %s7 = ssub.s32 1, %s5
  %s8 = scalar_select 0, %s7, %s5
  $region1: #{_lambda_.15} parent=0
    #allocation3 [shape = 'u8[32768]{0}', space=vmem, size = 0x8000, scoped, tag = 'input window, operand 0']
    loop: start=0, step=1, limit=4
    $region2: #{_lambda_.15} parent=1 // loop_pre_header
      _
    $region3: #{_lambda_.15} parent=1 // loop_header
      %s10 = sphi 0, %s14
      %p11 = scmp.ge.s32.totalorder %s10, 4
      %s17 = sphi 0, %s29
      %s18 = sphi 0, %s25
      %s19 = sphi 0, %s17
      %s20 = sphi 0, %s18
      %s21 = sphi 0, %s19
      %s22 = sphi 0, %s20
      %s34 = sphi 0, %s36
      %s37 = sphi 0, %s34
      %s38 = sphi 0, %s37
      %s54 = sphi 0, %s38
      %s60 = sphi 0, %s62
      %s63 = sphi 0, %s60
      %s64 = sphi 0, %s63
      %s80 = sphi 0, %s64
      %s86 = sphi 0, %s88
      %s89 = sphi 0, %s86
      %s90 = sphi 0, %s89
      %s106 = sphi 0, %s90
      %s112 = sphi 0, %s114
      %s115 = sphi 0, %s112
      %s116 = sphi 0, %s115
      %s132 = sphi 0, %s116
    $region4: #{_lambda_.15} parent=1 // loop_header_branch
      %13 = sbr.rel (%p11) target = $region8
    $region5: #{_lambda_.15} parent=1 // loop_body
      %s15 = ssub.s32 %s10, 1
      %s16 = ssub.s32 %s10, 2
      %s23 = sadd.s32 1, %s18
      %p24 = scmp.ge.s32.totalorder %s23, 2
      %s25 = scalar_select %p24, 0, %s23
      %s26 = sadd.s32 1, %s17
      %s27 = scalar_select %p24, %s26, %s17
      %p28 = scmp.ge.s32.totalorder %s27, 1
      %s29 = scalar_select %p28, 0, %s27
      %s30 = ssub.s32 %s17, %s29
      %s31 = ssub.s32 %s18, %s25
      %s32 = sor.u32 %s30, %s31
      %p33 = scmp.eq.s32.totalorder %s32, 0
      %s35 = sadd.s32 %s34, 1
      %s36 = scalar_select %p33, %s34, %s35
      %p39 = pneg %p33
      %p40 = scmp.eq.s32.totalorder %s10, 1
      %p41 = por %p39, %p40
      %p42 = scmp.ne.s32.totalorder %s34, %s37
      %p43 = scmp.eq.s32.totalorder %s10, 0
      %p44 = por %p42, %p43
      %p45 = scmp.ne.s32.totalorder %s34, %s37
      %p46 = scmp.eq.s32.totalorder %s15, 1
      %p47 = por %p45, %p46
      %p48 = scmp.ne.s32.totalorder %s37, %s38
      %p49 = scmp.eq.s32.totalorder %s15, 0
      %p50 = por %p48, %p49
      %p51 = scmp.ne.s32.totalorder %s37, %s38
      %p52 = scmp.eq.s32.totalorder %s16, 1
      %p53 = por %p51, %p52
      %p55 = scmp.ne.s32.totalorder %s38, %s54
      %p56 = scmp.eq.s32.totalorder %s16, 0
      %p57 = por %p55, %p56
      %s58 = ssub.s32 %s18, %s25
      %p59 = scmp.eq.s32.totalorder %s58, 0
      %s61 = sadd.s32 %s60, 1
      %s62 = scalar_select %p59, %s60, %s61
      %p65 = pneg %p59
      %p66 = scmp.eq.s32.totalorder %s10, 1
      %p67 = por %p65, %p66
      %p68 = scmp.ne.s32.totalorder %s60, %s63
      %p69 = scmp.eq.s32.totalorder %s10, 0
      %p70 = por %p68, %p69
      %p71 = scmp.ne.s32.totalorder %s60, %s63
      %p72 = scmp.eq.s32.totalorder %s15, 1
      %p73 = por %p71, %p72
      %p74 = scmp.ne.s32.totalorder %s63, %s64
      %p75 = scmp.eq.s32.totalorder %s15, 0
      %p76 = por %p74, %p75
      %p77 = scmp.ne.s32.totalorder %s63, %s64
      %p78 = scmp.eq.s32.totalorder %s16, 1
      %p79 = por %p77, %p78
      %p81 = scmp.ne.s32.totalorder %s64, %s80
      %p82 = scmp.eq.s32.totalorder %s16, 0
      %p83 = por %p81, %p82
      %s84 = ssub.s32 %s17, %s29
      %p85 = scmp.eq.s32.totalorder %s84, 0
      %s87 = sadd.s32 %s86, 1
      %s88 = scalar_select %p85, %s86, %s87
      %p91 = pneg %p85
      %p92 = scmp.eq.s32.totalorder %s10, 1
      %p93 = por %p91, %p92
      %p94 = scmp.ne.s32.totalorder %s86, %s89
      %p95 = scmp.eq.s32.totalorder %s10, 0
      %p96 = por %p94, %p95
      %p97 = scmp.ne.s32.totalorder %s86, %s89
      %p98 = scmp.eq.s32.totalorder %s15, 1
      %p99 = por %p97, %p98
      %p100 = scmp.ne.s32.totalorder %s89, %s90
      %p101 = scmp.eq.s32.totalorder %s15, 0
      %p102 = por %p100, %p101
      %p103 = scmp.ne.s32.totalorder %s89, %s90
      %p104 = scmp.eq.s32.totalorder %s16, 1
      %p105 = por %p103, %p104
      %p107 = scmp.ne.s32.totalorder %s90, %s106
      %p108 = scmp.eq.s32.totalorder %s16, 0
      %p109 = por %p107, %p108
      %s110 = ssub.s32 %s17, %s29
      %p111 = scmp.eq.s32.totalorder %s110, 0
      %s113 = sadd.s32 %s112, 1
      %s114 = scalar_select %p111, %s112, %s113
      %p117 = pneg %p111
      %p118 = scmp.eq.s32.totalorder %s10, 1
      %p119 = por %p117, %p118
      %p120 = scmp.ne.s32.totalorder %s112, %s115
      %p121 = scmp.eq.s32.totalorder %s10, 0
      %p122 = por %p120, %p121
      %p123 = scmp.ne.s32.totalorder %s112, %s115
      %p124 = scmp.eq.s32.totalorder %s15, 1
      %p125 = por %p123, %p124
      %p126 = scmp.ne.s32.totalorder %s115, %s116
      %p127 = scmp.eq.s32.totalorder %s15, 0
      %p128 = por %p126, %p127
      %p129 = scmp.ne.s32.totalorder %s115, %s116
      %p130 = scmp.eq.s32.totalorder %s16, 1
      %p131 = por %p129, %p130
      %p133 = scmp.ne.s32.totalorder %s116, %s132
      %p134 = scmp.eq.s32.totalorder %s16, 0
      %p135 = por %p133, %p134
      %p136 = scmp.le.s32.totalorder 1, %s10
      %p137 = scmp.lt.s32.totalorder %s10, 3
      %p138 = pnand %p136, %p137
      %p139 = pneg %p138
      // Predicated region
      $region9: #{_lambda_.15} parent=5 // pred_check
        _
      $region10: #{_lambda_.15} parent=5 // pred_check_branch
        %141 = sbr.rel (%p138) target = $region12
      $region11: #{_lambda_.15} parent=5 // pred_region
        %s142 = ssub.s32 %s10, 1
      $region12: #{_lambda_.15} parent=5 // pred_fallthru
        _
      %p143 = scmp.lt.s32.totalorder %s10, 2
      // Predicated region
      $region13: #{_lambda_.15} parent=5 // pred_check
        %p144 = pneg %p143
      $region14: #{_lambda_.15} parent=5 // pred_check_branch
        %146 = sbr.rel (%p144) target = $region16
      $region15: #{_lambda_.15} parent=5 // pred_region
        // Predicated region
        $region17: #{_lambda_.15} parent=15 // pred_check
          %p147 = pneg %p44
        $region18: #{_lambda_.15} parent=15 // pred_check_branch
          %149 = sbr.rel (%p147) target = $region20
        $region19: #{_lambda_.15} parent=15 // pred_region
          %s150 = sand.u32 %s34, 1
          %s151 = sand.u32 %s34, 1
          %s152 = smul.addr %s151, 32
          %s153 = scalar_lea.vmem [#allocation3], %s152
          %s154 = smul.u32 2, %s17
          %s155 = smul.u32 4, %s18
          %s156 = smul.addr %s154, 8
          %s157 = sadd.s32 %s155, %s156
          %s158 = smul.addr %s157, 4
          %s159 = scalar_lea.vmem %s0, %s158
          // Predicated region
          $region21: #{_lambda_.15} parent=19 // pred_check
            _
          $region22: #{_lambda_.15} parent=19 // pred_check_branch
            %161 = sbr.rel (0) target = $region24
          $region23: #{_lambda_.15} parent=19 // pred_region
            // Predicated region
            $region25: #{_lambda_.15} parent=23 // pred_check
              _
            $region26: #{_lambda_.15} parent=23 // pred_check_branch
              %163 = sbr.rel (0) target = $region28
            $region27: #{_lambda_.15} parent=23 // pred_region
              loop: start=0, step=1, limit=1
              $region29: #{_lambda_.15} parent=27 // loop_pre_header
                _
              $region30: #{_lambda_.15} parent=27 // loop_header
                %s165 = sphi 0, %s169
                %p166 = scmp.ge.s32.totalorder %s165, 1
                %s170 = sphi %s159, %s159
                %s171 = sphi %s153, %s153
              $region31: #{_lambda_.15} parent=27 // loop_header_branch
                %168 = sbr.rel (%p166) target = $region35
              $region32: #{_lambda_.15} parent=27 // loop_body
                %v172 = vld [vmem:[%s170] sm:$0xff]
                %173 = vst [vmem:[%s171] sm:$0xff] %v172
                %v174 = vld [vmem:[%s170 + $0x8] sm:$0xff]
                %175 = vst [vmem:[%s171 + $0x8] sm:$0xff] %v174
                %v176 = vld [vmem:[%s170 + $0x20] sm:$0xff]
                %177 = vst [vmem:[%s171 + $0x10] sm:$0xff] %v176
                %v178 = vld [vmem:[%s170 + $0x28] sm:$0xff]
                %179 = vst [vmem:[%s171 + $0x18] sm:$0xff] %v178
              $region33: #{_lambda_.15} parent=27 // loop_footer
                %s169 = sadd.s32 1, %s165
              $region34: #{_lambda_.15} parent=27 // loop_footer_branch
                %164 = sbr.rel target = $region30
              $region35: #{_lambda_.15} parent=27 // loop_exit
                _
            $region28: #{_lambda_.15} parent=23 // pred_fallthru
              _
            // Predicated region
            $region36: #{_lambda_.15} parent=23 // pred_check
              _
            $region37: #{_lambda_.15} parent=23 // pred_check_branch
              %181 = sbr.rel target = $region39
            $region38: #{_lambda_.15} parent=23 // pred_region
              _
            $region39: #{_lambda_.15} parent=23 // pred_fallthru
              _
          $region24: #{_lambda_.15} parent=19 // pred_fallthru
            _
          %182 = vnop
        $region20: #{_lambda_.15} parent=15 // pred_fallthru
          _
        // Predicated region
        $region40: #{_lambda_.15} parent=15 // pred_check
          %p183 = pneg %p70
        $region41: #{_lambda_.15} parent=15 // pred_check_branch
          %185 = sbr.rel (%p183) target = $region43
        $region42: #{_lambda_.15} parent=15 // pred_region
          %s186 = smul.u32 64, %s18
          %p187 = scmp.lt.s32.totalorder %s186, 127
          %s188 = scalar_select %p187, %s186, 127
          %s189 = smul.addr %s188, 4
          %s190 = scalar_lea.vmem %s1, %s189
          %s191 = smul.u32 64, %s18
        $region43: #{_lambda_.15} parent=15 // pred_fallthru
          _
      $region16: #{_lambda_.15} parent=5 // pred_fallthru
        _
      %p192 = scmp.le.s32.totalorder 1, %s10
      %p193 = scmp.lt.s32.totalorder %s10, 3
      %p194 = pnand %p192, %p193
      %p195 = pneg %p194
      // Predicated region
      $region44: #{_lambda_.15} parent=5 // pred_check
        _
      $region45: #{_lambda_.15} parent=5 // pred_check_branch
        %197 = sbr.rel (%p194) target = $region47
      $region46: #{_lambda_.15} parent=5 // pred_region
        %s198 = ssub.s32 %s10, 1
        %s199 = sand.u32 %s37, 1
        %s200 = sand.u32 %s37, 1
        %s201 = smul.addr %s200, 32
        %s202 = scalar_lea.vmem [#allocation3], %s201
        // Predicated region
        $region48: #{_lambda_.15} parent=46 // pred_check
          %p203 = pneg %p50
        $region49: #{_lambda_.15} parent=46 // pred_check_branch
          %205 = sbr.rel (%p203) target = $region51
        $region50: #{_lambda_.15} parent=46 // pred_region
          _
        $region51: #{_lambda_.15} parent=46 // pred_fallthru
          _
        %s206 = sand.u32 %s37, 1
        %s207 = sand.u32 %s37, 1
        %s208 = smul.addr %s207, 32
        %s209 = scalar_lea.vmem [#allocation3], %s208
        %p210 = pneg %p50
        %p211 = pneg %p47
        %s212 = smul.u32 64, %s20
        %p213 = scmp.lt.s32.totalorder %s212, 127
        %s214 = scalar_select %p213, %s212, 127
        %s215 = smul.addr %s214, 4
        %s216 = scalar_lea.vmem %s1, %s215
        %p217 = pneg %p76
        %p218 = pneg %p73
        %p219 = pneg %p102
        %p220 = pneg %p99
        %s221 = smul.u32 2, %s19
        %p222 = scmp.lt.s32.totalorder %s221, 1
        %s223 = scalar_select %p222, %s221, 1
        %s224 = smul.addr %s223, 8
        %s225 = scalar_lea.vmem %s2, %s224
        %p226 = pneg %p128
        %p227 = pneg %p125
        %p228 = scmp.lt.s32.totalorder %s19, 0
        %s229 = scalar_select %p228, %s19, 0
        %s230 = smul.addr %s229, 8
        %s231 = scalar_lea.vmem %s3, %s230
        %s232 = smul.u32 2, %s19
        %s233 = smul.u32 4, %s20
        %s234 = smul.u32 64, %s20
        %p235 = scmp.lt.s32.totalorder %s234, 127
        %s236 = scalar_select %p235, %s234, 127
        %s237 = smul.addr %s236, 4
        %s238 = scalar_lea.vmem %s1, %s237
        %s239 = smul.u32 64, %s20
        %s240 = smul.u32 2, %s19
        %p241 = scmp.lt.s32.totalorder %s240, 1
        %s242 = scalar_select %p241, %s240, 1
        %s243 = smul.addr %s242, 8
        %s244 = scalar_lea.vmem %s2, %s243
        %s245 = smul.u32 2, %s19
        %p246 = scmp.lt.s32.totalorder %s19, 0
        %s247 = scalar_select %p246, %s19, 0
        %s248 = smul.addr %s247, 8
        %s249 = scalar_lea.vmem %s3, %s248
        %p251 = scmp.eq.s32.totalorder %s20, 0
        // Predicated region
        $region52: #{_lambda_.15} parent=46 // pred_check
          %p252 = pneg %p251
        $region53: #{_lambda_.15} parent=46 // pred_check_branch
          %254 = sbr.rel (%p252) target = $region55
        $region54: #{_lambda_.15} parent=46 // pred_region
          %255 = vst [vmem:[#allocation2] sm:$0xff] 0.0
          %256 = vst [vmem:[#allocation2 + $0x8] sm:$0xff] 0.0
        $region55: #{_lambda_.15} parent=46 // pred_fallthru
          _
        %v257 = vld [vmem:[#allocation2] sm:$0xff]
        %v258 = vld [vmem:[#allocation2 + $0x8] sm:$0xff]
        %v259 = vld [vmem:[%s202] sm:$0xff]
        %v260 = vld [vmem:[%s202 + $0x8] sm:$0xff]
        %v261 = vld [vmem:[%s202 + $0x10] sm:$0xff]
        %v262 = vld [vmem:[%s202 + $0x18] sm:$0xff]
        %v263 = vld [vmem:[%s238] sm:$0xf]
        %v264 = vld [vmem:[%s238 + $0x4] sm:$0xf]
        %v265 = vld [vmem:[%s238 + $0x8] sm:$0xf]
        %v266 = vld [vmem:[%s238 + $0xc] sm:$0xf]
        %v267 = vld [vmem:[%s238 + $0x10] sm:$0xf]
        %v268 = vld [vmem:[%s238 + $0x14] sm:$0xf]
        %v269 = vld [vmem:[%s238 + $0x18] sm:$0xf]
        %v270 = vld [vmem:[%s238 + $0x1c] sm:$0xf]
        %v271 = vld [vmem:[%s238 + $0x20] sm:$0xf]
        %v272 = vld [vmem:[%s238 + $0x24] sm:$0xf]
        %v273 = vld [vmem:[%s238 + $0x28] sm:$0xf]
        %v274 = vld [vmem:[%s238 + $0x2c] sm:$0xf]
        %v275 = vld [vmem:[%s238 + $0x30] sm:$0xf]
        %v276 = vld [vmem:[%s238 + $0x34] sm:$0xf]
        %v277 = vld [vmem:[%s238 + $0x38] sm:$0xf]
        %v278 = vld [vmem:[%s238 + $0x3c] sm:$0xf]
        %v279 = vld [vmem:[%s238 + $0x40] sm:$0xf]
        %v280 = vld [vmem:[%s238 + $0x44] sm:$0xf]
        %v281 = vld [vmem:[%s238 + $0x48] sm:$0xf]
        %v282 = vld [vmem:[%s238 + $0x4c] sm:$0xf]
        %v283 = vld [vmem:[%s238 + $0x50] sm:$0xf]
        %v284 = vld [vmem:[%s238 + $0x54] sm:$0xf]
        %v285 = vld [vmem:[%s238 + $0x58] sm:$0xf]
        %v286 = vld [vmem:[%s238 + $0x5c] sm:$0xf]
        %v287 = vld [vmem:[%s238 + $0x60] sm:$0xf]
        %v288 = vld [vmem:[%s238 + $0x64] sm:$0xf]
        %v289 = vld [vmem:[%s238 + $0x68] sm:$0xf]
        %v290 = vld [vmem:[%s238 + $0x6c] sm:$0xf]
        %v291 = vld [vmem:[%s238 + $0x70] sm:$0xf]
        %v292 = vld [vmem:[%s238 + $0x74] sm:$0xf]
        %v293 = vld [vmem:[%s238 + $0x78] sm:$0xf]
        %v294 = vld [vmem:[%s238 + $0x7c] sm:$0xf]
        %v295 = vld [vmem:[%s238 + $0x80] sm:$0xf]
        %v296 = vld [vmem:[%s238 + $0x84] sm:$0xf]
        %v297 = vld [vmem:[%s238 + $0x88] sm:$0xf]
        %v298 = vld [vmem:[%s238 + $0x8c] sm:$0xf]
        %v299 = vld [vmem:[%s238 + $0x90] sm:$0xf]
        %v300 = vld [vmem:[%s238 + $0x94] sm:$0xf]
        %v301 = vld [vmem:[%s238 + $0x98] sm:$0xf]
        %v302 = vld [vmem:[%s238 + $0x9c] sm:$0xf]
        %v303 = vld [vmem:[%s238 + $0xa0] sm:$0xf]
        %v304 = vld [vmem:[%s238 + $0xa4] sm:$0xf]
        %v305 = vld [vmem:[%s238 + $0xa8] sm:$0xf]
        %v306 = vld [vmem:[%s238 + $0xac] sm:$0xf]
        %v307 = vld [vmem:[%s238 + $0xb0] sm:$0xf]
        %v308 = vld [vmem:[%s238 + $0xb4] sm:$0xf]
        %v309 = vld [vmem:[%s238 + $0xb8] sm:$0xf]
        %v310 = vld [vmem:[%s238 + $0xbc] sm:$0xf]
        %v311 = vld [vmem:[%s238 + $0xc0] sm:$0xf]
        %v312 = vld [vmem:[%s238 + $0xc4] sm:$0xf]
        %v313 = vld [vmem:[%s238 + $0xc8] sm:$0xf]
        %v314 = vld [vmem:[%s238 + $0xcc] sm:$0xf]
        %v315 = vld [vmem:[%s238 + $0xd0] sm:$0xf]
        %v316 = vld [vmem:[%s238 + $0xd4] sm:$0xf]
        %v317 = vld [vmem:[%s238 + $0xd8] sm:$0xf]
        %v318 = vld [vmem:[%s238 + $0xdc] sm:$0xf]
        %v319 = vld [vmem:[%s238 + $0xe0] sm:$0xf]
        %v320 = vld [vmem:[%s238 + $0xe4] sm:$0xf]
        %v321 = vld [vmem:[%s238 + $0xe8] sm:$0xf]
        %v322 = vld [vmem:[%s238 + $0xec] sm:$0xf]
        %v323 = vld [vmem:[%s238 + $0xf0] sm:$0xf]
        %v324 = vld [vmem:[%s238 + $0xf4] sm:$0xf]
        %v325 = vld [vmem:[%s238 + $0xf8] sm:$0xf]
        %v326 = vld [vmem:[%s238 + $0xfc] sm:$0xf]
        %v331 = vunpack.c.l.b16 %v259
        %v332 = vunpack.c.h.b16 %v259
        %v333 = vunpack.c.l.b16 %v260
        %v334 = vunpack.c.h.b16 %v260
        %v335 = vunpack.c.l.b16 %v261
        %v336 = vunpack.c.h.b16 %v261
        %v337 = vunpack.c.l.b16 %v262
        %v338 = vunpack.c.h.b16 %v262
        %v339 = vpack.c.b16 %v335, %v331
        %v340 = vpack.c.b16 %v336, %v332
        %v341 = vpack.c.b16 %v337, %v333
        %v342 = vpack.c.b16 %v338, %v334
        %v411 = vunpack.c.l.b16 %v263
        %v412 = vunpack.c.l.b16 %v264
        %v413 = vunpack.c.l.b16 %v265
        %v414 = vunpack.c.l.b16 %v266
        %v415 = vunpack.c.l.b16 %v267
        %v416 = vunpack.c.l.b16 %v268
        %v417 = vunpack.c.l.b16 %v269
        %v418 = vunpack.c.l.b16 %v270
        %v419 = vunpack.c.l.b16 %v271
        %v420 = vunpack.c.l.b16 %v272
        %v421 = vunpack.c.l.b16 %v273
        %v422 = vunpack.c.l.b16 %v274
        %v423 = vunpack.c.l.b16 %v275
        %v424 = vunpack.c.l.b16 %v276
        %v425 = vunpack.c.l.b16 %v277
        %v426 = vunpack.c.l.b16 %v278
        %v427 = vunpack.c.l.b16 %v279
        %v428 = vunpack.c.l.b16 %v280
        %v429 = vunpack.c.l.b16 %v281
        %v430 = vunpack.c.l.b16 %v282
        %v431 = vunpack.c.l.b16 %v283
        %v432 = vunpack.c.l.b16 %v284
        %v433 = vunpack.c.l.b16 %v285
        %v434 = vunpack.c.l.b16 %v286
        %v435 = vunpack.c.l.b16 %v287
        %v436 = vunpack.c.l.b16 %v288
        %v437 = vunpack.c.l.b16 %v289
        %v438 = vunpack.c.l.b16 %v290
        %v439 = vunpack.c.l.b16 %v291
        %v440 = vunpack.c.l.b16 %v292
        %v441 = vunpack.c.l.b16 %v293
        %v442 = vunpack.c.l.b16 %v294
        %v443 = vunpack.c.l.b16 %v295
        %v444 = vunpack.c.l.b16 %v296
        %v445 = vunpack.c.l.b16 %v297
        %v446 = vunpack.c.l.b16 %v298
        %v447 = vunpack.c.l.b16 %v299
        %v448 = vunpack.c.l.b16 %v300
        %v449 = vunpack.c.l.b16 %v301
        %v450 = vunpack.c.l.b16 %v302
        %v451 = vunpack.c.l.b16 %v303
        %v452 = vunpack.c.l.b16 %v304
        %v453 = vunpack.c.l.b16 %v305
        %v454 = vunpack.c.l.b16 %v306
        %v455 = vunpack.c.l.b16 %v307
        %v456 = vunpack.c.l.b16 %v308
        %v457 = vunpack.c.l.b16 %v309
        %v458 = vunpack.c.l.b16 %v310
        %v459 = vunpack.c.l.b16 %v311
        %v460 = vunpack.c.l.b16 %v312
        %v461 = vunpack.c.l.b16 %v313
        %v462 = vunpack.c.l.b16 %v314
        %v463 = vunpack.c.l.b16 %v315
        %v464 = vunpack.c.l.b16 %v316
        %v465 = vunpack.c.l.b16 %v317
        %v466 = vunpack.c.l.b16 %v318
        %v467 = vunpack.c.l.b16 %v319
        %v468 = vunpack.c.l.b16 %v320
        %v469 = vunpack.c.l.b16 %v321
        %v470 = vunpack.c.l.b16 %v322
        %v471 = vunpack.c.l.b16 %v323
        %v472 = vunpack.c.l.b16 %v324
        %v473 = vunpack.c.l.b16 %v325
        %v474 = vunpack.c.l.b16 %v326
        %v475 = vpack.c.b16 %v412, %v411
        %v476 = vpack.c.b16 %v414, %v413
        %v477 = vpack.c.b16 %v416, %v415
        %v478 = vpack.c.b16 %v418, %v417
        %v479 = vpack.c.b16 %v420, %v419
        %v480 = vpack.c.b16 %v422, %v421
        %v481 = vpack.c.b16 %v424, %v423
        %v482 = vpack.c.b16 %v426, %v425
        %v483 = vpack.c.b16 %v428, %v427
        %v484 = vpack.c.b16 %v430, %v429
        %v485 = vpack.c.b16 %v432, %v431
        %v486 = vpack.c.b16 %v434, %v433
        %v487 = vpack.c.b16 %v436, %v435
        %v488 = vpack.c.b16 %v438, %v437
        %v489 = vpack.c.b16 %v440, %v439
        %v490 = vpack.c.b16 %v442, %v441
        %v491 = vpack.c.b16 %v444, %v443
        %v492 = vpack.c.b16 %v446, %v445
        %v493 = vpack.c.b16 %v448, %v447
        %v494 = vpack.c.b16 %v450, %v449
        %v495 = vpack.c.b16 %v452, %v451
        %v496 = vpack.c.b16 %v454, %v453
        %v497 = vpack.c.b16 %v456, %v455
        %v498 = vpack.c.b16 %v458, %v457
        %v499 = vpack.c.b16 %v460, %v459
        %v500 = vpack.c.b16 %v462, %v461
        %v501 = vpack.c.b16 %v464, %v463
        %v502 = vpack.c.b16 %v466, %v465
        %v503 = vpack.c.b16 %v468, %v467
        %v504 = vpack.c.b16 %v470, %v469
        %v505 = vpack.c.b16 %v472, %v471
        %v506 = vpack.c.b16 %v474, %v473
        %539 = vmatprep.subr.bf16.mxu0 0
        %540 = vmatpush1.bf16.msra.mxu0 %v475
        %541 = vmatprep.subr.bf16.mxu0 0
        %542 = vmatpush1.bf16.msra.mxu0 %v476
        %543 = vmatprep.subr.bf16.mxu0 0
        %544 = vmatpush1.bf16.msra.mxu0 %v477
        %545 = vmatprep.subr.bf16.mxu0 0
        %546 = vmatpush1.bf16.msra.mxu0 %v478
        %547 = vmatprep.subr.bf16.mxu0 0
        %548 = vmatpush1.bf16.msra.mxu0 %v479
        %549 = vmatprep.subr.bf16.mxu0 0
        %550 = vmatpush1.bf16.msra.mxu0 %v480
        %551 = vmatprep.subr.bf16.mxu0 0
        %552 = vmatpush1.bf16.msra.mxu0 %v481
        %553 = vmatprep.subr.bf16.mxu0 0
        %554 = vmatpush1.bf16.msra.mxu0 %v482
        %555 = vmatprep.subr.bf16.mxu0 0
        %556 = vmatpush1.bf16.msra.mxu0 %v483
        %557 = vmatprep.subr.bf16.mxu0 0
        %558 = vmatpush1.bf16.msra.mxu0 %v484
        %559 = vmatprep.subr.bf16.mxu0 0
        %560 = vmatpush1.bf16.msra.mxu0 %v485
        %561 = vmatprep.subr.bf16.mxu0 0
        %562 = vmatpush1.bf16.msra.mxu0 %v486
        %563 = vmatprep.subr.bf16.mxu0 0
        %564 = vmatpush1.bf16.msra.mxu0 %v487
        %565 = vmatprep.subr.bf16.mxu0 0
        %566 = vmatpush1.bf16.msra.mxu0 %v488
        %567 = vmatprep.subr.bf16.mxu0 0
        %568 = vmatpush1.bf16.msra.mxu0 %v489
        %569 = vmatprep.subr.bf16.mxu0 0
        %570 = vmatpush1.bf16.msra.mxu0 %v490
        %571 = vmatprep.mubr.bf16.mxu0 %v340
        %572 = vmatmul.mubr.bf16.gmra.mrb[0].mxu0 %v339
        %v573 = vpop.f32.mrb[0].mxu0
        %v574 = vadd.f32 0.0, %v573
        %v575 = vpop.f32.mrb[0].mxu0
        %v576 = vpop.f32.mrb[0].mxu0
        %v577 = vadd.f32 0.0, %v576
        %v578 = vpop.f32.mrb[0].mxu0
        %579 = vdwg.mxu0
        %580 = vmatprep.subr.bf16.mxu0 0
        %581 = vmatpush1.bf16.msra.mxu0 %v491
        %582 = vmatprep.subr.bf16.mxu0 0
        %583 = vmatpush1.bf16.msra.mxu0 %v492
        %584 = vmatprep.subr.bf16.mxu0 0
        %585 = vmatpush1.bf16.msra.mxu0 %v493
        %586 = vmatprep.subr.bf16.mxu0 0
        %587 = vmatpush1.bf16.msra.mxu0 %v494
        %588 = vmatprep.subr.bf16.mxu0 0
        %589 = vmatpush1.bf16.msra.mxu0 %v495
        %590 = vmatprep.subr.bf16.mxu0 0
        %591 = vmatpush1.bf16.msra.mxu0 %v496
        %592 = vmatprep.subr.bf16.mxu0 0
        %593 = vmatpush1.bf16.msra.mxu0 %v497
        %594 = vmatprep.subr.bf16.mxu0 0
        %595 = vmatpush1.bf16.msra.mxu0 %v498
        %596 = vmatprep.subr.bf16.mxu0 0
        %597 = vmatpush1.bf16.msra.mxu0 %v499
        %598 = vmatprep.subr.bf16.mxu0 0
        %599 = vmatpush1.bf16.msra.mxu0 %v500
        %600 = vmatprep.subr.bf16.mxu0 0
        %601 = vmatpush1.bf16.msra.mxu0 %v501
        %602 = vmatprep.subr.bf16.mxu0 0
        %603 = vmatpush1.bf16.msra.mxu0 %v502
        %604 = vmatprep.subr.bf16.mxu0 0
        %605 = vmatpush1.bf16.msra.mxu0 %v503
        %606 = vmatprep.subr.bf16.mxu0 0
        %607 = vmatpush1.bf16.msra.mxu0 %v504
        %608 = vmatprep.subr.bf16.mxu0 0
        %609 = vmatpush1.bf16.msra.mxu0 %v505
        %610 = vmatprep.subr.bf16.mxu0 0
        %611 = vmatpush1.bf16.msra.mxu0 %v506
        %612 = vmatprep.mubr.bf16.mxu0 %v342
        %613 = vmatmul.mubr.bf16.gmra.mrb[0].mxu0 %v341
        %v614 = vpop.f32.mrb[0].mxu0
        %v615 = vadd.f32 %v574, %v614
        %v616 = vpop.f32.mrb[0].mxu0
        %v617 = vpop.f32.mrb[0].mxu0
        %v618 = vadd.f32 %v577, %v617
        %v619 = vpop.f32.mrb[0].mxu0
        %620 = vdwg.mxu0
        %v621 = vadd.f32 %v257, %v615
        %v622 = vadd.f32 %v258, %v618
        %623 = vst [vmem:[#allocation2] sm:$0xff] %v621
        %624 = vst [vmem:[#allocation2 + $0x8] sm:$0xff] %v622
        %p625 = scmp.eq.s32.totalorder %s20, 1
        // Predicated region
        $region56: #{_lambda_.15} parent=46 // pred_check
          %p626 = pneg %p625
        $region57: #{_lambda_.15} parent=46 // pred_check_branch
          %628 = sbr.rel (%p626) target = $region59
        $region58: #{_lambda_.15} parent=46 // pred_region
          %v629 = vld [vmem:[#allocation2] sm:$0xff]
          %v630 = vld [vmem:[#allocation2 + $0x8] sm:$0xff]
          %631 = vst [vmem:[%s244] sm:$0xff] %v629
          %632 = vst [vmem:[%s244 + $0x8] sm:$0xff] %v630
          %v633 = vadd.f32 %v629, %v630
          %v634 = vrot.slane %v633, 4
          %v635 = vadd.f32 %v633, %v634
          %v636 = vrot.slane %v635, 2
          %v637 = vadd.f32 %v635, %v636
          %v638 = vrot.slane %v637, 1
          %v639 = vadd.f32 %v637, %v638
          %v640 = vmul.f32 %v629, %v629
          %v641 = vmul.f32 %v630, %v630
          %v642 = vadd.f32 %v640, %v641
          %v643 = vrot.slane %v642, 4
          %v644 = vadd.f32 %v642, %v643
          %v645 = vrot.slane %v644, 2
          %v646 = vadd.f32 %v644, %v645
          %v647 = vrot.slane %v646, 1
          %v648 = vadd.f32 %v646, %v647
          %v649 = vlaneseq
          %v650 = vshrl.u32 %v649, 7
          %vm651 = vcmp.eq.s32.totalorder %v650, 0
          %vm652 = vcmp.eq.s32.totalorder %v650, 1
          %v653 = vsel %vm652, %v648, 0.0
          %v654 = vsel %vm651, %v639, %v653
          %655 = vst [vmem:[%s249] sm:$0xff] %v654
        $region59: #{_lambda_.15} parent=46 // pred_fallthru
          _
        %s656 = smul.u32 2, %s19
        %p657 = scmp.lt.s32.totalorder %s656, 1
        %s658 = scalar_select %p657, %s656, 1
        %s659 = smul.addr %s658, 8
        %s660 = scalar_lea.vmem %s2, %s659
        %p661 = scmp.lt.s32.totalorder %s19, 0
        %s662 = scalar_select %p661, %s19, 0
        %s663 = smul.addr %s662, 8
        %s664 = scalar_lea.vmem %s3, %s663
        // Predicated region
        $region60: #{_lambda_.15} parent=46 // pred_check
          %p665 = pneg %p99
        $region61: #{_lambda_.15} parent=46 // pred_check_branch
          %667 = sbr.rel (%p665) target = $region63
        $region62: #{_lambda_.15} parent=46 // pred_region
          %s668 = smul.u32 2, %s19
        $region63: #{_lambda_.15} parent=46 // pred_fallthru
          _
        // Predicated region
        $region64: #{_lambda_.15} parent=46 // pred_check
          %p669 = pneg %p125
        $region65: #{_lambda_.15} parent=46 // pred_check_branch
          %671 = sbr.rel (%p669) target = $region67
        $region66: #{_lambda_.15} parent=46 // pred_region
          _
        $region67: #{_lambda_.15} parent=46 // pred_fallthru
          _
        // Predicated region
        $region68: #{_lambda_.15} parent=46 // pred_check
          %p672 = pneg %p99
        $region69: #{_lambda_.15} parent=46 // pred_check_branch
          %674 = sbr.rel (%p672) target = $region71
        $region70: #{_lambda_.15} parent=46 // pred_region
          %s675 = smul.u32 2, %s19
          %p676 = scmp.lt.s32.totalorder %s675, 1
          %s677 = scalar_select %p676, %s675, 1
          %s678 = smul.addr %s677, 8
          %s679 = scalar_lea.vmem %s2, %s678
        $region71: #{_lambda_.15} parent=46 // pred_fallthru
          _
        // Predicated region
        $region72: #{_lambda_.15} parent=46 // pred_check
          %p680 = pneg %p125
        $region73: #{_lambda_.15} parent=46 // pred_check_branch
          %682 = sbr.rel (%p680) target = $region75
        $region74: #{_lambda_.15} parent=46 // pred_region
          %p683 = scmp.lt.s32.totalorder %s19, 0
          %s684 = scalar_select %p683, %s19, 0
          %s685 = smul.addr %s684, 8
          %s686 = scalar_lea.vmem %s3, %s685
        $region75: #{_lambda_.15} parent=46 // pred_fallthru
          _
      $region47: #{_lambda_.15} parent=5 // pred_fallthru
        _
      %p687 = scmp.le.s32.totalorder 2, %s10
      // Predicated region
      $region76: #{_lambda_.15} parent=5 // pred_check
        %p688 = pneg %p687
      $region77: #{_lambda_.15} parent=5 // pred_check_branch
        %690 = sbr.rel (%p688) target = $region79
      $region78: #{_lambda_.15} parent=5 // pred_region
        %s691 = ssub.s32 %s10, 2
      $region79: #{_lambda_.15} parent=5 // pred_fallthru
        _
    $region6: #{_lambda_.15} parent=1 // loop_footer
      %s14 = sadd.s32 1, %s10
    $region7: #{_lambda_.15} parent=1 // loop_footer_branch
      %9 = sbr.rel target = $region3
    $region8: #{_lambda_.15} parent=1 // loop_exit
      _

// kernel: _lambda_.17
$region0: #{_lambda_.17}
  #allocation0 [shape = 'u32[]', space=smem, size = 0x4, offset = 0x4, fixed_abs, tag = 'smem constant byte address 0x4 - core index']
  #allocation1 [shape = 'u32[144,128]{1,0:T(1,128)}', space=vmem, size = 0x12000, scoped, tag = 'internal scratch']
  #allocation2 [shape = 'f32[16,128]{1,0:T(8,128)}', space=vmem, size = 0x2000, scoped, tag = 'scratch operand']
  %s0 = inlined_call_operand.vmem [shape: bf16[16,2048], index: 0, kind: input, shape index: {}]
  %s1 = inlined_call_operand.vmem [shape: bf16[2048,128], index: 1, kind: input, shape index: {}]
  %s2 = inlined_call_operand.vmem [shape: f32[1,128], index: 2, kind: input, shape index: {}]
  %s3 = inlined_call_operand.vmem [shape: f32[16,128], index: 3, kind: output, shape index: {}]
  %s4 = sld [smem:[#allocation0]]
  $region76: #{_lambda_.17} parent=0
    _
  %s6 = ssub.s32 1, %s4
  %s7 = scalar_select 0, %s6, %s4
  $region1: #{_lambda_.17} parent=0
    #allocation3 [shape = 'u8[32768]{0}', space=vmem, size = 0x8000, scoped, tag = 'input window, operand 0']
    loop: start=0, step=1, limit=6
    $region2: #{_lambda_.17} parent=1 // loop_pre_header
      _
    $region3: #{_lambda_.17} parent=1 // loop_header
      %s9 = sphi 0, %s13
      %p10 = scmp.ge.s32.totalorder %s9, 6
      %s16 = sphi 0, %s28
      %s17 = sphi 0, %s24
      %s18 = sphi 0, %s16
      %s19 = sphi 0, %s17
      %s20 = sphi 0, %s18
      %s21 = sphi 0, %s19
      %s33 = sphi 0, %s35
      %s36 = sphi 0, %s33
      %s37 = sphi 0, %s36
      %s53 = sphi 0, %s37
      %s59 = sphi 0, %s61
      %s62 = sphi 0, %s59
      %s63 = sphi 0, %s62
      %s79 = sphi 0, %s63
      %s83 = sphi 0, %s83
      %s85 = sphi 0, %s83
      %s86 = sphi 0, %s85
      %s100 = sphi 0, %s86
      %s106 = sphi 0, %s108
      %s109 = sphi 0, %s106
      %s110 = sphi 0, %s109
      %s126 = sphi 0, %s110
    $region4: #{_lambda_.17} parent=1 // loop_header_branch
      %12 = sbr.rel (%p10) target = $region8
    $region5: #{_lambda_.17} parent=1 // loop_body
      %s14 = ssub.s32 %s9, 1
      %s15 = ssub.s32 %s9, 2
      %s22 = sadd.s32 1, %s17
      %p23 = scmp.ge.s32.totalorder %s22, 4
      %s24 = scalar_select %p23, 0, %s22
      %s25 = sadd.s32 1, %s16
      %s26 = scalar_select %p23, %s25, %s16
      %p27 = scmp.ge.s32.totalorder %s26, 1
      %s28 = scalar_select %p27, 0, %s26
      %s29 = ssub.s32 %s16, %s28
      %s30 = ssub.s32 %s17, %s24
      %s31 = sor.u32 %s29, %s30
      %p32 = scmp.eq.s32.totalorder %s31, 0
      %s34 = sadd.s32 %s33, 1
      %s35 = scalar_select %p32, %s33, %s34
      %p38 = pneg %p32
      %p39 = scmp.eq.s32.totalorder %s9, 3
      %p40 = por %p38, %p39
      %p41 = scmp.ne.s32.totalorder %s33, %s36
      %p42 = scmp.eq.s32.totalorder %s9, 0
      %p43 = por %p41, %p42
      %p44 = scmp.ne.s32.totalorder %s33, %s36
      %p45 = scmp.eq.s32.totalorder %s14, 3
      %p46 = por %p44, %p45
      %p47 = scmp.ne.s32.totalorder %s36, %s37
      %p48 = scmp.eq.s32.totalorder %s14, 0
      %p49 = por %p47, %p48
      %p50 = scmp.ne.s32.totalorder %s36, %s37
      %p51 = scmp.eq.s32.totalorder %s15, 3
      %p52 = por %p50, %p51
      %p54 = scmp.ne.s32.totalorder %s37, %s53
      %p55 = scmp.eq.s32.totalorder %s15, 0
      %p56 = por %p54, %p55
      %s57 = ssub.s32 %s17, %s24
      %p58 = scmp.eq.s32.totalorder %s57, 0
      %s60 = sadd.s32 %s59, 1
      %s61 = scalar_select %p58, %s59, %s60
      %p64 = pneg %p58
      %p65 = scmp.eq.s32.totalorder %s9, 3
      %p66 = por %p64, %p65
      %p67 = scmp.ne.s32.totalorder %s59, %s62
      %p68 = scmp.eq.s32.totalorder %s9, 0
      %p69 = por %p67, %p68
      %p70 = scmp.ne.s32.totalorder %s59, %s62
      %p71 = scmp.eq.s32.totalorder %s14, 3
      %p72 = por %p70, %p71
      %p73 = scmp.ne.s32.totalorder %s62, %s63
      %p74 = scmp.eq.s32.totalorder %s14, 0
      %p75 = por %p73, %p74
      %p76 = scmp.ne.s32.totalorder %s62, %s63
      %p77 = scmp.eq.s32.totalorder %s15, 3
      %p78 = por %p76, %p77
      %p80 = scmp.ne.s32.totalorder %s63, %s79
      %p81 = scmp.eq.s32.totalorder %s15, 0
      %p82 = por %p80, %p81
      %s84 = sadd.s32 %s83, 1
      %p87 = scmp.eq.s32.totalorder %s9, 3
      %p88 = scmp.ne.s32.totalorder %s83, %s85
      %p89 = scmp.eq.s32.totalorder %s9, 0
      %p90 = por %p88, %p89
      %p91 = scmp.ne.s32.totalorder %s83, %s85
      %p92 = scmp.eq.s32.totalorder %s14, 3
      %p93 = por %p91, %p92
      %p94 = scmp.ne.s32.totalorder %s85, %s86
      %p95 = scmp.eq.s32.totalorder %s14, 0
      %p96 = por %p94, %p95
      %p97 = scmp.ne.s32.totalorder %s85, %s86
      %p98 = scmp.eq.s32.totalorder %s15, 3
      %p99 = por %p97, %p98
      %p101 = scmp.ne.s32.totalorder %s86, %s100
      %p102 = scmp.eq.s32.totalorder %s15, 0
      %p103 = por %p101, %p102
      %s104 = ssub.s32 %s16, %s28
      %p105 = scmp.eq.s32.totalorder %s104, 0
      %s107 = sadd.s32 %s106, 1
      %s108 = scalar_select %p105, %s106, %s107
      %p111 = pneg %p105
      %p112 = scmp.eq.s32.totalorder %s9, 3
      %p113 = por %p111, %p112
      %p114 = scmp.ne.s32.totalorder %s106, %s109
      %p115 = scmp.eq.s32.totalorder %s9, 0
      %p116 = por %p114, %p115
      %p117 = scmp.ne.s32.totalorder %s106, %s109
      %p118 = scmp.eq.s32.totalorder %s14, 3
      %p119 = por %p117, %p118
      %p120 = scmp.ne.s32.totalorder %s109, %s110
      %p121 = scmp.eq.s32.totalorder %s14, 0
      %p122 = por %p120, %p121
      %p123 = scmp.ne.s32.totalorder %s109, %s110
      %p124 = scmp.eq.s32.totalorder %s15, 3
      %p125 = por %p123, %p124
      %p127 = scmp.ne.s32.totalorder %s110, %s126
      %p128 = scmp.eq.s32.totalorder %s15, 0
      %p129 = por %p127, %p128
      %p130 = scmp.le.s32.totalorder 1, %s9
      %p131 = scmp.lt.s32.totalorder %s9, 5
      %p132 = pnand %p130, %p131
      %p133 = pneg %p132
      // Predicated region
      $region9: #{_lambda_.17} parent=5 // pred_check
        _
      $region10: #{_lambda_.17} parent=5 // pred_check_branch
        %135 = sbr.rel (%p132) target = $region12
      $region11: #{_lambda_.17} parent=5 // pred_region
        %s136 = ssub.s32 %s9, 1
        // Predicated region
        $region13: #{_lambda_.17} parent=11 // pred_check
          %p137 = pneg %p96
        $region14: #{_lambda_.17} parent=11 // pred_check_branch
          %139 = sbr.rel (%p137) target = $region16
        $region15: #{_lambda_.17} parent=11 // pred_region
          _
        $region16: #{_lambda_.17} parent=11 // pred_fallthru
          _
      $region12: #{_lambda_.17} parent=5 // pred_fallthru
        _
      %p140 = scmp.lt.s32.totalorder %s9, 4
      // Predicated region
      $region17: #{_lambda_.17} parent=5 // pred_check
        %p141 = pneg %p140
      $region18: #{_lambda_.17} parent=5 // pred_check_branch
        %143 = sbr.rel (%p141) target = $region20
      $region19: #{_lambda_.17} parent=5 // pred_region
        // Predicated region
        $region21: #{_lambda_.17} parent=19 // pred_check
          %p144 = pneg %p43
        $region22: #{_lambda_.17} parent=19 // pred_check_branch
          %146 = sbr.rel (%p144) target = $region24
        $region23: #{_lambda_.17} parent=19 // pred_region
          %s147 = sand.u32 %s33, 1
          %s148 = sand.u32 %s33, 1
          %s149 = smul.addr %s148, 32
          %s150 = scalar_lea.vmem [#allocation3], %s149
          %s151 = smul.u32 2, %s16
          %s152 = smul.u32 4, %s17
          %s153 = smul.addr %s151, 16
          %s154 = sadd.s32 %s152, %s153
          %s155 = smul.addr %s154, 4
          %s156 = scalar_lea.vmem %s0, %s155
          // Predicated region
          $region25: #{_lambda_.17} parent=23 // pred_check
            _
          $region26: #{_lambda_.17} parent=23 // pred_check_branch
            %158 = sbr.rel (0) target = $region28
          $region27: #{_lambda_.17} parent=23 // pred_region
            // Predicated region
            $region29: #{_lambda_.17} parent=27 // pred_check
              _
            $region30: #{_lambda_.17} parent=27 // pred_check_branch
              %160 = sbr.rel (0) target = $region32
            $region31: #{_lambda_.17} parent=27 // pred_region
              loop: start=0, step=1, limit=1
              $region33: #{_lambda_.17} parent=31 // loop_pre_header
                _
              $region34: #{_lambda_.17} parent=31 // loop_header
                %s162 = sphi 0, %s166
                %p163 = scmp.ge.s32.totalorder %s162, 1
                %s167 = sphi %s156, %s156
                %s168 = sphi %s150, %s150
              $region35: #{_lambda_.17} parent=31 // loop_header_branch
                %165 = sbr.rel (%p163) target = $region39
              $region36: #{_lambda_.17} parent=31 // loop_body
                %v169 = vld [vmem:[%s167] sm:$0xff]
                %170 = vst [vmem:[%s168] sm:$0xff] %v169
                %v171 = vld [vmem:[%s167 + $0x8] sm:$0xff]
                %172 = vst [vmem:[%s168 + $0x8] sm:$0xff] %v171
                %v173 = vld [vmem:[%s167 + $0x40] sm:$0xff]
                %174 = vst [vmem:[%s168 + $0x10] sm:$0xff] %v173
                %v175 = vld [vmem:[%s167 + $0x48] sm:$0xff]
                %176 = vst [vmem:[%s168 + $0x18] sm:$0xff] %v175
              $region37: #{_lambda_.17} parent=31 // loop_footer
                %s166 = sadd.s32 1, %s162
              $region38: #{_lambda_.17} parent=31 // loop_footer_branch
                %161 = sbr.rel target = $region34
              $region39: #{_lambda_.17} parent=31 // loop_exit
                _
            $region32: #{_lambda_.17} parent=27 // pred_fallthru
              _
            // Predicated region
            $region40: #{_lambda_.17} parent=27 // pred_check
              _
            $region41: #{_lambda_.17} parent=27 // pred_check_branch
              %178 = sbr.rel target = $region43
            $region42: #{_lambda_.17} parent=27 // pred_region
              _
            $region43: #{_lambda_.17} parent=27 // pred_fallthru
              _
          $region28: #{_lambda_.17} parent=23 // pred_fallthru
            _
          %179 = vnop
        $region24: #{_lambda_.17} parent=19 // pred_fallthru
          _
        // Predicated region
        $region44: #{_lambda_.17} parent=19 // pred_check
          %p180 = pneg %p69
        $region45: #{_lambda_.17} parent=19 // pred_check_branch
          %182 = sbr.rel (%p180) target = $region47
        $region46: #{_lambda_.17} parent=19 // pred_region
          %s183 = smul.u32 64, %s17
          %p184 = scmp.lt.s32.totalorder %s183, 255
          %s185 = scalar_select %p184, %s183, 255
          %s186 = smul.addr %s185, 4
          %s187 = scalar_lea.vmem %s1, %s186
          %s188 = smul.u32 64, %s17
        $region47: #{_lambda_.17} parent=19 // pred_fallthru
          _
      $region20: #{_lambda_.17} parent=5 // pred_fallthru
        _
      %p189 = scmp.le.s32.totalorder 1, %s9
      %p190 = scmp.lt.s32.totalorder %s9, 5
      %p191 = pnand %p189, %p190
      %p192 = pneg %p191
      // Predicated region
      $region48: #{_lambda_.17} parent=5 // pred_check
        _
      $region49: #{_lambda_.17} parent=5 // pred_check_branch
        %194 = sbr.rel (%p191) target = $region51
      $region50: #{_lambda_.17} parent=5 // pred_region
        %s195 = ssub.s32 %s9, 1
        %s196 = sand.u32 %s36, 1
        %s197 = sand.u32 %s36, 1
        %s198 = smul.addr %s197, 32
        %s199 = scalar_lea.vmem [#allocation3], %s198
        // Predicated region
        $region52: #{_lambda_.17} parent=50 // pred_check
          %p200 = pneg %p49
        $region53: #{_lambda_.17} parent=50 // pred_check_branch
          %202 = sbr.rel (%p200) target = $region55
        $region54: #{_lambda_.17} parent=50 // pred_region
          _
        $region55: #{_lambda_.17} parent=50 // pred_fallthru
          _
        %s203 = sand.u32 %s36, 1
        %s204 = sand.u32 %s36, 1
        %s205 = smul.addr %s204, 32
        %s206 = scalar_lea.vmem [#allocation3], %s205
        %p207 = pneg %p49
        %p208 = pneg %p46
        %s209 = smul.u32 64, %s19
        %p210 = scmp.lt.s32.totalorder %s209, 255
        %s211 = scalar_select %p210, %s209, 255
        %s212 = smul.addr %s211, 4
        %s213 = scalar_lea.vmem %s1, %s212
        %p214 = pneg %p75
        %p215 = pneg %p72
        %p216 = pneg %p96
        %p217 = pneg %p93
        %p218 = pneg %p122
        %p219 = pneg %p119
        %s220 = smul.u32 2, %s18
        %p221 = scmp.lt.s32.totalorder %s220, 1
        %s222 = scalar_select %p221, %s220, 1
        %s223 = smul.addr %s222, 8
        %s224 = scalar_lea.vmem %s3, %s223
        %s225 = smul.u32 2, %s18
        %s226 = smul.u32 4, %s19
        %s227 = smul.u32 64, %s19
        %p228 = scmp.lt.s32.totalorder %s227, 255
        %s229 = scalar_select %p228, %s227, 255
        %s230 = smul.addr %s229, 4
        %s231 = scalar_lea.vmem %s1, %s230
        %s232 = smul.u32 64, %s19
        %s233 = smul.u32 2, %s18
        %p234 = scmp.lt.s32.totalorder %s233, 1
        %s235 = scalar_select %p234, %s233, 1
        %s236 = smul.addr %s235, 8
        %s237 = scalar_lea.vmem %s3, %s236
        %s238 = smul.u32 2, %s18
        %p240 = scmp.eq.s32.totalorder %s19, 0
        // Predicated region
        $region56: #{_lambda_.17} parent=50 // pred_check
          %p241 = pneg %p240
        $region57: #{_lambda_.17} parent=50 // pred_check_branch
          %243 = sbr.rel (%p241) target = $region59
        $region58: #{_lambda_.17} parent=50 // pred_region
          %244 = vst [vmem:[#allocation2] sm:$0xff] 0.0
          %245 = vst [vmem:[#allocation2 + $0x8] sm:$0xff] 0.0
        $region59: #{_lambda_.17} parent=50 // pred_fallthru
          _
        %v246 = vld [vmem:[#allocation2] sm:$0xff]
        %v247 = vld [vmem:[#allocation2 + $0x8] sm:$0xff]
        %v248 = vld [vmem:[%s199] sm:$0xff]
        %v249 = vld [vmem:[%s199 + $0x8] sm:$0xff]
        %v250 = vld [vmem:[%s199 + $0x10] sm:$0xff]
        %v251 = vld [vmem:[%s199 + $0x18] sm:$0xff]
        %v252 = vld [vmem:[%s231] sm:$0xf]
        %v253 = vld [vmem:[%s231 + $0x4] sm:$0xf]
        %v254 = vld [vmem:[%s231 + $0x8] sm:$0xf]
        %v255 = vld [vmem:[%s231 + $0xc] sm:$0xf]
        %v256 = vld [vmem:[%s231 + $0x10] sm:$0xf]
        %v257 = vld [vmem:[%s231 + $0x14] sm:$0xf]
        %v258 = vld [vmem:[%s231 + $0x18] sm:$0xf]
        %v259 = vld [vmem:[%s231 + $0x1c] sm:$0xf]
        %v260 = vld [vmem:[%s231 + $0x20] sm:$0xf]
        %v261 = vld [vmem:[%s231 + $0x24] sm:$0xf]
        %v262 = vld [vmem:[%s231 + $0x28] sm:$0xf]
        %v263 = vld [vmem:[%s231 + $0x2c] sm:$0xf]
        %v264 = vld [vmem:[%s231 + $0x30] sm:$0xf]
        %v265 = vld [vmem:[%s231 + $0x34] sm:$0xf]
        %v266 = vld [vmem:[%s231 + $0x38] sm:$0xf]
        %v267 = vld [vmem:[%s231 + $0x3c] sm:$0xf]
        %v268 = vld [vmem:[%s231 + $0x40] sm:$0xf]
        %v269 = vld [vmem:[%s231 + $0x44] sm:$0xf]
        %v270 = vld [vmem:[%s231 + $0x48] sm:$0xf]
        %v271 = vld [vmem:[%s231 + $0x4c] sm:$0xf]
        %v272 = vld [vmem:[%s231 + $0x50] sm:$0xf]
        %v273 = vld [vmem:[%s231 + $0x54] sm:$0xf]
        %v274 = vld [vmem:[%s231 + $0x58] sm:$0xf]
        %v275 = vld [vmem:[%s231 + $0x5c] sm:$0xf]
        %v276 = vld [vmem:[%s231 + $0x60] sm:$0xf]
        %v277 = vld [vmem:[%s231 + $0x64] sm:$0xf]
        %v278 = vld [vmem:[%s231 + $0x68] sm:$0xf]
        %v279 = vld [vmem:[%s231 + $0x6c] sm:$0xf]
        %v280 = vld [vmem:[%s231 + $0x70] sm:$0xf]
        %v281 = vld [vmem:[%s231 + $0x74] sm:$0xf]
        %v282 = vld [vmem:[%s231 + $0x78] sm:$0xf]
        %v283 = vld [vmem:[%s231 + $0x7c] sm:$0xf]
        %v284 = vld [vmem:[%s231 + $0x80] sm:$0xf]
        %v285 = vld [vmem:[%s231 + $0x84] sm:$0xf]
        %v286 = vld [vmem:[%s231 + $0x88] sm:$0xf]
        %v287 = vld [vmem:[%s231 + $0x8c] sm:$0xf]
        %v288 = vld [vmem:[%s231 + $0x90] sm:$0xf]
        %v289 = vld [vmem:[%s231 + $0x94] sm:$0xf]
        %v290 = vld [vmem:[%s231 + $0x98] sm:$0xf]
        %v291 = vld [vmem:[%s231 + $0x9c] sm:$0xf]
        %v292 = vld [vmem:[%s231 + $0xa0] sm:$0xf]
        %v293 = vld [vmem:[%s231 + $0xa4] sm:$0xf]
        %v294 = vld [vmem:[%s231 + $0xa8] sm:$0xf]
        %v295 = vld [vmem:[%s231 + $0xac] sm:$0xf]
        %v296 = vld [vmem:[%s231 + $0xb0] sm:$0xf]
        %v297 = vld [vmem:[%s231 + $0xb4] sm:$0xf]
        %v298 = vld [vmem:[%s231 + $0xb8] sm:$0xf]
        %v299 = vld [vmem:[%s231 + $0xbc] sm:$0xf]
        %v300 = vld [vmem:[%s231 + $0xc0] sm:$0xf]
        %v301 = vld [vmem:[%s231 + $0xc4] sm:$0xf]
        %v302 = vld [vmem:[%s231 + $0xc8] sm:$0xf]
        %v303 = vld [vmem:[%s231 + $0xcc] sm:$0xf]
        %v304 = vld [vmem:[%s231 + $0xd0] sm:$0xf]
        %v305 = vld [vmem:[%s231 + $0xd4] sm:$0xf]
        %v306 = vld [vmem:[%s231 + $0xd8] sm:$0xf]
        %v307 = vld [vmem:[%s231 + $0xdc] sm:$0xf]
        %v308 = vld [vmem:[%s231 + $0xe0] sm:$0xf]
        %v309 = vld [vmem:[%s231 + $0xe4] sm:$0xf]
        %v310 = vld [vmem:[%s231 + $0xe8] sm:$0xf]
        %v311 = vld [vmem:[%s231 + $0xec] sm:$0xf]
        %v312 = vld [vmem:[%s231 + $0xf0] sm:$0xf]
        %v313 = vld [vmem:[%s231 + $0xf4] sm:$0xf]
        %v314 = vld [vmem:[%s231 + $0xf8] sm:$0xf]
        %v315 = vld [vmem:[%s231 + $0xfc] sm:$0xf]
        %v320 = vunpack.c.l.b16 %v248
        %v321 = vunpack.c.h.b16 %v248
        %v322 = vunpack.c.l.b16 %v249
        %v323 = vunpack.c.h.b16 %v249
        %v324 = vunpack.c.l.b16 %v250
        %v325 = vunpack.c.h.b16 %v250
        %v326 = vunpack.c.l.b16 %v251
        %v327 = vunpack.c.h.b16 %v251
        %v328 = vpack.c.b16 %v324, %v320
        %v329 = vpack.c.b16 %v325, %v321
        %v330 = vpack.c.b16 %v326, %v322
        %v331 = vpack.c.b16 %v327, %v323
        %v400 = vunpack.c.l.b16 %v252
        %v401 = vunpack.c.l.b16 %v253
        %v402 = vunpack.c.l.b16 %v254
        %v403 = vunpack.c.l.b16 %v255
        %v404 = vunpack.c.l.b16 %v256
        %v405 = vunpack.c.l.b16 %v257
        %v406 = vunpack.c.l.b16 %v258
        %v407 = vunpack.c.l.b16 %v259
        %v408 = vunpack.c.l.b16 %v260
        %v409 = vunpack.c.l.b16 %v261
        %v410 = vunpack.c.l.b16 %v262
        %v411 = vunpack.c.l.b16 %v263
        %v412 = vunpack.c.l.b16 %v264
        %v413 = vunpack.c.l.b16 %v265
        %v414 = vunpack.c.l.b16 %v266
        %v415 = vunpack.c.l.b16 %v267
        %v416 = vunpack.c.l.b16 %v268
        %v417 = vunpack.c.l.b16 %v269
        %v418 = vunpack.c.l.b16 %v270
        %v419 = vunpack.c.l.b16 %v271
        %v420 = vunpack.c.l.b16 %v272
        %v421 = vunpack.c.l.b16 %v273
        %v422 = vunpack.c.l.b16 %v274
        %v423 = vunpack.c.l.b16 %v275
        %v424 = vunpack.c.l.b16 %v276
        %v425 = vunpack.c.l.b16 %v277
        %v426 = vunpack.c.l.b16 %v278
        %v427 = vunpack.c.l.b16 %v279
        %v428 = vunpack.c.l.b16 %v280
        %v429 = vunpack.c.l.b16 %v281
        %v430 = vunpack.c.l.b16 %v282
        %v431 = vunpack.c.l.b16 %v283
        %v432 = vunpack.c.l.b16 %v284
        %v433 = vunpack.c.l.b16 %v285
        %v434 = vunpack.c.l.b16 %v286
        %v435 = vunpack.c.l.b16 %v287
        %v436 = vunpack.c.l.b16 %v288
        %v437 = vunpack.c.l.b16 %v289
        %v438 = vunpack.c.l.b16 %v290
        %v439 = vunpack.c.l.b16 %v291
        %v440 = vunpack.c.l.b16 %v292
        %v441 = vunpack.c.l.b16 %v293
        %v442 = vunpack.c.l.b16 %v294
        %v443 = vunpack.c.l.b16 %v295
        %v444 = vunpack.c.l.b16 %v296
        %v445 = vunpack.c.l.b16 %v297
        %v446 = vunpack.c.l.b16 %v298
        %v447 = vunpack.c.l.b16 %v299
        %v448 = vunpack.c.l.b16 %v300
        %v449 = vunpack.c.l.b16 %v301
        %v450 = vunpack.c.l.b16 %v302
        %v451 = vunpack.c.l.b16 %v303
        %v452 = vunpack.c.l.b16 %v304
        %v453 = vunpack.c.l.b16 %v305
        %v454 = vunpack.c.l.b16 %v306
        %v455 = vunpack.c.l.b16 %v307
        %v456 = vunpack.c.l.b16 %v308
        %v457 = vunpack.c.l.b16 %v309
        %v458 = vunpack.c.l.b16 %v310
        %v459 = vunpack.c.l.b16 %v311
        %v460 = vunpack.c.l.b16 %v312
        %v461 = vunpack.c.l.b16 %v313
        %v462 = vunpack.c.l.b16 %v314
        %v463 = vunpack.c.l.b16 %v315
        %v464 = vpack.c.b16 %v401, %v400
        %v465 = vpack.c.b16 %v403, %v402
        %v466 = vpack.c.b16 %v405, %v404
        %v467 = vpack.c.b16 %v407, %v406
        %v468 = vpack.c.b16 %v409, %v408
        %v469 = vpack.c.b16 %v411, %v410
        %v470 = vpack.c.b16 %v413, %v412
        %v471 = vpack.c.b16 %v415, %v414
        %v472 = vpack.c.b16 %v417, %v416
        %v473 = vpack.c.b16 %v419, %v418
        %v474 = vpack.c.b16 %v421, %v420
        %v475 = vpack.c.b16 %v423, %v422
        %v476 = vpack.c.b16 %v425, %v424
        %v477 = vpack.c.b16 %v427, %v426
        %v478 = vpack.c.b16 %v429, %v428
        %v479 = vpack.c.b16 %v431, %v430
        %v480 = vpack.c.b16 %v433, %v432
        %v481 = vpack.c.b16 %v435, %v434
        %v482 = vpack.c.b16 %v437, %v436
        %v483 = vpack.c.b16 %v439, %v438
        %v484 = vpack.c.b16 %v441, %v440
        %v485 = vpack.c.b16 %v443, %v442
        %v486 = vpack.c.b16 %v445, %v444
        %v487 = vpack.c.b16 %v447, %v446
        %v488 = vpack.c.b16 %v449, %v448
        %v489 = vpack.c.b16 %v451, %v450
        %v490 = vpack.c.b16 %v453, %v452
        %v491 = vpack.c.b16 %v455, %v454
        %v492 = vpack.c.b16 %v457, %v456
        %v493 = vpack.c.b16 %v459, %v458
        %v494 = vpack.c.b16 %v461, %v460
        %v495 = vpack.c.b16 %v463, %v462
        %528 = vmatprep.subr.bf16.mxu0 0
        %529 = vmatpush1.bf16.msra.mxu0 %v464
        %530 = vmatprep.subr.bf16.mxu0 0
        %531 = vmatpush1.bf16.msra.mxu0 %v465
        %532 = vmatprep.subr.bf16.mxu0 0
        %533 = vmatpush1.bf16.msra.mxu0 %v466
        %534 = vmatprep.subr.bf16.mxu0 0
        %535 = vmatpush1.bf16.msra.mxu0 %v467
        %536 = vmatprep.subr.bf16.mxu0 0
        %537 = vmatpush1.bf16.msra.mxu0 %v468
        %538 = vmatprep.subr.bf16.mxu0 0
        %539 = vmatpush1.bf16.msra.mxu0 %v469
        %540 = vmatprep.subr.bf16.mxu0 0
        %541 = vmatpush1.bf16.msra.mxu0 %v470
        %542 = vmatprep.subr.bf16.mxu0 0
        %543 = vmatpush1.bf16.msra.mxu0 %v471
        %544 = vmatprep.subr.bf16.mxu0 0
        %545 = vmatpush1.bf16.msra.mxu0 %v472
        %546 = vmatprep.subr.bf16.mxu0 0
        %547 = vmatpush1.bf16.msra.mxu0 %v473
        %548 = vmatprep.subr.bf16.mxu0 0
        %549 = vmatpush1.bf16.msra.mxu0 %v474
        %550 = vmatprep.subr.bf16.mxu0 0
        %551 = vmatpush1.bf16.msra.mxu0 %v475
        %552 = vmatprep.subr.bf16.mxu0 0
        %553 = vmatpush1.bf16.msra.mxu0 %v476
        %554 = vmatprep.subr.bf16.mxu0 0
        %555 = vmatpush1.bf16.msra.mxu0 %v477
        %556 = vmatprep.subr.bf16.mxu0 0
        %557 = vmatpush1.bf16.msra.mxu0 %v478
        %558 = vmatprep.subr.bf16.mxu0 0
        %559 = vmatpush1.bf16.msra.mxu0 %v479
        %560 = vmatprep.mubr.bf16.mxu0 %v329
        %561 = vmatmul.mubr.bf16.gmra.mrb[0].mxu0 %v328
        %v562 = vpop.f32.mrb[0].mxu0
        %v563 = vadd.f32 0.0, %v562
        %v564 = vpop.f32.mrb[0].mxu0
        %v565 = vpop.f32.mrb[0].mxu0
        %v566 = vadd.f32 0.0, %v565
        %v567 = vpop.f32.mrb[0].mxu0
        %568 = vdwg.mxu0
        %569 = vmatprep.subr.bf16.mxu0 0
        %570 = vmatpush1.bf16.msra.mxu0 %v480
        %571 = vmatprep.subr.bf16.mxu0 0
        %572 = vmatpush1.bf16.msra.mxu0 %v481
        %573 = vmatprep.subr.bf16.mxu0 0
        %574 = vmatpush1.bf16.msra.mxu0 %v482
        %575 = vmatprep.subr.bf16.mxu0 0
        %576 = vmatpush1.bf16.msra.mxu0 %v483
        %577 = vmatprep.subr.bf16.mxu0 0
        %578 = vmatpush1.bf16.msra.mxu0 %v484
        %579 = vmatprep.subr.bf16.mxu0 0
        %580 = vmatpush1.bf16.msra.mxu0 %v485
        %581 = vmatprep.subr.bf16.mxu0 0
        %582 = vmatpush1.bf16.msra.mxu0 %v486
        %583 = vmatprep.subr.bf16.mxu0 0
        %584 = vmatpush1.bf16.msra.mxu0 %v487
        %585 = vmatprep.subr.bf16.mxu0 0
        %586 = vmatpush1.bf16.msra.mxu0 %v488
        %587 = vmatprep.subr.bf16.mxu0 0
        %588 = vmatpush1.bf16.msra.mxu0 %v489
        %589 = vmatprep.subr.bf16.mxu0 0
        %590 = vmatpush1.bf16.msra.mxu0 %v490
        %591 = vmatprep.subr.bf16.mxu0 0
        %592 = vmatpush1.bf16.msra.mxu0 %v491
        %593 = vmatprep.subr.bf16.mxu0 0
        %594 = vmatpush1.bf16.msra.mxu0 %v492
        %595 = vmatprep.subr.bf16.mxu0 0
        %596 = vmatpush1.bf16.msra.mxu0 %v493
        %597 = vmatprep.subr.bf16.mxu0 0
        %598 = vmatpush1.bf16.msra.mxu0 %v494
        %599 = vmatprep.subr.bf16.mxu0 0
        %600 = vmatpush1.bf16.msra.mxu0 %v495
        %601 = vmatprep.mubr.bf16.mxu0 %v331
        %602 = vmatmul.mubr.bf16.gmra.mrb[0].mxu0 %v330
        %v603 = vpop.f32.mrb[0].mxu0
        %v604 = vadd.f32 %v563, %v603
        %v605 = vpop.f32.mrb[0].mxu0
        %v606 = vpop.f32.mrb[0].mxu0
        %v607 = vadd.f32 %v566, %v606
        %v608 = vpop.f32.mrb[0].mxu0
        %609 = vdwg.mxu0
        %v610 = vadd.f32 %v246, %v604
        %v611 = vadd.f32 %v247, %v607
        %612 = vst [vmem:[#allocation2] sm:$0xff] %v610
        %613 = vst [vmem:[#allocation2 + $0x8] sm:$0xff] %v611
        %p614 = scmp.eq.s32.totalorder %s19, 3
        // Predicated region
        $region60: #{_lambda_.17} parent=50 // pred_check
          %p615 = pneg %p614
        $region61: #{_lambda_.17} parent=50 // pred_check_branch
          %617 = sbr.rel (%p615) target = $region63
        $region62: #{_lambda_.17} parent=50 // pred_region
          %v618 = vld [vmem:[#allocation2] sm:$0xff]
          %v619 = vld [vmem:[#allocation2 + $0x8] sm:$0xff]
          %v620 = vld [vmem:[%s2] sm:$0x1]
          %v622 = vlaneseq
          %v623 = vshrl.u32 %v622, 7
          %v624 = vsub.s32 0, %v623
          %v625 = vrot.slane %v620, %v624
          %v627 = vadd.f32 %v618, %v625
          %v628 = vadd.f32 %v619, %v625
          %629 = vst [vmem:[%s237] sm:$0xff] %v627
          %630 = vst [vmem:[%s237 + $0x8] sm:$0xff] %v628
        $region63: #{_lambda_.17} parent=50 // pred_fallthru
          _
        %s631 = smul.u32 2, %s18
        %p632 = scmp.lt.s32.totalorder %s631, 1
        %s633 = scalar_select %p632, %s631, 1
        %s634 = smul.addr %s633, 8
        %s635 = scalar_lea.vmem %s3, %s634
        // Predicated region
        $region64: #{_lambda_.17} parent=50 // pred_check
          %p636 = pneg %p119
        $region65: #{_lambda_.17} parent=50 // pred_check_branch
          %638 = sbr.rel (%p636) target = $region67
        $region66: #{_lambda_.17} parent=50 // pred_region
          %s639 = smul.u32 2, %s18
        $region67: #{_lambda_.17} parent=50 // pred_fallthru
          _
        // Predicated region
        $region68: #{_lambda_.17} parent=50 // pred_check
          %p640 = pneg %p119
        $region69: #{_lambda_.17} parent=50 // pred_check_branch
          %642 = sbr.rel (%p640) target = $region71
        $region70: #{_lambda_.17} parent=50 // pred_region
          %s643 = smul.u32 2, %s18
          %p644 = scmp.lt.s32.totalorder %s643, 1
          %s645 = scalar_select %p644, %s643, 1
          %s646 = smul.addr %s645, 8
          %s647 = scalar_lea.vmem %s3, %s646
        $region71: #{_lambda_.17} parent=50 // pred_fallthru
          _
      $region51: #{_lambda_.17} parent=5 // pred_fallthru
        _
      %p648 = scmp.le.s32.totalorder 2, %s9
      // Predicated region
      $region72: #{_lambda_.17} parent=5 // pred_check
        %p649 = pneg %p648
      $region73: #{_lambda_.17} parent=5 // pred_check_branch
        %651 = sbr.rel (%p649) target = $region75
      $region74: #{_lambda_.17} parent=5 // pred_region
        %s652 = ssub.s32 %s9, 2
      $region75: #{_lambda_.17} parent=5 // pred_fallthru
        _
    $region6: #{_lambda_.17} parent=1 // loop_footer
      %s13 = sadd.s32 1, %s9
    $region7: #{_lambda_.17} parent=1 // loop_footer_branch
      %8 = sbr.rel target = $region3
    $region8: #{_lambda_.17} parent=1 // loop_exit
      _

</llo_original>
